<compile_context>
chip_gen: v5e
topology: v5e:2x2
jax: 0.10.0
libtpu: 0.0.40
codegen_flags: <defaults>
</compile_context>

<pallas_src>
import jax
import jax.numpy as jnp
from jax.experimental import pallas as pl
from jax.experimental.pallas import tpu as pltpu


def _sigmoid(x):
    # tanh-based logistic (EUP); mathematically identical to 1/(1+exp(-x)).
    return 0.5 * (jnp.tanh(0.5 * x) + 1.0)


def _round_up(v, m):
    return ((v + m - 1) // m) * m


def _make_kernel(TB, L, Lp_pad, pad, K, C_in, C1, C2, H):
    def kernel(xp_ref, w1e_ref, b1_ref, w2e_ref, b2_ref,
               wih_ref, whh_ref, bl_ref, wfc1_ref, bfc1_ref,
               wfc2_ref, bfc2_ref, alpha_ref, out_ref):
        f32 = jnp.float32
        xp = xp_ref[...]                                            # (TB, Lp_pad, Cin)
        xp2 = xp.reshape(TB * Lp_pad, C_in)                         # Lp_pad % 8 == 0 -> clean

        # ---------------- CNN branch ----------------
        # conv1: one matmul against all K taps (N = K*C1), then shift-and-add
        # the K tap groups (no lane-axis im2col concatenation).
        p1 = jnp.dot(xp2, w1e_ref[...], preferred_element_type=f32)  # (TB*Lp_pad, K*C1)
        p1 = p1.reshape(TB, Lp_pad, K * C1)
        h1 = p1[:, 0:L, 0:C1]
        for k in range(1, K):
            h1 = h1 + p1[:, k:k + L, k * C1:(k + 1) * C1]
        h1 = jnp.maximum(h1 + b1_ref[...], 0.0)                      # (TB, L, C1)

        # conv2: re-pad along length in registers, same expanded matmul + shift-add.
        zl = jnp.zeros((TB, pad, C1), f32)
        zr = jnp.zeros((TB, Lp_pad - L - pad, C1), f32)
        hp = jnp.concatenate([zl, h1, zr], axis=1)                   # (TB, Lp_pad, C1)
        p2 = jnp.dot(hp.reshape(TB * Lp_pad, C1), w2e_ref[...],
                     preferred_element_type=f32)                     # (TB*Lp_pad, K*C2)
        p2 = p2.reshape(TB, Lp_pad, K * C2)
        h2 = p2[:, 0:L, 0:C2]
        for k in range(1, K):
            h2 = h2 + p2[:, k:k + L, k * C2:(k + 1) * C2]
        h2 = jnp.maximum(h2 + b2_ref[...], 0.0)                      # (TB, L, C2)

        # AdaptiveAvgPool1d(1): mean over length.
        cnn_out = jnp.mean(h2, axis=1)                               # (TB, C2)

        # ---------------- RNN branch (LSTM) ----------------
        # Input projection reuses the resident padded x tile (rows pad..pad+L
        # are the real timesteps); gate order (i, f, g, o) as in PyTorch.
        xg = jnp.dot(xp2, wih_ref[...], preferred_element_type=f32) + bl_ref[...]
        xg = xg.reshape(TB, Lp_pad, 4 * H)
        whh = whh_ref[...]                                           # (H, 4H)
        h = jnp.zeros((TB, H), f32)
        c = jnp.zeros((TB, H), f32)
        # TODO(synk): switch to lax.fori_loop(unroll=4) if L grows beyond ~32.
        for t in range(L):                                           # unrolled recurrence
            g = xg[:, pad + t, :] + jnp.dot(h, whh, preferred_element_type=f32)
            sg = _sigmoid(g)       # full 4H-lane EUP pass, slice gates afterwards
            tg = jnp.tanh(g)
            c = sg[:, H:2 * H] * c + sg[:, 0:H] * tg[:, 2 * H:3 * H]
            h = sg[:, 3 * H:4 * H] * jnp.tanh(c)
        rnn_out = h                                                  # (TB, H)

        # ------------- fuse + MLP head (transposed: feature x batch) -------------
        a = alpha_ref[0]                                             # scalar from SMEM
        fused = a * cnn_out + (1.0 - a) * rnn_out                    # (TB, 32)
        fused_t = fused.T                                            # (32, TB)
        z1 = jnp.dot(wfc1_ref[...], fused_t, preferred_element_type=f32)
        z1 = jnp.maximum(z1 + bfc1_ref[...], 0.0)                    # (F1, TB)
        z2 = jnp.dot(wfc2_ref[...], z1, preferred_element_type=f32)  # (1, TB)
        out_ref[...] = _sigmoid(z2 + bfc2_ref[...]).reshape(1, 1, TB).astype(out_ref.dtype)

    return kernel


def cnnrnn_forward(x, w1, b1, w2, b2, w_ih, w_hh, b_ih, b_hh,
                   alpha, wfc1, bfc1, wfc2, bfc2):
    """x: (B, C_in, L) float32 (PyTorch NCL). Returns (B, 1) float32."""
    B, C_in, L = x.shape
    C1, _, K = w1.shape
    C2 = w2.shape[0]
    H = w_hh.shape[1]
    F1 = wfc1.shape[0]
    pad = K // 2
    Lp = L + 2 * pad
    Lp_pad = _round_up(Lp, 8)                                        # keep reshapes 8-aligned
    assert L % 8 == 0, "L must be a multiple of 8 (sublane tile) for this kernel"
    # TODO(synk): support L not a multiple of 8 (needs in-kernel length masking).

    # Batch-tile size: TB*Lp_pad rows feed every big matmul.  Cap rows so the
    # per-step VMEM (double-buffered input + padded-lane intermediates) stays
    # well inside the limit below, and split big batches into >=2 grid steps so
    # v7x's second TensorCore gets work.
    max_rows = 6144
    tb_cap = max(8, (max_rows // Lp_pad) // 8 * 8)
    B_pad8 = _round_up(B, 8)
    num_tiles = -(-B_pad8 // tb_cap)
    if num_tiles == 1 and B_pad8 >= 128:
        num_tiles = 2
    TB = _round_up(-(-B_pad8 // num_tiles), 8)
    B_pad = TB * num_tiles

    # ---- layout plumbing only (no compute hoisted into the wrapper) ----
    x_lc = jnp.transpose(x, (0, 2, 1))                               # (B, L, Cin)
    x_lc = jnp.pad(x_lc, ((0, B_pad - B), (pad, Lp_pad - L - pad), (0, 0)))

    # Expanded conv weights: row = cin, col = k*Cout + cout (matches shift-add).
    w1e = jnp.transpose(w1, (1, 2, 0)).reshape(C_in, K * C1)
    w2e = jnp.transpose(w2, (1, 2, 0)).reshape(C1, K * C2)
    b1_r = b1.reshape(1, C1)
    b2_r = b2.reshape(1, C2)
    wih_t = jnp.transpose(w_ih)                                      # (Cin, 4H)
    whh_t = jnp.transpose(w_hh)                                      # (H, 4H)
    b_lstm = (b_ih + b_hh).reshape(1, 4 * H)
    bfc1_c = bfc1.reshape(F1, 1)                                     # column bias (head is transposed)
    wfc2_r = wfc2.reshape(1, F1)
    bfc2_r = bfc2.reshape(1, 1)
    alpha_s = jnp.asarray(alpha, jnp.float32).reshape(1)

    kernel = _make_kernel(TB, L, Lp_pad, pad, K, C_in, C1, C2, H)

    out = pl.pallas_call(
        kernel,
        out_shape=jax.ShapeDtypeStruct((num_tiles, 1, TB), jnp.float32),
        grid_spec=pltpu.PrefetchScalarGridSpec(
            num_scalar_prefetch=0,
            grid=(num_tiles,),
            in_specs=[
                pl.BlockSpec((TB, Lp_pad, C_in), lambda i: (i, 0, 0)),  # padded chan-last x
                pl.BlockSpec((C_in, K * C1), lambda i: (0, 0)),         # conv1 expanded weight
                pl.BlockSpec((1, C1), lambda i: (0, 0)),
                pl.BlockSpec((C1, K * C2), lambda i: (0, 0)),           # conv2 expanded weight
                pl.BlockSpec((1, C2), lambda i: (0, 0)),
                pl.BlockSpec((C_in, 4 * H), lambda i: (0, 0)),          # W_ih^T
                pl.BlockSpec((H, 4 * H), lambda i: (0, 0)),             # W_hh^T
                pl.BlockSpec((1, 4 * H), lambda i: (0, 0)),             # b_ih + b_hh
                pl.BlockSpec((F1, C2), lambda i: (0, 0)),               # fc1 weight (as-is)
                pl.BlockSpec((F1, 1), lambda i: (0, 0)),                # fc1 bias column
                pl.BlockSpec((1, F1), lambda i: (0, 0)),                # fc2 weight row
                pl.BlockSpec((1, 1), lambda i: (0, 0)),                 # fc2 bias
                pl.BlockSpec(memory_space=pltpu.MemorySpace.SMEM),      # alpha scalar
            ],
            # Disjoint, lane-dense per-tile output blocks -> safe to mark parallel.
            out_specs=pl.BlockSpec((1, 1, TB), lambda i: (i, 0, 0)),
        ),
        compiler_params=pltpu.CompilerParams(
            dimension_semantics=("parallel",),
            vmem_limit_bytes=40 * 1024 * 1024,
        ),
    )(x_lc, w1e, b1_r, w2e, b2_r, wih_t, whh_t, b_lstm,
      wfc1, bfc1_c, wfc2_r, bfc2_r, alpha_s)
    return out.reshape(B_pad, 1)[:B]


def _reference_forward(x, w1, b1, w2, b2, w_ih, w_hh, b_ih, b_hh,
                       alpha, wfc1, bfc1, wfc2, bfc2):
    pad = w1.shape[2] // 2
    dn = ("NCH", "OIH", "NCH")
    h1 = jax.lax.conv_general_dilated(
        x, w1, window_strides=(1,), padding=((pad, pad),), dimension_numbers=dn)
    h1 = jax.nn.relu(h1 + b1[None, :, None])
    h2 = jax.lax.conv_general_dilated(
        h1, w2, window_strides=(1,), padding=((pad, pad),), dimension_numbers=dn)
    h2 = jax.nn.relu(h2 + b2[None, :, None])
    cnn_out = jnp.mean(h2, axis=-1)                                  # (B, C2)

    xs = jnp.transpose(x, (0, 2, 1))                                 # (B, L, Cin)
    B, L, _ = xs.shape
    H = w_hh.shape[1]
    h = jnp.zeros((B, H), jnp.float32)
    c = jnp.zeros((B, H), jnp.float32)
    for t in range(L):
        g = xs[:, t, :] @ w_ih.T + b_ih + h @ w_hh.T + b_hh
        i_g = jax.nn.sigmoid(g[:, 0:H])
        f_g = jax.nn.sigmoid(g[:, H:2 * H])
        g_g = jnp.tanh(g[:, 2 * H:3 * H])
        o_g = jax.nn.sigmoid(g[:, 3 * H:4 * H])
        c = f_g * c + i_g * g_g
        h = o_g * jnp.tanh(c)
    rnn_out = h                                                      # (B, H)

    fused = alpha * cnn_out + (1.0 - alpha) * rnn_out
    z = jax.nn.relu(fused @ wfc1.T + bfc1)
    return jax.nn.sigmoid(z @ wfc2.T + bfc2)                         # (B, 1)


if __name__ == "__main__":
    # Shapes consistent with the module: Conv1d(3->16->32, k5, p2),
    # LSTM(input=3, hidden=32), fc1(32->16), fc2(16->1).
    B, C_in, L = 2, 3, 16
    C1, C2, K, H, F1 = 16, 32, 5, 32, 16

    key = jax.random.PRNGKey(0)
    ks = jax.random.split(key, 14)
    x = jax.random.normal(ks[0], (B, C_in, L), dtype=jnp.float32)
    w1 = jax.random.normal(ks[1], (C1, C_in, K), dtype=jnp.float32) * 0.2
    b1 = jax.random.normal(ks[2], (C1,), dtype=jnp.float32) * 0.1
    w2 = jax.random.normal(ks[3], (C2, C1, K), dtype=jnp.float32) * 0.1
    b2 = jax.random.normal(ks[4], (C2,), dtype=jnp.float32) * 0.1
    w_ih = jax.random.normal(ks[5], (4 * H, C_in), dtype=jnp.float32) * 0.2
    w_hh = jax.random.normal(ks[6], (4 * H, H), dtype=jnp.float32) * 0.2
    b_ih = jax.random.normal(ks[7], (4 * H,), dtype=jnp.float32) * 0.1
    b_hh = jax.random.normal(ks[8], (4 * H,), dtype=jnp.float32) * 0.1
    alpha = jnp.float32(0.5)
    wfc1 = jax.random.normal(ks[9], (F1, C2), dtype=jnp.float32) * 0.2
    bfc1 = jax.random.normal(ks[10], (F1,), dtype=jnp.float32) * 0.1
    wfc2 = jax.random.normal(ks[11], (1, F1), dtype=jnp.float32) * 0.2
    bfc2 = jax.random.normal(ks[12], (1,), dtype=jnp.float32) * 0.1

    out = cnnrnn_forward(x, w1, b1, w2, b2, w_ih, w_hh, b_ih, b_hh,
                         alpha, wfc1, bfc1, wfc2, bfc2)
    out = jax.block_until_ready(out)

    ref = jax.block_until_ready(_reference_forward(
        x, w1, b1, w2, b2, w_ih, w_hh, b_ih, b_hh,
        alpha, wfc1, bfc1, wfc2, bfc2))

    assert out.shape == (B, 1), out.shape
    max_err = float(jnp.max(jnp.abs(out - ref)))
    assert jnp.allclose(out, ref, atol=2e-4, rtol=1e-4), max_err
    print("KERNEL_OK")
</pallas_src>

<mosaic_0001>
module attributes {stable_mosaic.version = 11 : i64} {
  func.func @kernel(%arg0: i32, %arg1: memref<8x24x3xf32, #tpu.memory_space<vmem>>, %arg2: memref<3x80xf32, #tpu.memory_space<vmem>>, %arg3: memref<1x16xf32, #tpu.memory_space<vmem>>, %arg4: memref<16x160xf32, #tpu.memory_space<vmem>>, %arg5: memref<1x32xf32, #tpu.memory_space<vmem>>, %arg6: memref<3x128xf32, #tpu.memory_space<vmem>>, %arg7: memref<32x128xf32, #tpu.memory_space<vmem>>, %arg8: memref<1x128xf32, #tpu.memory_space<vmem>>, %arg9: memref<16x32xf32, #tpu.memory_space<vmem>>, %arg10: memref<16x1xf32, #tpu.memory_space<vmem>>, %arg11: memref<1x16xf32, #tpu.memory_space<vmem>>, %arg12: memref<1x1xf32, #tpu.memory_space<vmem>>, %arg13: memref<1xf32, #tpu.memory_space<smem>>, %arg14: memref<1x1x8xf32, #tpu.memory_space<vmem>>) attributes {dimension_semantics = [#tpu.dimension_semantics<parallel>], iteration_bounds = array<i64: 1>, scalar_prefetch = 0 : i64, scratch_operands = 0 : i64, tpu.core_type = #tpu.core_type<tc>, window_params = [{transform_indices = @transform_0, window_bounds = array<i64: 8, 24, 3>}, {pipeline_mode = #tpu.pipeline_mode<synchronous>, transform_indices = @transform_1, window_bounds = array<i64: 3, 80>}, {pipeline_mode = #tpu.pipeline_mode<synchronous>, transform_indices = @transform_2, window_bounds = array<i64: 1, 16>}, {pipeline_mode = #tpu.pipeline_mode<synchronous>, transform_indices = @transform_3, window_bounds = array<i64: 16, 160>}, {pipeline_mode = #tpu.pipeline_mode<synchronous>, transform_indices = @transform_4, window_bounds = array<i64: 1, 32>}, {pipeline_mode = #tpu.pipeline_mode<synchronous>, transform_indices = @transform_5, window_bounds = array<i64: 3, 128>}, {pipeline_mode = #tpu.pipeline_mode<synchronous>, transform_indices = @transform_6, window_bounds = array<i64: 32, 128>}, {pipeline_mode = #tpu.pipeline_mode<synchronous>, transform_indices = @transform_7, window_bounds = array<i64: 1, 128>}, {pipeline_mode = #tpu.pipeline_mode<synchronous>, transform_indices = @transform_8, window_bounds = array<i64: 16, 32>}, {pipeline_mode = #tpu.pipeline_mode<synchronous>, transform_indices = @transform_9, window_bounds = array<i64: 16, 1>}, {pipeline_mode = #tpu.pipeline_mode<synchronous>, transform_indices = @transform_10, window_bounds = array<i64: 1, 16>}, {pipeline_mode = #tpu.pipeline_mode<synchronous>, transform_indices = @transform_11, window_bounds = array<i64: 1, 1>}, {transform_indices = @transform_12, window_bounds = array<i64: 1>}, {transform_indices = @transform_13, window_bounds = array<i64: 1, 1, 8>}]} {
    %c0 = arith.constant 0 : index
    %c0_0 = arith.constant 0 : index
    %c0_1 = arith.constant 0 : index
    %0 = vector.load %arg1[%c0, %c0_0, %c0_1] : memref<8x24x3xf32, #tpu.memory_space<vmem>>, vector<8x24x3xf32>
    %1 = vector.shape_cast %0 : vector<8x24x3xf32> to vector<192x3xf32>
    %c0_2 = arith.constant 0 : index
    %c0_3 = arith.constant 0 : index
    %2 = vector.load %arg2[%c0_2, %c0_3] : memref<3x80xf32, #tpu.memory_space<vmem>>, vector<3x80xf32>
    %cst = arith.constant dense<0.000000e+00> : vector<192x80xf32>
    %3 = tpu.matmul %1, %2, %cst {dimension_numbers = #tpu.dot_dimension_numbers<[1], [0], [0], [1], [0, 0, 1, 1], [], []>} : vector<192x3xf32>, vector<3x80xf32>, vector<192x80xf32> -> vector<192x80xf32>
    %4 = vector.shape_cast %3 : vector<192x80xf32> to vector<8x24x80xf32>
    %5 = vector.extract_strided_slice %4 {offsets = [0, 0, 0], sizes = [8, 16, 16], strides = [1, 1, 1]} : vector<8x24x80xf32> to vector<8x16x16xf32>
    %6 = vector.extract_strided_slice %4 {offsets = [0, 1, 16], sizes = [8, 16, 16], strides = [1, 1, 1]} : vector<8x24x80xf32> to vector<8x16x16xf32>
    %7 = arith.addf %5, %6 : vector<8x16x16xf32>
    %8 = vector.extract_strided_slice %4 {offsets = [0, 2, 32], sizes = [8, 16, 16], strides = [1, 1, 1]} : vector<8x24x80xf32> to vector<8x16x16xf32>
    %9 = arith.addf %7, %8 : vector<8x16x16xf32>
    %10 = vector.extract_strided_slice %4 {offsets = [0, 3, 48], sizes = [8, 16, 16], strides = [1, 1, 1]} : vector<8x24x80xf32> to vector<8x16x16xf32>
    %11 = arith.addf %9, %10 : vector<8x16x16xf32>
    %12 = vector.extract_strided_slice %4 {offsets = [0, 4, 64], sizes = [8, 16, 16], strides = [1, 1, 1]} : vector<8x24x80xf32> to vector<8x16x16xf32>
    %13 = arith.addf %11, %12 : vector<8x16x16xf32>
    %c0_4 = arith.constant 0 : index
    %c0_5 = arith.constant 0 : index
    %14 = vector.load %arg3[%c0_4, %c0_5] : memref<1x16xf32, #tpu.memory_space<vmem>>, vector<1x16xf32>
    %15 = vector.shape_cast %14 : vector<1x16xf32> to vector<1x1x16xf32>
    %16 = vector.broadcast %15 : vector<1x1x16xf32> to vector<8x16x16xf32>
    %17 = arith.addf %13, %16 : vector<8x16x16xf32>
    %cst_6 = arith.constant 0.000000e+00 : f32
    %18 = vector.broadcast %cst_6 : f32 to vector<8x16x16xf32>
    %19 = arith.maximumf %17, %18 : vector<8x16x16xf32>
    %cst_7 = arith.constant 0.000000e+00 : f32
    %20 = vector.broadcast %cst_7 : f32 to vector<8x2x16xf32>
    %cst_8 = arith.constant 0.000000e+00 : f32
    %21 = vector.broadcast %cst_8 : f32 to vector<8x6x16xf32>
    %22 = tpu.concatenate %20, %19, %21 in 1 : vector<8x2x16xf32>, vector<8x16x16xf32>, vector<8x6x16xf32> -> vector<8x24x16xf32>
    %23 = vector.shape_cast %22 : vector<8x24x16xf32> to vector<192x16xf32>
    %c0_9 = arith.constant 0 : index
    %c0_10 = arith.constant 0 : index
    %24 = vector.load %arg4[%c0_9, %c0_10] : memref<16x160xf32, #tpu.memory_space<vmem>>, vector<16x160xf32>
    %cst_11 = arith.constant dense<0.000000e+00> : vector<192x160xf32>
    %25 = tpu.matmul %23, %24, %cst_11 {dimension_numbers = #tpu.dot_dimension_numbers<[1], [0], [0], [1], [0, 0, 1, 1], [], []>} : vector<192x16xf32>, vector<16x160xf32>, vector<192x160xf32> -> vector<192x160xf32>
    %26 = vector.shape_cast %25 : vector<192x160xf32> to vector<8x24x160xf32>
    %27 = vector.extract_strided_slice %26 {offsets = [0, 0, 0], sizes = [8, 16, 32], strides = [1, 1, 1]} : vector<8x24x160xf32> to vector<8x16x32xf32>
    %28 = vector.extract_strided_slice %26 {offsets = [0, 1, 32], sizes = [8, 16, 32], strides = [1, 1, 1]} : vector<8x24x160xf32> to vector<8x16x32xf32>
    %29 = arith.addf %27, %28 : vector<8x16x32xf32>
    %30 = vector.extract_strided_slice %26 {offsets = [0, 2, 64], sizes = [8, 16, 32], strides = [1, 1, 1]} : vector<8x24x160xf32> to vector<8x16x32xf32>
    %31 = arith.addf %29, %30 : vector<8x16x32xf32>
    %32 = vector.extract_strided_slice %26 {offsets = [0, 3, 96], sizes = [8, 16, 32], strides = [1, 1, 1]} : vector<8x24x160xf32> to vector<8x16x32xf32>
    %33 = arith.addf %31, %32 : vector<8x16x32xf32>
    %34 = vector.extract_strided_slice %26 {offsets = [0, 4, 128], sizes = [8, 16, 32], strides = [1, 1, 1]} : vector<8x24x160xf32> to vector<8x16x32xf32>
    %35 = arith.addf %33, %34 : vector<8x16x32xf32>
    %c0_12 = arith.constant 0 : index
    %c0_13 = arith.constant 0 : index
    %36 = vector.load %arg5[%c0_12, %c0_13] : memref<1x32xf32, #tpu.memory_space<vmem>>, vector<1x32xf32>
    %37 = vector.shape_cast %36 : vector<1x32xf32> to vector<1x1x32xf32>
    %38 = vector.broadcast %37 : vector<1x1x32xf32> to vector<8x16x32xf32>
    %39 = arith.addf %35, %38 : vector<8x16x32xf32>
    %cst_14 = arith.constant 0.000000e+00 : f32
    %40 = vector.broadcast %cst_14 : f32 to vector<8x16x32xf32>
    %41 = arith.maximumf %39, %40 : vector<8x16x32xf32>
    %cst_15 = arith.constant dense<0.000000e+00> : vector<8x32xf32>
    %42 = vector.multi_reduction <add>, %41, %cst_15 [1] : vector<8x16x32xf32> to vector<8x32xf32>
    %cst_16 = arith.constant 1.600000e+01 : f32
    %43 = vector.broadcast %cst_16 : f32 to vector<8x32xf32>
    %44 = arith.divf %42, %43 : vector<8x32xf32>
    %c0_17 = arith.constant 0 : index
    %c0_18 = arith.constant 0 : index
    %45 = vector.load %arg6[%c0_17, %c0_18] : memref<3x128xf32, #tpu.memory_space<vmem>>, vector<3x128xf32>
    %cst_19 = arith.constant dense<0.000000e+00> : vector<192x128xf32>
    %46 = tpu.matmul %1, %45, %cst_19 {dimension_numbers = #tpu.dot_dimension_numbers<[1], [0], [0], [1], [0, 0, 1, 1], [], []>} : vector<192x3xf32>, vector<3x128xf32>, vector<192x128xf32> -> vector<192x128xf32>
    %c0_20 = arith.constant 0 : index
    %c0_21 = arith.constant 0 : index
    %47 = vector.load %arg8[%c0_20, %c0_21] : memref<1x128xf32, #tpu.memory_space<vmem>>, vector<1x128xf32>
    %48 = vector.broadcast %47 : vector<1x128xf32> to vector<192x128xf32>
    %49 = arith.addf %46, %48 : vector<192x128xf32>
    %50 = vector.shape_cast %49 : vector<192x128xf32> to vector<8x24x128xf32>
    %c0_22 = arith.constant 0 : index
    %c0_23 = arith.constant 0 : index
    %51 = vector.load %arg7[%c0_22, %c0_23] : memref<32x128xf32, #tpu.memory_space<vmem>>, vector<32x128xf32>
    %cst_24 = arith.constant 0.000000e+00 : f32
    %52 = vector.broadcast %cst_24 : f32 to vector<8x32xf32>
    %cst_25 = arith.constant 0.000000e+00 : f32
    %53 = vector.broadcast %cst_25 : f32 to vector<8x32xf32>
    %54 = vector.extract_strided_slice %50 {offsets = [0, 2, 0], sizes = [8, 1, 128], strides = [1, 1, 1]} : vector<8x24x128xf32> to vector<8x1x128xf32>
    %55 = vector.shape_cast %54 : vector<8x1x128xf32> to vector<8x128xf32>
    %cst_26 = arith.constant dense<0.000000e+00> : vector<8x128xf32>
    %56 = tpu.matmul %52, %51, %cst_26 {dimension_numbers = #tpu.dot_dimension_numbers<[1], [0], [0], [1], [0, 0, 1, 1], [], []>} : vector<8x32xf32>, vector<32x128xf32>, vector<8x128xf32> -> vector<8x128xf32>
    %57 = arith.addf %55, %56 : vector<8x128xf32>
    %cst_27 = arith.constant 5.000000e-01 : f32
    %58 = vector.broadcast %cst_27 : f32 to vector<8x128xf32>
    %59 = arith.mulf %58, %57 : vector<8x128xf32>
    %60 = math.tanh %59 : vector<8x128xf32>
    %cst_28 = arith.constant 1.000000e+00 : f32
    %61 = vector.broadcast %cst_28 : f32 to vector<8x128xf32>
    %62 = arith.addf %60, %61 : vector<8x128xf32>
    %cst_29 = arith.constant 5.000000e-01 : f32
    %63 = vector.broadcast %cst_29 : f32 to vector<8x128xf32>
    %64 = arith.mulf %63, %62 : vector<8x128xf32>
    %65 = math.tanh %57 : vector<8x128xf32>
    %66 = vector.extract_strided_slice %64 {offsets = [0, 32], sizes = [8, 32], strides = [1, 1]} : vector<8x128xf32> to vector<8x32xf32>
    %67 = arith.mulf %66, %53 : vector<8x32xf32>
    %68 = vector.extract_strided_slice %64 {offsets = [0, 0], sizes = [8, 32], strides = [1, 1]} : vector<8x128xf32> to vector<8x32xf32>
    %69 = vector.extract_strided_slice %65 {offsets = [0, 64], sizes = [8, 32], strides = [1, 1]} : vector<8x128xf32> to vector<8x32xf32>
    %70 = arith.mulf %68, %69 : vector<8x32xf32>
    %71 = arith.addf %67, %70 : vector<8x32xf32>
    %72 = vector.extract_strided_slice %64 {offsets = [0, 96], sizes = [8, 32], strides = [1, 1]} : vector<8x128xf32> to vector<8x32xf32>
    %73 = math.tanh %71 : vector<8x32xf32>
    %74 = arith.mulf %72, %73 : vector<8x32xf32>
    %75 = vector.extract_strided_slice %50 {offsets = [0, 3, 0], sizes = [8, 1, 128], strides = [1, 1, 1]} : vector<8x24x128xf32> to vector<8x1x128xf32>
    %76 = vector.shape_cast %75 : vector<8x1x128xf32> to vector<8x128xf32>
    %cst_30 = arith.constant dense<0.000000e+00> : vector<8x128xf32>
    %77 = tpu.matmul %74, %51, %cst_30 {dimension_numbers = #tpu.dot_dimension_numbers<[1], [0], [0], [1], [0, 0, 1, 1], [], []>} : vector<8x32xf32>, vector<32x128xf32>, vector<8x128xf32> -> vector<8x128xf32>
    %78 = arith.addf %76, %77 : vector<8x128xf32>
    %cst_31 = arith.constant 5.000000e-01 : f32
    %79 = vector.broadcast %cst_31 : f32 to vector<8x128xf32>
    %80 = arith.mulf %79, %78 : vector<8x128xf32>
    %81 = math.tanh %80 : vector<8x128xf32>
    %cst_32 = arith.constant 1.000000e+00 : f32
    %82 = vector.broadcast %cst_32 : f32 to vector<8x128xf32>
    %83 = arith.addf %81, %82 : vector<8x128xf32>
    %cst_33 = arith.constant 5.000000e-01 : f32
    %84 = vector.broadcast %cst_33 : f32 to vector<8x128xf32>
    %85 = arith.mulf %84, %83 : vector<8x128xf32>
    %86 = math.tanh %78 : vector<8x128xf32>
    %87 = vector.extract_strided_slice %85 {offsets = [0, 32], sizes = [8, 32], strides = [1, 1]} : vector<8x128xf32> to vector<8x32xf32>
    %88 = arith.mulf %87, %71 : vector<8x32xf32>
    %89 = vector.extract_strided_slice %85 {offsets = [0, 0], sizes = [8, 32], strides = [1, 1]} : vector<8x128xf32> to vector<8x32xf32>
    %90 = vector.extract_strided_slice %86 {offsets = [0, 64], sizes = [8, 32], strides = [1, 1]} : vector<8x128xf32> to vector<8x32xf32>
    %91 = arith.mulf %89, %90 : vector<8x32xf32>
    %92 = arith.addf %88, %91 : vector<8x32xf32>
    %93 = vector.extract_strided_slice %85 {offsets = [0, 96], sizes = [8, 32], strides = [1, 1]} : vector<8x128xf32> to vector<8x32xf32>
    %94 = math.tanh %92 : vector<8x32xf32>
    %95 = arith.mulf %93, %94 : vector<8x32xf32>
    %96 = vector.extract_strided_slice %50 {offsets = [0, 4, 0], sizes = [8, 1, 128], strides = [1, 1, 1]} : vector<8x24x128xf32> to vector<8x1x128xf32>
    %97 = vector.shape_cast %96 : vector<8x1x128xf32> to vector<8x128xf32>
    %cst_34 = arith.constant dense<0.000000e+00> : vector<8x128xf32>
    %98 = tpu.matmul %95, %51, %cst_34 {dimension_numbers = #tpu.dot_dimension_numbers<[1], [0], [0], [1], [0, 0, 1, 1], [], []>} : vector<8x32xf32>, vector<32x128xf32>, vector<8x128xf32> -> vector<8x128xf32>
    %99 = arith.addf %97, %98 : vector<8x128xf32>
    %cst_35 = arith.constant 5.000000e-01 : f32
    %100 = vector.broadcast %cst_35 : f32 to vector<8x128xf32>
    %101 = arith.mulf %100, %99 : vector<8x128xf32>
    %102 = math.tanh %101 : vector<8x128xf32>
    %cst_36 = arith.constant 1.000000e+00 : f32
    %103 = vector.broadcast %cst_36 : f32 to vector<8x128xf32>
    %104 = arith.addf %102, %103 : vector<8x128xf32>
    %cst_37 = arith.constant 5.000000e-01 : f32
    %105 = vector.broadcast %cst_37 : f32 to vector<8x128xf32>
    %106 = arith.mulf %105, %104 : vector<8x128xf32>
    %107 = math.tanh %99 : vector<8x128xf32>
    %108 = vector.extract_strided_slice %106 {offsets = [0, 32], sizes = [8, 32], strides = [1, 1]} : vector<8x128xf32> to vector<8x32xf32>
    %109 = arith.mulf %108, %92 : vector<8x32xf32>
    %110 = vector.extract_strided_slice %106 {offsets = [0, 0], sizes = [8, 32], strides = [1, 1]} : vector<8x128xf32> to vector<8x32xf32>
    %111 = vector.extract_strided_slice %107 {offsets = [0, 64], sizes = [8, 32], strides = [1, 1]} : vector<8x128xf32> to vector<8x32xf32>
    %112 = arith.mulf %110, %111 : vector<8x32xf32>
    %113 = arith.addf %109, %112 : vector<8x32xf32>
    %114 = vector.extract_strided_slice %106 {offsets = [0, 96], sizes = [8, 32], strides = [1, 1]} : vector<8x128xf32> to vector<8x32xf32>
    %115 = math.tanh %113 : vector<8x32xf32>
    %116 = arith.mulf %114, %115 : vector<8x32xf32>
    %117 = vector.extract_strided_slice %50 {offsets = [0, 5, 0], sizes = [8, 1, 128], strides = [1, 1, 1]} : vector<8x24x128xf32> to vector<8x1x128xf32>
    %118 = vector.shape_cast %117 : vector<8x1x128xf32> to vector<8x128xf32>
    %cst_38 = arith.constant dense<0.000000e+00> : vector<8x128xf32>
    %119 = tpu.matmul %116, %51, %cst_38 {dimension_numbers = #tpu.dot_dimension_numbers<[1], [0], [0], [1], [0, 0, 1, 1], [], []>} : vector<8x32xf32>, vector<32x128xf32>, vector<8x128xf32> -> vector<8x128xf32>
    %120 = arith.addf %118, %119 : vector<8x128xf32>
    %cst_39 = arith.constant 5.000000e-01 : f32
    %121 = vector.broadcast %cst_39 : f32 to vector<8x128xf32>
    %122 = arith.mulf %121, %120 : vector<8x128xf32>
    %123 = math.tanh %122 : vector<8x128xf32>
    %cst_40 = arith.constant 1.000000e+00 : f32
    %124 = vector.broadcast %cst_40 : f32 to vector<8x128xf32>
    %125 = arith.addf %123, %124 : vector<8x128xf32>
    %cst_41 = arith.constant 5.000000e-01 : f32
    %126 = vector.broadcast %cst_41 : f32 to vector<8x128xf32>
    %127 = arith.mulf %126, %125 : vector<8x128xf32>
    %128 = math.tanh %120 : vector<8x128xf32>
    %129 = vector.extract_strided_slice %127 {offsets = [0, 32], sizes = [8, 32], strides = [1, 1]} : vector<8x128xf32> to vector<8x32xf32>
    %130 = arith.mulf %129, %113 : vector<8x32xf32>
    %131 = vector.extract_strided_slice %127 {offsets = [0, 0], sizes = [8, 32], strides = [1, 1]} : vector<8x128xf32> to vector<8x32xf32>
    %132 = vector.extract_strided_slice %128 {offsets = [0, 64], sizes = [8, 32], strides = [1, 1]} : vector<8x128xf32> to vector<8x32xf32>
    %133 = arith.mulf %131, %132 : vector<8x32xf32>
    %134 = arith.addf %130, %133 : vector<8x32xf32>
    %135 = vector.extract_strided_slice %127 {offsets = [0, 96], sizes = [8, 32], strides = [1, 1]} : vector<8x128xf32> to vector<8x32xf32>
    %136 = math.tanh %134 : vector<8x32xf32>
    %137 = arith.mulf %135, %136 : vector<8x32xf32>
    %138 = vector.extract_strided_slice %50 {offsets = [0, 6, 0], sizes = [8, 1, 128], strides = [1, 1, 1]} : vector<8x24x128xf32> to vector<8x1x128xf32>
    %139 = vector.shape_cast %138 : vector<8x1x128xf32> to vector<8x128xf32>
    %cst_42 = arith.constant dense<0.000000e+00> : vector<8x128xf32>
    %140 = tpu.matmul %137, %51, %cst_42 {dimension_numbers = #tpu.dot_dimension_numbers<[1], [0], [0], [1], [0, 0, 1, 1], [], []>} : vector<8x32xf32>, vector<32x128xf32>, vector<8x128xf32> -> vector<8x128xf32>
    %141 = arith.addf %139, %140 : vector<8x128xf32>
    %cst_43 = arith.constant 5.000000e-01 : f32
    %142 = vector.broadcast %cst_43 : f32 to vector<8x128xf32>
    %143 = arith.mulf %142, %141 : vector<8x128xf32>
    %144 = math.tanh %143 : vector<8x128xf32>
    %cst_44 = arith.constant 1.000000e+00 : f32
    %145 = vector.broadcast %cst_44 : f32 to vector<8x128xf32>
    %146 = arith.addf %144, %145 : vector<8x128xf32>
    %cst_45 = arith.constant 5.000000e-01 : f32
    %147 = vector.broadcast %cst_45 : f32 to vector<8x128xf32>
    %148 = arith.mulf %147, %146 : vector<8x128xf32>
    %149 = math.tanh %141 : vector<8x128xf32>
    %150 = vector.extract_strided_slice %148 {offsets = [0, 32], sizes = [8, 32], strides = [1, 1]} : vector<8x128xf32> to vector<8x32xf32>
    %151 = arith.mulf %150, %134 : vector<8x32xf32>
    %152 = vector.extract_strided_slice %148 {offsets = [0, 0], sizes = [8, 32], strides = [1, 1]} : vector<8x128xf32> to vector<8x32xf32>
    %153 = vector.extract_strided_slice %149 {offsets = [0, 64], sizes = [8, 32], strides = [1, 1]} : vector<8x128xf32> to vector<8x32xf32>
    %154 = arith.mulf %152, %153 : vector<8x32xf32>
    %155 = arith.addf %151, %154 : vector<8x32xf32>
    %156 = vector.extract_strided_slice %148 {offsets = [0, 96], sizes = [8, 32], strides = [1, 1]} : vector<8x128xf32> to vector<8x32xf32>
    %157 = math.tanh %155 : vector<8x32xf32>
    %158 = arith.mulf %156, %157 : vector<8x32xf32>
    %159 = vector.extract_strided_slice %50 {offsets = [0, 7, 0], sizes = [8, 1, 128], strides = [1, 1, 1]} : vector<8x24x128xf32> to vector<8x1x128xf32>
    %160 = vector.shape_cast %159 : vector<8x1x128xf32> to vector<8x128xf32>
    %cst_46 = arith.constant dense<0.000000e+00> : vector<8x128xf32>
    %161 = tpu.matmul %158, %51, %cst_46 {dimension_numbers = #tpu.dot_dimension_numbers<[1], [0], [0], [1], [0, 0, 1, 1], [], []>} : vector<8x32xf32>, vector<32x128xf32>, vector<8x128xf32> -> vector<8x128xf32>
    %162 = arith.addf %160, %161 : vector<8x128xf32>
    %cst_47 = arith.constant 5.000000e-01 : f32
    %163 = vector.broadcast %cst_47 : f32 to vector<8x128xf32>
    %164 = arith.mulf %163, %162 : vector<8x128xf32>
    %165 = math.tanh %164 : vector<8x128xf32>
    %cst_48 = arith.constant 1.000000e+00 : f32
    %166 = vector.broadcast %cst_48 : f32 to vector<8x128xf32>
    %167 = arith.addf %165, %166 : vector<8x128xf32>
    %cst_49 = arith.constant 5.000000e-01 : f32
    %168 = vector.broadcast %cst_49 : f32 to vector<8x128xf32>
    %169 = arith.mulf %168, %167 : vector<8x128xf32>
    %170 = math.tanh %162 : vector<8x128xf32>
    %171 = vector.extract_strided_slice %169 {offsets = [0, 32], sizes = [8, 32], strides = [1, 1]} : vector<8x128xf32> to vector<8x32xf32>
    %172 = arith.mulf %171, %155 : vector<8x32xf32>
    %173 = vector.extract_strided_slice %169 {offsets = [0, 0], sizes = [8, 32], strides = [1, 1]} : vector<8x128xf32> to vector<8x32xf32>
    %174 = vector.extract_strided_slice %170 {offsets = [0, 64], sizes = [8, 32], strides = [1, 1]} : vector<8x128xf32> to vector<8x32xf32>
    %175 = arith.mulf %173, %174 : vector<8x32xf32>
    %176 = arith.addf %172, %175 : vector<8x32xf32>
    %177 = vector.extract_strided_slice %169 {offsets = [0, 96], sizes = [8, 32], strides = [1, 1]} : vector<8x128xf32> to vector<8x32xf32>
    %178 = math.tanh %176 : vector<8x32xf32>
    %179 = arith.mulf %177, %178 : vector<8x32xf32>
    %180 = vector.extract_strided_slice %50 {offsets = [0, 8, 0], sizes = [8, 1, 128], strides = [1, 1, 1]} : vector<8x24x128xf32> to vector<8x1x128xf32>
    %181 = vector.shape_cast %180 : vector<8x1x128xf32> to vector<8x128xf32>
    %cst_50 = arith.constant dense<0.000000e+00> : vector<8x128xf32>
    %182 = tpu.matmul %179, %51, %cst_50 {dimension_numbers = #tpu.dot_dimension_numbers<[1], [0], [0], [1], [0, 0, 1, 1], [], []>} : vector<8x32xf32>, vector<32x128xf32>, vector<8x128xf32> -> vector<8x128xf32>
    %183 = arith.addf %181, %182 : vector<8x128xf32>
    %cst_51 = arith.constant 5.000000e-01 : f32
    %184 = vector.broadcast %cst_51 : f32 to vector<8x128xf32>
    %185 = arith.mulf %184, %183 : vector<8x128xf32>
    %186 = math.tanh %185 : vector<8x128xf32>
    %cst_52 = arith.constant 1.000000e+00 : f32
    %187 = vector.broadcast %cst_52 : f32 to vector<8x128xf32>
    %188 = arith.addf %186, %187 : vector<8x128xf32>
    %cst_53 = arith.constant 5.000000e-01 : f32
    %189 = vector.broadcast %cst_53 : f32 to vector<8x128xf32>
    %190 = arith.mulf %189, %188 : vector<8x128xf32>
    %191 = math.tanh %183 : vector<8x128xf32>
    %192 = vector.extract_strided_slice %190 {offsets = [0, 32], sizes = [8, 32], strides = [1, 1]} : vector<8x128xf32> to vector<8x32xf32>
    %193 = arith.mulf %192, %176 : vector<8x32xf32>
    %194 = vector.extract_strided_slice %190 {offsets = [0, 0], sizes = [8, 32], strides = [1, 1]} : vector<8x128xf32> to vector<8x32xf32>
    %195 = vector.extract_strided_slice %191 {offsets = [0, 64], sizes = [8, 32], strides = [1, 1]} : vector<8x128xf32> to vector<8x32xf32>
    %196 = arith.mulf %194, %195 : vector<8x32xf32>
    %197 = arith.addf %193, %196 : vector<8x32xf32>
    %198 = vector.extract_strided_slice %190 {offsets = [0, 96], sizes = [8, 32], strides = [1, 1]} : vector<8x128xf32> to vector<8x32xf32>
    %199 = math.tanh %197 : vector<8x32xf32>
    %200 = arith.mulf %198, %199 : vector<8x32xf32>
    %201 = vector.extract_strided_slice %50 {offsets = [0, 9, 0], sizes = [8, 1, 128], strides = [1, 1, 1]} : vector<8x24x128xf32> to vector<8x1x128xf32>
    %202 = vector.shape_cast %201 : vector<8x1x128xf32> to vector<8x128xf32>
    %cst_54 = arith.constant dense<0.000000e+00> : vector<8x128xf32>
    %203 = tpu.matmul %200, %51, %cst_54 {dimension_numbers = #tpu.dot_dimension_numbers<[1], [0], [0], [1], [0, 0, 1, 1], [], []>} : vector<8x32xf32>, vector<32x128xf32>, vector<8x128xf32> -> vector<8x128xf32>
    %204 = arith.addf %202, %203 : vector<8x128xf32>
    %cst_55 = arith.constant 5.000000e-01 : f32
    %205 = vector.broadcast %cst_55 : f32 to vector<8x128xf32>
    %206 = arith.mulf %205, %204 : vector<8x128xf32>
    %207 = math.tanh %206 : vector<8x128xf32>
    %cst_56 = arith.constant 1.000000e+00 : f32
    %208 = vector.broadcast %cst_56 : f32 to vector<8x128xf32>
    %209 = arith.addf %207, %208 : vector<8x128xf32>
    %cst_57 = arith.constant 5.000000e-01 : f32
    %210 = vector.broadcast %cst_57 : f32 to vector<8x128xf32>
    %211 = arith.mulf %210, %209 : vector<8x128xf32>
    %212 = math.tanh %204 : vector<8x128xf32>
    %213 = vector.extract_strided_slice %211 {offsets = [0, 32], sizes = [8, 32], strides = [1, 1]} : vector<8x128xf32> to vector<8x32xf32>
    %214 = arith.mulf %213, %197 : vector<8x32xf32>
    %215 = vector.extract_strided_slice %211 {offsets = [0, 0], sizes = [8, 32], strides = [1, 1]} : vector<8x128xf32> to vector<8x32xf32>
    %216 = vector.extract_strided_slice %212 {offsets = [0, 64], sizes = [8, 32], strides = [1, 1]} : vector<8x128xf32> to vector<8x32xf32>
    %217 = arith.mulf %215, %216 : vector<8x32xf32>
    %218 = arith.addf %214, %217 : vector<8x32xf32>
    %219 = vector.extract_strided_slice %211 {offsets = [0, 96], sizes = [8, 32], strides = [1, 1]} : vector<8x128xf32> to vector<8x32xf32>
    %220 = math.tanh %218 : vector<8x32xf32>
    %221 = arith.mulf %219, %220 : vector<8x32xf32>
    %222 = vector.extract_strided_slice %50 {offsets = [0, 10, 0], sizes = [8, 1, 128], strides = [1, 1, 1]} : vector<8x24x128xf32> to vector<8x1x128xf32>
    %223 = vector.shape_cast %222 : vector<8x1x128xf32> to vector<8x128xf32>
    %cst_58 = arith.constant dense<0.000000e+00> : vector<8x128xf32>
    %224 = tpu.matmul %221, %51, %cst_58 {dimension_numbers = #tpu.dot_dimension_numbers<[1], [0], [0], [1], [0, 0, 1, 1], [], []>} : vector<8x32xf32>, vector<32x128xf32>, vector<8x128xf32> -> vector<8x128xf32>
    %225 = arith.addf %223, %224 : vector<8x128xf32>
    %cst_59 = arith.constant 5.000000e-01 : f32
    %226 = vector.broadcast %cst_59 : f32 to vector<8x128xf32>
    %227 = arith.mulf %226, %225 : vector<8x128xf32>
    %228 = math.tanh %227 : vector<8x128xf32>
    %cst_60 = arith.constant 1.000000e+00 : f32
    %229 = vector.broadcast %cst_60 : f32 to vector<8x128xf32>
    %230 = arith.addf %228, %229 : vector<8x128xf32>
    %cst_61 = arith.constant 5.000000e-01 : f32
    %231 = vector.broadcast %cst_61 : f32 to vector<8x128xf32>
    %232 = arith.mulf %231, %230 : vector<8x128xf32>
    %233 = math.tanh %225 : vector<8x128xf32>
    %234 = vector.extract_strided_slice %232 {offsets = [0, 32], sizes = [8, 32], strides = [1, 1]} : vector<8x128xf32> to vector<8x32xf32>
    %235 = arith.mulf %234, %218 : vector<8x32xf32>
    %236 = vector.extract_strided_slice %232 {offsets = [0, 0], sizes = [8, 32], strides = [1, 1]} : vector<8x128xf32> to vector<8x32xf32>
    %237 = vector.extract_strided_slice %233 {offsets = [0, 64], sizes = [8, 32], strides = [1, 1]} : vector<8x128xf32> to vector<8x32xf32>
    %238 = arith.mulf %236, %237 : vector<8x32xf32>
    %239 = arith.addf %235, %238 : vector<8x32xf32>
    %240 = vector.extract_strided_slice %232 {offsets = [0, 96], sizes = [8, 32], strides = [1, 1]} : vector<8x128xf32> to vector<8x32xf32>
    %241 = math.tanh %239 : vector<8x32xf32>
    %242 = arith.mulf %240, %241 : vector<8x32xf32>
    %243 = vector.extract_strided_slice %50 {offsets = [0, 11, 0], sizes = [8, 1, 128], strides = [1, 1, 1]} : vector<8x24x128xf32> to vector<8x1x128xf32>
    %244 = vector.shape_cast %243 : vector<8x1x128xf32> to vector<8x128xf32>
    %cst_62 = arith.constant dense<0.000000e+00> : vector<8x128xf32>
    %245 = tpu.matmul %242, %51, %cst_62 {dimension_numbers = #tpu.dot_dimension_numbers<[1], [0], [0], [1], [0, 0, 1, 1], [], []>} : vector<8x32xf32>, vector<32x128xf32>, vector<8x128xf32> -> vector<8x128xf32>
    %246 = arith.addf %244, %245 : vector<8x128xf32>
    %cst_63 = arith.constant 5.000000e-01 : f32
    %247 = vector.broadcast %cst_63 : f32 to vector<8x128xf32>
    %248 = arith.mulf %247, %246 : vector<8x128xf32>
    %249 = math.tanh %248 : vector<8x128xf32>
    %cst_64 = arith.constant 1.000000e+00 : f32
    %250 = vector.broadcast %cst_64 : f32 to vector<8x128xf32>
    %251 = arith.addf %249, %250 : vector<8x128xf32>
    %cst_65 = arith.constant 5.000000e-01 : f32
    %252 = vector.broadcast %cst_65 : f32 to vector<8x128xf32>
    %253 = arith.mulf %252, %251 : vector<8x128xf32>
    %254 = math.tanh %246 : vector<8x128xf32>
    %255 = vector.extract_strided_slice %253 {offsets = [0, 32], sizes = [8, 32], strides = [1, 1]} : vector<8x128xf32> to vector<8x32xf32>
    %256 = arith.mulf %255, %239 : vector<8x32xf32>
    %257 = vector.extract_strided_slice %253 {offsets = [0, 0], sizes = [8, 32], strides = [1, 1]} : vector<8x128xf32> to vector<8x32xf32>
    %258 = vector.extract_strided_slice %254 {offsets = [0, 64], sizes = [8, 32], strides = [1, 1]} : vector<8x128xf32> to vector<8x32xf32>
    %259 = arith.mulf %257, %258 : vector<8x32xf32>
    %260 = arith.addf %256, %259 : vector<8x32xf32>
    %261 = vector.extract_strided_slice %253 {offsets = [0, 96], sizes = [8, 32], strides = [1, 1]} : vector<8x128xf32> to vector<8x32xf32>
    %262 = math.tanh %260 : vector<8x32xf32>
    %263 = arith.mulf %261, %262 : vector<8x32xf32>
    %264 = vector.extract_strided_slice %50 {offsets = [0, 12, 0], sizes = [8, 1, 128], strides = [1, 1, 1]} : vector<8x24x128xf32> to vector<8x1x128xf32>
    %265 = vector.shape_cast %264 : vector<8x1x128xf32> to vector<8x128xf32>
    %cst_66 = arith.constant dense<0.000000e+00> : vector<8x128xf32>
    %266 = tpu.matmul %263, %51, %cst_66 {dimension_numbers = #tpu.dot_dimension_numbers<[1], [0], [0], [1], [0, 0, 1, 1], [], []>} : vector<8x32xf32>, vector<32x128xf32>, vector<8x128xf32> -> vector<8x128xf32>
    %267 = arith.addf %265, %266 : vector<8x128xf32>
    %cst_67 = arith.constant 5.000000e-01 : f32
    %268 = vector.broadcast %cst_67 : f32 to vector<8x128xf32>
    %269 = arith.mulf %268, %267 : vector<8x128xf32>
    %270 = math.tanh %269 : vector<8x128xf32>
    %cst_68 = arith.constant 1.000000e+00 : f32
    %271 = vector.broadcast %cst_68 : f32 to vector<8x128xf32>
    %272 = arith.addf %270, %271 : vector<8x128xf32>
    %cst_69 = arith.constant 5.000000e-01 : f32
    %273 = vector.broadcast %cst_69 : f32 to vector<8x128xf32>
    %274 = arith.mulf %273, %272 : vector<8x128xf32>
    %275 = math.tanh %267 : vector<8x128xf32>
    %276 = vector.extract_strided_slice %274 {offsets = [0, 32], sizes = [8, 32], strides = [1, 1]} : vector<8x128xf32> to vector<8x32xf32>
    %277 = arith.mulf %276, %260 : vector<8x32xf32>
    %278 = vector.extract_strided_slice %274 {offsets = [0, 0], sizes = [8, 32], strides = [1, 1]} : vector<8x128xf32> to vector<8x32xf32>
    %279 = vector.extract_strided_slice %275 {offsets = [0, 64], sizes = [8, 32], strides = [1, 1]} : vector<8x128xf32> to vector<8x32xf32>
    %280 = arith.mulf %278, %279 : vector<8x32xf32>
    %281 = arith.addf %277, %280 : vector<8x32xf32>
    %282 = vector.extract_strided_slice %274 {offsets = [0, 96], sizes = [8, 32], strides = [1, 1]} : vector<8x128xf32> to vector<8x32xf32>
    %283 = math.tanh %281 : vector<8x32xf32>
    %284 = arith.mulf %282, %283 : vector<8x32xf32>
    %285 = vector.extract_strided_slice %50 {offsets = [0, 13, 0], sizes = [8, 1, 128], strides = [1, 1, 1]} : vector<8x24x128xf32> to vector<8x1x128xf32>
    %286 = vector.shape_cast %285 : vector<8x1x128xf32> to vector<8x128xf32>
    %cst_70 = arith.constant dense<0.000000e+00> : vector<8x128xf32>
    %287 = tpu.matmul %284, %51, %cst_70 {dimension_numbers = #tpu.dot_dimension_numbers<[1], [0], [0], [1], [0, 0, 1, 1], [], []>} : vector<8x32xf32>, vector<32x128xf32>, vector<8x128xf32> -> vector<8x128xf32>
    %288 = arith.addf %286, %287 : vector<8x128xf32>
    %cst_71 = arith.constant 5.000000e-01 : f32
    %289 = vector.broadcast %cst_71 : f32 to vector<8x128xf32>
    %290 = arith.mulf %289, %288 : vector<8x128xf32>
    %291 = math.tanh %290 : vector<8x128xf32>
    %cst_72 = arith.constant 1.000000e+00 : f32
    %292 = vector.broadcast %cst_72 : f32 to vector<8x128xf32>
    %293 = arith.addf %291, %292 : vector<8x128xf32>
    %cst_73 = arith.constant 5.000000e-01 : f32
    %294 = vector.broadcast %cst_73 : f32 to vector<8x128xf32>
    %295 = arith.mulf %294, %293 : vector<8x128xf32>
    %296 = math.tanh %288 : vector<8x128xf32>
    %297 = vector.extract_strided_slice %295 {offsets = [0, 32], sizes = [8, 32], strides = [1, 1]} : vector<8x128xf32> to vector<8x32xf32>
    %298 = arith.mulf %297, %281 : vector<8x32xf32>
    %299 = vector.extract_strided_slice %295 {offsets = [0, 0], sizes = [8, 32], strides = [1, 1]} : vector<8x128xf32> to vector<8x32xf32>
    %300 = vector.extract_strided_slice %296 {offsets = [0, 64], sizes = [8, 32], strides = [1, 1]} : vector<8x128xf32> to vector<8x32xf32>
    %301 = arith.mulf %299, %300 : vector<8x32xf32>
    %302 = arith.addf %298, %301 : vector<8x32xf32>
    %303 = vector.extract_strided_slice %295 {offsets = [0, 96], sizes = [8, 32], strides = [1, 1]} : vector<8x128xf32> to vector<8x32xf32>
    %304 = math.tanh %302 : vector<8x32xf32>
    %305 = arith.mulf %303, %304 : vector<8x32xf32>
    %306 = vector.extract_strided_slice %50 {offsets = [0, 14, 0], sizes = [8, 1, 128], strides = [1, 1, 1]} : vector<8x24x128xf32> to vector<8x1x128xf32>
    %307 = vector.shape_cast %306 : vector<8x1x128xf32> to vector<8x128xf32>
    %cst_74 = arith.constant dense<0.000000e+00> : vector<8x128xf32>
    %308 = tpu.matmul %305, %51, %cst_74 {dimension_numbers = #tpu.dot_dimension_numbers<[1], [0], [0], [1], [0, 0, 1, 1], [], []>} : vector<8x32xf32>, vector<32x128xf32>, vector<8x128xf32> -> vector<8x128xf32>
    %309 = arith.addf %307, %308 : vector<8x128xf32>
    %cst_75 = arith.constant 5.000000e-01 : f32
    %310 = vector.broadcast %cst_75 : f32 to vector<8x128xf32>
    %311 = arith.mulf %310, %309 : vector<8x128xf32>
    %312 = math.tanh %311 : vector<8x128xf32>
    %cst_76 = arith.constant 1.000000e+00 : f32
    %313 = vector.broadcast %cst_76 : f32 to vector<8x128xf32>
    %314 = arith.addf %312, %313 : vector<8x128xf32>
    %cst_77 = arith.constant 5.000000e-01 : f32
    %315 = vector.broadcast %cst_77 : f32 to vector<8x128xf32>
    %316 = arith.mulf %315, %314 : vector<8x128xf32>
    %317 = math.tanh %309 : vector<8x128xf32>
    %318 = vector.extract_strided_slice %316 {offsets = [0, 32], sizes = [8, 32], strides = [1, 1]} : vector<8x128xf32> to vector<8x32xf32>
    %319 = arith.mulf %318, %302 : vector<8x32xf32>
    %320 = vector.extract_strided_slice %316 {offsets = [0, 0], sizes = [8, 32], strides = [1, 1]} : vector<8x128xf32> to vector<8x32xf32>
    %321 = vector.extract_strided_slice %317 {offsets = [0, 64], sizes = [8, 32], strides = [1, 1]} : vector<8x128xf32> to vector<8x32xf32>
    %322 = arith.mulf %320, %321 : vector<8x32xf32>
    %323 = arith.addf %319, %322 : vector<8x32xf32>
    %324 = vector.extract_strided_slice %316 {offsets = [0, 96], sizes = [8, 32], strides = [1, 1]} : vector<8x128xf32> to vector<8x32xf32>
    %325 = math.tanh %323 : vector<8x32xf32>
    %326 = arith.mulf %324, %325 : vector<8x32xf32>
    %327 = vector.extract_strided_slice %50 {offsets = [0, 15, 0], sizes = [8, 1, 128], strides = [1, 1, 1]} : vector<8x24x128xf32> to vector<8x1x128xf32>
    %328 = vector.shape_cast %327 : vector<8x1x128xf32> to vector<8x128xf32>
    %cst_78 = arith.constant dense<0.000000e+00> : vector<8x128xf32>
    %329 = tpu.matmul %326, %51, %cst_78 {dimension_numbers = #tpu.dot_dimension_numbers<[1], [0], [0], [1], [0, 0, 1, 1], [], []>} : vector<8x32xf32>, vector<32x128xf32>, vector<8x128xf32> -> vector<8x128xf32>
    %330 = arith.addf %328, %329 : vector<8x128xf32>
    %cst_79 = arith.constant 5.000000e-01 : f32
    %331 = vector.broadcast %cst_79 : f32 to vector<8x128xf32>
    %332 = arith.mulf %331, %330 : vector<8x128xf32>
    %333 = math.tanh %332 : vector<8x128xf32>
    %cst_80 = arith.constant 1.000000e+00 : f32
    %334 = vector.broadcast %cst_80 : f32 to vector<8x128xf32>
    %335 = arith.addf %333, %334 : vector<8x128xf32>
    %cst_81 = arith.constant 5.000000e-01 : f32
    %336 = vector.broadcast %cst_81 : f32 to vector<8x128xf32>
    %337 = arith.mulf %336, %335 : vector<8x128xf32>
    %338 = math.tanh %330 : vector<8x128xf32>
    %339 = vector.extract_strided_slice %337 {offsets = [0, 32], sizes = [8, 32], strides = [1, 1]} : vector<8x128xf32> to vector<8x32xf32>
    %340 = arith.mulf %339, %323 : vector<8x32xf32>
    %341 = vector.extract_strided_slice %337 {offsets = [0, 0], sizes = [8, 32], strides = [1, 1]} : vector<8x128xf32> to vector<8x32xf32>
    %342 = vector.extract_strided_slice %338 {offsets = [0, 64], sizes = [8, 32], strides = [1, 1]} : vector<8x128xf32> to vector<8x32xf32>
    %343 = arith.mulf %341, %342 : vector<8x32xf32>
    %344 = arith.addf %340, %343 : vector<8x32xf32>
    %345 = vector.extract_strided_slice %337 {offsets = [0, 96], sizes = [8, 32], strides = [1, 1]} : vector<8x128xf32> to vector<8x32xf32>
    %346 = math.tanh %344 : vector<8x32xf32>
    %347 = arith.mulf %345, %346 : vector<8x32xf32>
    %348 = vector.extract_strided_slice %50 {offsets = [0, 16, 0], sizes = [8, 1, 128], strides = [1, 1, 1]} : vector<8x24x128xf32> to vector<8x1x128xf32>
    %349 = vector.shape_cast %348 : vector<8x1x128xf32> to vector<8x128xf32>
    %cst_82 = arith.constant dense<0.000000e+00> : vector<8x128xf32>
    %350 = tpu.matmul %347, %51, %cst_82 {dimension_numbers = #tpu.dot_dimension_numbers<[1], [0], [0], [1], [0, 0, 1, 1], [], []>} : vector<8x32xf32>, vector<32x128xf32>, vector<8x128xf32> -> vector<8x128xf32>
    %351 = arith.addf %349, %350 : vector<8x128xf32>
    %cst_83 = arith.constant 5.000000e-01 : f32
    %352 = vector.broadcast %cst_83 : f32 to vector<8x128xf32>
    %353 = arith.mulf %352, %351 : vector<8x128xf32>
    %354 = math.tanh %353 : vector<8x128xf32>
    %cst_84 = arith.constant 1.000000e+00 : f32
    %355 = vector.broadcast %cst_84 : f32 to vector<8x128xf32>
    %356 = arith.addf %354, %355 : vector<8x128xf32>
    %cst_85 = arith.constant 5.000000e-01 : f32
    %357 = vector.broadcast %cst_85 : f32 to vector<8x128xf32>
    %358 = arith.mulf %357, %356 : vector<8x128xf32>
    %359 = math.tanh %351 : vector<8x128xf32>
    %360 = vector.extract_strided_slice %358 {offsets = [0, 32], sizes = [8, 32], strides = [1, 1]} : vector<8x128xf32> to vector<8x32xf32>
    %361 = arith.mulf %360, %344 : vector<8x32xf32>
    %362 = vector.extract_strided_slice %358 {offsets = [0, 0], sizes = [8, 32], strides = [1, 1]} : vector<8x128xf32> to vector<8x32xf32>
    %363 = vector.extract_strided_slice %359 {offsets = [0, 64], sizes = [8, 32], strides = [1, 1]} : vector<8x128xf32> to vector<8x32xf32>
    %364 = arith.mulf %362, %363 : vector<8x32xf32>
    %365 = arith.addf %361, %364 : vector<8x32xf32>
    %366 = vector.extract_strided_slice %358 {offsets = [0, 96], sizes = [8, 32], strides = [1, 1]} : vector<8x128xf32> to vector<8x32xf32>
    %367 = math.tanh %365 : vector<8x32xf32>
    %368 = arith.mulf %366, %367 : vector<8x32xf32>
    %369 = vector.extract_strided_slice %50 {offsets = [0, 17, 0], sizes = [8, 1, 128], strides = [1, 1, 1]} : vector<8x24x128xf32> to vector<8x1x128xf32>
    %370 = vector.shape_cast %369 : vector<8x1x128xf32> to vector<8x128xf32>
    %cst_86 = arith.constant dense<0.000000e+00> : vector<8x128xf32>
    %371 = tpu.matmul %368, %51, %cst_86 {dimension_numbers = #tpu.dot_dimension_numbers<[1], [0], [0], [1], [0, 0, 1, 1], [], []>} : vector<8x32xf32>, vector<32x128xf32>, vector<8x128xf32> -> vector<8x128xf32>
    %372 = arith.addf %370, %371 : vector<8x128xf32>
    %cst_87 = arith.constant 5.000000e-01 : f32
    %373 = vector.broadcast %cst_87 : f32 to vector<8x128xf32>
    %374 = arith.mulf %373, %372 : vector<8x128xf32>
    %375 = math.tanh %374 : vector<8x128xf32>
    %cst_88 = arith.constant 1.000000e+00 : f32
    %376 = vector.broadcast %cst_88 : f32 to vector<8x128xf32>
    %377 = arith.addf %375, %376 : vector<8x128xf32>
    %cst_89 = arith.constant 5.000000e-01 : f32
    %378 = vector.broadcast %cst_89 : f32 to vector<8x128xf32>
    %379 = arith.mulf %378, %377 : vector<8x128xf32>
    %380 = math.tanh %372 : vector<8x128xf32>
    %381 = vector.extract_strided_slice %379 {offsets = [0, 32], sizes = [8, 32], strides = [1, 1]} : vector<8x128xf32> to vector<8x32xf32>
    %382 = arith.mulf %381, %365 : vector<8x32xf32>
    %383 = vector.extract_strided_slice %379 {offsets = [0, 0], sizes = [8, 32], strides = [1, 1]} : vector<8x128xf32> to vector<8x32xf32>
    %384 = vector.extract_strided_slice %380 {offsets = [0, 64], sizes = [8, 32], strides = [1, 1]} : vector<8x128xf32> to vector<8x32xf32>
    %385 = arith.mulf %383, %384 : vector<8x32xf32>
    %386 = arith.addf %382, %385 : vector<8x32xf32>
    %387 = vector.extract_strided_slice %379 {offsets = [0, 96], sizes = [8, 32], strides = [1, 1]} : vector<8x128xf32> to vector<8x32xf32>
    %388 = math.tanh %386 : vector<8x32xf32>
    %389 = arith.mulf %387, %388 : vector<8x32xf32>
    %c0_90 = arith.constant 0 : index
    %390 = memref.load %arg13[%c0_90] : memref<1xf32, #tpu.memory_space<smem>>
    %391 = vector.broadcast %390 : f32 to vector<8x32xf32>
    %392 = arith.mulf %391, %44 : vector<8x32xf32>
    %cst_91 = arith.constant 1.000000e+00 : f32
    %393 = arith.subf %cst_91, %390 : f32
    %394 = vector.broadcast %393 : f32 to vector<8x32xf32>
    %395 = arith.mulf %394, %389 : vector<8x32xf32>
    %396 = arith.addf %392, %395 : vector<8x32xf32>
    %397 = tpu.transpose %396, [1, 0] : vector<8x32xf32> -> vector<32x8xf32>
    %c0_92 = arith.constant 0 : index
    %c0_93 = arith.constant 0 : index
    %398 = vector.load %arg9[%c0_92, %c0_93] : memref<16x32xf32, #tpu.memory_space<vmem>>, vector<16x32xf32>
    %cst_94 = arith.constant dense<0.000000e+00> : vector<16x8xf32>
    %399 = tpu.matmul %398, %397, %cst_94 {dimension_numbers = #tpu.dot_dimension_numbers<[1], [0], [0], [1], [0, 0, 1, 1], [], []>} : vector<16x32xf32>, vector<32x8xf32>, vector<16x8xf32> -> vector<16x8xf32>
    %c0_95 = arith.constant 0 : index
    %c0_96 = arith.constant 0 : index
    %400 = vector.load %arg10[%c0_95, %c0_96] : memref<16x1xf32, #tpu.memory_space<vmem>>, vector<16x1xf32>
    %401 = vector.broadcast %400 : vector<16x1xf32> to vector<16x8xf32>
    %402 = arith.addf %399, %401 : vector<16x8xf32>
    %cst_97 = arith.constant 0.000000e+00 : f32
    %403 = vector.broadcast %cst_97 : f32 to vector<16x8xf32>
    %404 = arith.maximumf %402, %403 : vector<16x8xf32>
    %c0_98 = arith.constant 0 : index
    %c0_99 = arith.constant 0 : index
    %405 = vector.load %arg11[%c0_98, %c0_99] : memref<1x16xf32, #tpu.memory_space<vmem>>, vector<1x16xf32>
    %cst_100 = arith.constant dense<0.000000e+00> : vector<1x8xf32>
    %406 = tpu.matmul %405, %404, %cst_100 {dimension_numbers = #tpu.dot_dimension_numbers<[1], [0], [0], [1], [0, 0, 1, 1], [], []>} : vector<1x16xf32>, vector<16x8xf32>, vector<1x8xf32> -> vector<1x8xf32>
    %c0_101 = arith.constant 0 : index
    %c0_102 = arith.constant 0 : index
    %407 = vector.load %arg12[%c0_101, %c0_102] : memref<1x1xf32, #tpu.memory_space<vmem>>, vector<1x1xf32>
    %408 = vector.broadcast %407 : vector<1x1xf32> to vector<1x8xf32>
    %409 = arith.addf %406, %408 : vector<1x8xf32>
    %cst_103 = arith.constant 5.000000e-01 : f32
    %410 = vector.broadcast %cst_103 : f32 to vector<1x8xf32>
    %411 = arith.mulf %410, %409 : vector<1x8xf32>
    %412 = math.tanh %411 : vector<1x8xf32>
    %cst_104 = arith.constant 1.000000e+00 : f32
    %413 = vector.broadcast %cst_104 : f32 to vector<1x8xf32>
    %414 = arith.addf %412, %413 : vector<1x8xf32>
    %cst_105 = arith.constant 5.000000e-01 : f32
    %415 = vector.broadcast %cst_105 : f32 to vector<1x8xf32>
    %416 = arith.mulf %415, %414 : vector<1x8xf32>
    %417 = vector.shape_cast %416 : vector<1x8xf32> to vector<1x1x8xf32>
    %c0_106 = arith.constant 0 : index
    %c0_107 = arith.constant 0 : index
    %c0_108 = arith.constant 0 : index
    %418 = vector.load %arg14[%c0_106, %c0_107, %c0_108] : memref<1x1x8xf32, #tpu.memory_space<vmem>>, vector<1x1x8xf32>
    tpu.vector_store %arg14[%c0_106, %c0_107, %c0_108], %417 {strides = array<i32>} : memref<1x1x8xf32, #tpu.memory_space<vmem>>, vector<1x1x8xf32>,
    return
  }
  func.func @transform_0(%arg0: i32) -> (i32, i32, i32) {
    %c0_i32 = arith.constant 0 : i32
    %c0_i32_0 = arith.constant 0 : i32
    %c0_i32_1 = arith.constant 0 : i32
    return %arg0, %c0_i32, %c0_i32_0 : i32, i32, i32
  }
  func.func @transform_1(%arg0: i32) -> (i32, i32) {
    %c0_i32 = arith.constant 0 : i32
    %c0_i32_0 = arith.constant 0 : i32
    %c0_i32_1 = arith.constant 0 : i32
    return %c0_i32, %c0_i32_0 : i32, i32
  }
  func.func @transform_2(%arg0: i32) -> (i32, i32) {
    %c0_i32 = arith.constant 0 : i32
    %c0_i32_0 = arith.constant 0 : i32
    %c0_i32_1 = arith.constant 0 : i32
    return %c0_i32, %c0_i32_0 : i32, i32
  }
  func.func @transform_3(%arg0: i32) -> (i32, i32) {
    %c0_i32 = arith.constant 0 : i32
    %c0_i32_0 = arith.constant 0 : i32
    %c0_i32_1 = arith.constant 0 : i32
    return %c0_i32, %c0_i32_0 : i32, i32
  }
  func.func @transform_4(%arg0: i32) -> (i32, i32) {
    %c0_i32 = arith.constant 0 : i32
    %c0_i32_0 = arith.constant 0 : i32
    %c0_i32_1 = arith.constant 0 : i32
    return %c0_i32, %c0_i32_0 : i32, i32
  }
  func.func @transform_5(%arg0: i32) -> (i32, i32) {
    %c0_i32 = arith.constant 0 : i32
    %c0_i32_0 = arith.constant 0 : i32
    %c0_i32_1 = arith.constant 0 : i32
    return %c0_i32, %c0_i32_0 : i32, i32
  }
  func.func @transform_6(%arg0: i32) -> (i32, i32) {
    %c0_i32 = arith.constant 0 : i32
    %c0_i32_0 = arith.constant 0 : i32
    %c0_i32_1 = arith.constant 0 : i32
    return %c0_i32, %c0_i32_0 : i32, i32
  }
  func.func @transform_7(%arg0: i32) -> (i32, i32) {
    %c0_i32 = arith.constant 0 : i32
    %c0_i32_0 = arith.constant 0 : i32
    %c0_i32_1 = arith.constant 0 : i32
    return %c0_i32, %c0_i32_0 : i32, i32
  }
  func.func @transform_8(%arg0: i32) -> (i32, i32) {
    %c0_i32 = arith.constant 0 : i32
    %c0_i32_0 = arith.constant 0 : i32
    %c0_i32_1 = arith.constant 0 : i32
    return %c0_i32, %c0_i32_0 : i32, i32
  }
  func.func @transform_9(%arg0: i32) -> (i32, i32) {
    %c0_i32 = arith.constant 0 : i32
    %c0_i32_0 = arith.constant 0 : i32
    %c0_i32_1 = arith.constant 0 : i32
    return %c0_i32, %c0_i32_0 : i32, i32
  }
  func.func @transform_10(%arg0: i32) -> (i32, i32) {
    %c0_i32 = arith.constant 0 : i32
    %c0_i32_0 = arith.constant 0 : i32
    %c0_i32_1 = arith.constant 0 : i32
    return %c0_i32, %c0_i32_0 : i32, i32
  }
  func.func @transform_11(%arg0: i32) -> (i32, i32) {
    %c0_i32 = arith.constant 0 : i32
    %c0_i32_0 = arith.constant 0 : i32
    %c0_i32_1 = arith.constant 0 : i32
    return %c0_i32, %c0_i32_0 : i32, i32
  }
  func.func @transform_12(%arg0: i32) -> i32 {
    %c0_i32 = arith.constant 0 : i32
    %c0_i32_0 = arith.constant 0 : i32
    return %c0_i32 : i32
  }
  func.func @transform_13(%arg0: i32) -> (i32, i32, i32) {
    %c0_i32 = arith.constant 0 : i32
    %c0_i32_0 = arith.constant 0 : i32
    %c0_i32_1 = arith.constant 0 : i32
    return %arg0, %c0_i32, %c0_i32_0 : i32, i32, i32
  }
}

</mosaic_0001>

<llo_original>
// kernel: tpu_custom_call.1
$region0: #{tpu_custom_call.1}
  #allocation0 [shape = 'u32[]', space=smem, size = 0x4, offset = 0x4, fixed_abs, tag = 'smem constant byte address 0x4 - core index']
  #allocation1 [shape = 'u32[72,128]{1,0:T(1,128)}', space=vmem, size = 0x9000, scoped, tag = 'internal scratch']
  #allocation2 [shape = 'f32[1,1]{1,0:T(1,128)S(1)}', space=vmem, size = 0x200, scoped, tag = 'scoped memory for tpu_custom_call.1']
  #allocation3 [shape = 'f32[1]{0:T(128)S(6)}', space=smem, size = 0x200, scoped, tag = 'scoped memory for tpu_custom_call.1']
  %s0 = inlined_call_operand.vmem [shape: f32[8,24,3], index: 0, kind: input, shape index: {}]
  %s1 = inlined_call_operand.vmem [shape: f32[3,80], index: 1, kind: input, shape index: {}]
  %s2 = inlined_call_operand.vmem [shape: f32[1,16], index: 2, kind: input, shape index: {}]
  %s3 = inlined_call_operand.vmem [shape: f32[16,160], index: 3, kind: input, shape index: {}]
  %s4 = inlined_call_operand.vmem [shape: f32[1,32], index: 4, kind: input, shape index: {}]
  %s5 = inlined_call_operand.vmem [shape: f32[3,128], index: 5, kind: input, shape index: {}]
  %s6 = inlined_call_operand.vmem [shape: f32[32,128], index: 6, kind: input, shape index: {}]
  %s7 = inlined_call_operand.vmem [shape: f32[1,128], index: 7, kind: input, shape index: {}]
  %s8 = inlined_call_operand.vmem [shape: f32[16,32], index: 8, kind: input, shape index: {}]
  %s9 = inlined_call_operand.vmem [shape: f32[16,1], index: 9, kind: input, shape index: {}]
  %s10 = inlined_call_operand.vmem [shape: f32[1,16], index: 10, kind: input, shape index: {}]
  %s11 = inlined_call_operand.<no memory space> [shape: f32[1,1], index: 11, kind: input, shape index: {}]
  %s12 = inlined_call_operand.<no memory space> [shape: f32[1], index: 12, kind: input, shape index: {}]
  %s13 = inlined_call_operand.hbm [shape: f32[1,1,8], index: 13, kind: output, shape index: {}]
  %s14 = sld [smem:[#allocation0]]
  $region62: #{tpu_custom_call.1} parent=0
    _
  %s16 = ssub.s32 1, %s14
  %s17 = scalar_select 0, %s16, %s14
  %v18 = vstv %s11
  %19 = vst [vmem:[#allocation2] sm:$0x1] %v18
  %20 = sst [smem:[#allocation3]] %s12
  $region1: #{tpu_custom_call.1} parent=0
    #allocation4 [shape = 'u8[512]{0}', space=vmem, size = 0x400, scoped, tag = 'output window, operand 0, single buffered']
    #allocation5 [shape = 's32[1]{0}', space=sflag, size = 0x4, scoped, tag = 'scoped memory for tpu_custom_call.1']
    %21 = vsyncpa [#allocation5], 0
    // Predicated region
    $region2: #{tpu_custom_call.1} parent=1 // pred_check
      _
    $region3: #{tpu_custom_call.1} parent=1 // pred_check_branch
      %23 = sbr.rel (0) target = $region5
    $region4: #{tpu_custom_call.1} parent=1 // pred_region
      _
    $region5: #{tpu_custom_call.1} parent=1 // pred_fallthru
      _
    // Predicated region
    $region6: #{tpu_custom_call.1} parent=1 // pred_check
      _
    $region7: #{tpu_custom_call.1} parent=1 // pred_check_branch
      %25 = sbr.rel (0) target = $region9
    $region8: #{tpu_custom_call.1} parent=1 // pred_region
      _
    $region9: #{tpu_custom_call.1} parent=1 // pred_fallthru
      _
    // Predicated region
    $region10: #{tpu_custom_call.1} parent=1 // pred_check
      _
    $region11: #{tpu_custom_call.1} parent=1 // pred_check_branch
      %27 = sbr.rel (0) target = $region13
    $region12: #{tpu_custom_call.1} parent=1 // pred_region
      _
    $region13: #{tpu_custom_call.1} parent=1 // pred_fallthru
      _
    // Predicated region
    $region14: #{tpu_custom_call.1} parent=1 // pred_check
      _
    $region15: #{tpu_custom_call.1} parent=1 // pred_check_branch
      %29 = sbr.rel (0) target = $region17
    $region16: #{tpu_custom_call.1} parent=1 // pred_region
      _
    $region17: #{tpu_custom_call.1} parent=1 // pred_fallthru
      _
    // Predicated region
    $region18: #{tpu_custom_call.1} parent=1 // pred_check
      _
    $region19: #{tpu_custom_call.1} parent=1 // pred_check_branch
      %31 = sbr.rel (0) target = $region21
    $region20: #{tpu_custom_call.1} parent=1 // pred_region
      _
    $region21: #{tpu_custom_call.1} parent=1 // pred_fallthru
      _
    // Predicated region
    $region22: #{tpu_custom_call.1} parent=1 // pred_check
      _
    $region23: #{tpu_custom_call.1} parent=1 // pred_check_branch
      %33 = sbr.rel (0) target = $region25
    $region24: #{tpu_custom_call.1} parent=1 // pred_region
      _
    $region25: #{tpu_custom_call.1} parent=1 // pred_fallthru
      _
    // Predicated region
    $region26: #{tpu_custom_call.1} parent=1 // pred_check
      _
    $region27: #{tpu_custom_call.1} parent=1 // pred_check_branch
      %35 = sbr.rel (0) target = $region29
    $region28: #{tpu_custom_call.1} parent=1 // pred_region
      _
    $region29: #{tpu_custom_call.1} parent=1 // pred_fallthru
      _
    // Predicated region
    $region30: #{tpu_custom_call.1} parent=1 // pred_check
      _
    $region31: #{tpu_custom_call.1} parent=1 // pred_check_branch
      %37 = sbr.rel (0) target = $region33
    $region32: #{tpu_custom_call.1} parent=1 // pred_region
      _
    $region33: #{tpu_custom_call.1} parent=1 // pred_fallthru
      _
    // Predicated region
    $region34: #{tpu_custom_call.1} parent=1 // pred_check
      _
    $region35: #{tpu_custom_call.1} parent=1 // pred_check_branch
      %39 = sbr.rel (0) target = $region37
    $region36: #{tpu_custom_call.1} parent=1 // pred_region
      _
    $region37: #{tpu_custom_call.1} parent=1 // pred_fallthru
      _
    // Predicated region
    $region38: #{tpu_custom_call.1} parent=1 // pred_check
      _
    $region39: #{tpu_custom_call.1} parent=1 // pred_check_branch
      %41 = sbr.rel (0) target = $region41
    $region40: #{tpu_custom_call.1} parent=1 // pred_region
      _
    $region41: #{tpu_custom_call.1} parent=1 // pred_fallthru
      _
    // Predicated region
    $region42: #{tpu_custom_call.1} parent=1 // pred_check
      _
    $region43: #{tpu_custom_call.1} parent=1 // pred_check_branch
      %43 = sbr.rel (0) target = $region45
    $region44: #{tpu_custom_call.1} parent=1 // pred_region
      _
    $region45: #{tpu_custom_call.1} parent=1 // pred_fallthru
      _
    // Predicated region
    $region46: #{tpu_custom_call.1} parent=1 // pred_check
      _
    $region47: #{tpu_custom_call.1} parent=1 // pred_check_branch
      %45 = sbr.rel (0) target = $region49
    $region48: #{tpu_custom_call.1} parent=1 // pred_region
      _
    $region49: #{tpu_custom_call.1} parent=1 // pred_fallthru
      _
    // Predicated region
    $region50: #{tpu_custom_call.1} parent=1 // pred_check
      _
    $region51: #{tpu_custom_call.1} parent=1 // pred_check_branch
      %47 = sbr.rel (0) target = $region53
    $region52: #{tpu_custom_call.1} parent=1 // pred_region
      _
    $region53: #{tpu_custom_call.1} parent=1 // pred_fallthru
      _
    %v48 = vld [vmem:[%s0] sm:$0xff]
    %v49 = vld [vmem:[%s0 + $0x8] sm:$0xff]
    %v50 = vld [vmem:[%s0 + $0x10] sm:$0xff]
    %v51 = vld [vmem:[%s0 + $0x18] sm:$0xff]
    %v52 = vld [vmem:[%s0 + $0x20] sm:$0xff]
    %v53 = vld [vmem:[%s0 + $0x28] sm:$0xff]
    %v54 = vld [vmem:[%s0 + $0x30] sm:$0xff]
    %v55 = vld [vmem:[%s0 + $0x38] sm:$0xff]
    %v56 = vld [vmem:[%s0 + $0x40] sm:$0xff]
    %v57 = vld [vmem:[%s0 + $0x48] sm:$0xff]
    %v58 = vld [vmem:[%s0 + $0x50] sm:$0xff]
    %v59 = vld [vmem:[%s0 + $0x58] sm:$0xff]
    %v60 = vld [vmem:[%s0 + $0x60] sm:$0xff]
    %v61 = vld [vmem:[%s0 + $0x68] sm:$0xff]
    %v62 = vld [vmem:[%s0 + $0x70] sm:$0xff]
    %v63 = vld [vmem:[%s0 + $0x78] sm:$0xff]
    %v64 = vld [vmem:[%s0 + $0x80] sm:$0xff]
    %v65 = vld [vmem:[%s0 + $0x88] sm:$0xff]
    %v66 = vld [vmem:[%s0 + $0x90] sm:$0xff]
    %v67 = vld [vmem:[%s0 + $0x98] sm:$0xff]
    %v68 = vld [vmem:[%s0 + $0xa0] sm:$0xff]
    %v69 = vld [vmem:[%s0 + $0xa8] sm:$0xff]
    %v70 = vld [vmem:[%s0 + $0xb0] sm:$0xff]
    %v71 = vld [vmem:[%s0 + $0xb8] sm:$0xff]
    %v72 = vld [vmem:[%s1] sm:$0x7]
    %vm73 = vcmask 23552
    %v75 = vsel %vm73, %v48, 0
    %v78 = vsel %vm73, %v49, 0
    %v81 = vsel %vm73, %v50, 0
    %v84 = vsel %vm73, %v51, 0
    %v87 = vsel %vm73, %v52, 0
    %v90 = vsel %vm73, %v53, 0
    %v93 = vsel %vm73, %v54, 0
    %v96 = vsel %vm73, %v55, 0
    %v99 = vsel %vm73, %v56, 0
    %v102 = vsel %vm73, %v57, 0
    %v105 = vsel %vm73, %v58, 0
    %v108 = vsel %vm73, %v59, 0
    %v111 = vsel %vm73, %v60, 0
    %v114 = vsel %vm73, %v61, 0
    %v117 = vsel %vm73, %v62, 0
    %v120 = vsel %vm73, %v63, 0
    %v123 = vsel %vm73, %v64, 0
    %v126 = vsel %vm73, %v65, 0
    %v129 = vsel %vm73, %v66, 0
    %v132 = vsel %vm73, %v67, 0
    %v135 = vsel %vm73, %v68, 0
    %v138 = vsel %vm73, %v69, 0
    %v141 = vsel %vm73, %v70, 0
    %v144 = vsel %vm73, %v71, 0
    %vm146 = vcmask 1042432
    %v148 = vsel %vm146, %v72, 0
    %150 = vmatpush.msra.mxu0 0.0
    %151 = vmatpush.msra.mxu0 0.0
    %152 = vmatpush.msra.mxu0 0.0
    %153 = vmatpush.msra.mxu0 0.0
    %154 = vmatpush.msra.mxu0 0.0
    %155 = vmatpush.msra.mxu0 0.0
    %156 = vmatpush.msra.mxu0 0.0
    %157 = vmatpush.msra.mxu0 0.0
    %158 = vmatpush.msra.mxu0 0.0
    %159 = vmatpush.msra.mxu0 0.0
    %160 = vmatpush.msra.mxu0 0.0
    %161 = vmatpush.msra.mxu0 0.0
    %162 = vmatpush.msra.mxu0 0.0
    %163 = vmatpush.msra.mxu0 0.0
    %164 = vmatpush.msra.mxu0 0.0
    %165 = vmatpush.msra.mxu0 %v148
    %166 = vmatmul.f32.gmra.mxu0 %v75
    %v167 = vpop.f32.mrf.mxu0
    %v168 = vadd.f32 0.0, %v167
    %169 = vmatmul.f32.gmra.mxu0 %v78
    %v170 = vpop.f32.mrf.mxu0
    %v171 = vadd.f32 0.0, %v170
    %172 = vmatmul.f32.gmra.mxu0 %v81
    %v173 = vpop.f32.mrf.mxu0
    %v174 = vadd.f32 0.0, %v173
    %175 = vmatmul.f32.gmra.mxu0 %v84
    %v176 = vpop.f32.mrf.mxu0
    %v177 = vadd.f32 0.0, %v176
    %178 = vmatmul.f32.gmra.mxu0 %v87
    %v179 = vpop.f32.mrf.mxu0
    %v180 = vadd.f32 0.0, %v179
    %181 = vmatmul.f32.gmra.mxu0 %v90
    %v182 = vpop.f32.mrf.mxu0
    %v183 = vadd.f32 0.0, %v182
    %184 = vmatmul.f32.gmra.mxu0 %v93
    %v185 = vpop.f32.mrf.mxu0
    %v186 = vadd.f32 0.0, %v185
    %187 = vmatmul.f32.gmra.mxu0 %v96
    %v188 = vpop.f32.mrf.mxu0
    %v189 = vadd.f32 0.0, %v188
    %190 = vmatmul.f32.gmra.mxu0 %v99
    %v191 = vpop.f32.mrf.mxu0
    %v192 = vadd.f32 0.0, %v191
    %193 = vmatmul.f32.gmra.mxu0 %v102
    %v194 = vpop.f32.mrf.mxu0
    %v195 = vadd.f32 0.0, %v194
    %196 = vmatmul.f32.gmra.mxu0 %v105
    %v197 = vpop.f32.mrf.mxu0
    %v198 = vadd.f32 0.0, %v197
    %199 = vmatmul.f32.gmra.mxu0 %v108
    %v200 = vpop.f32.mrf.mxu0
    %v201 = vadd.f32 0.0, %v200
    %202 = vmatmul.f32.gmra.mxu0 %v111
    %v203 = vpop.f32.mrf.mxu0
    %v204 = vadd.f32 0.0, %v203
    %205 = vmatmul.f32.gmra.mxu0 %v114
    %v206 = vpop.f32.mrf.mxu0
    %v207 = vadd.f32 0.0, %v206
    %208 = vmatmul.f32.gmra.mxu0 %v117
    %v209 = vpop.f32.mrf.mxu0
    %v210 = vadd.f32 0.0, %v209
    %211 = vmatmul.f32.gmra.mxu0 %v120
    %v212 = vpop.f32.mrf.mxu0
    %v213 = vadd.f32 0.0, %v212
    %214 = vmatmul.f32.gmra.mxu0 %v123
    %v215 = vpop.f32.mrf.mxu0
    %v216 = vadd.f32 0.0, %v215
    %217 = vmatmul.f32.gmra.mxu0 %v126
    %v218 = vpop.f32.mrf.mxu0
    %v219 = vadd.f32 0.0, %v218
    %220 = vmatmul.f32.gmra.mxu0 %v129
    %v221 = vpop.f32.mrf.mxu0
    %v222 = vadd.f32 0.0, %v221
    %223 = vmatmul.f32.gmra.mxu0 %v132
    %v224 = vpop.f32.mrf.mxu0
    %v225 = vadd.f32 0.0, %v224
    %226 = vmatmul.f32.gmra.mxu0 %v135
    %v227 = vpop.f32.mrf.mxu0
    %v228 = vadd.f32 0.0, %v227
    %229 = vmatmul.f32.gmra.mxu0 %v138
    %v230 = vpop.f32.mrf.mxu0
    %v231 = vadd.f32 0.0, %v230
    %232 = vmatmul.f32.gmra.mxu0 %v141
    %v233 = vpop.f32.mrf.mxu0
    %v234 = vadd.f32 0.0, %v233
    %235 = vmatmul.f32.gmra.mxu0 %v144
    %v236 = vpop.f32.mrf.mxu0
    %v237 = vadd.f32 0.0, %v236
    %238 = vdwg.mxu0
    %vm263 = vcmask 1046528
    %v264 = vrot.slane %v168, 1
    %v265 = vrot.slane %v171, 1
    %v266 = vsel %vm263, %v264, %v265
    %v267 = vrot.slane %v174, 1
    %v268 = vsel %vm263, %v265, %v267
    %v269 = vrot.slane %v177, 1
    %v270 = vrot.slane %v180, 1
    %v271 = vsel %vm263, %v269, %v270
    %v272 = vrot.slane %v183, 1
    %v273 = vsel %vm263, %v270, %v272
    %v274 = vrot.slane %v186, 1
    %v275 = vrot.slane %v189, 1
    %v276 = vsel %vm263, %v274, %v275
    %v277 = vrot.slane %v192, 1
    %v278 = vsel %vm263, %v275, %v277
    %v279 = vrot.slane %v195, 1
    %v280 = vrot.slane %v198, 1
    %v281 = vsel %vm263, %v279, %v280
    %v282 = vrot.slane %v201, 1
    %v283 = vsel %vm263, %v280, %v282
    %v284 = vrot.slane %v204, 1
    %v285 = vrot.slane %v207, 1
    %v286 = vsel %vm263, %v284, %v285
    %v287 = vrot.slane %v210, 1
    %v288 = vsel %vm263, %v285, %v287
    %v289 = vrot.slane %v213, 1
    %v290 = vrot.slane %v216, 1
    %v291 = vsel %vm263, %v289, %v290
    %v292 = vrot.slane %v219, 1
    %v293 = vsel %vm263, %v290, %v292
    %v294 = vrot.slane %v222, 1
    %v295 = vrot.slane %v225, 1
    %v296 = vsel %vm263, %v294, %v295
    %v297 = vrot.slane %v228, 1
    %v298 = vsel %vm263, %v295, %v297
    %v299 = vrot.slane %v231, 1
    %v300 = vrot.slane %v234, 1
    %v301 = vsel %vm263, %v299, %v300
    %v302 = vrot.slane %v237, 1
    %v303 = vsel %vm263, %v300, %v302
    %304 = vrot.lane.b32.xlu0 %v266, 112
    %v305 = vpop.permute.xlu0 %304
    %306 = vrot.lane.b32.xlu0 %v268, 112
    %v307 = vpop.permute.xlu0 %306
    %308 = vrot.lane.b32.xlu0 %v271, 112
    %v309 = vpop.permute.xlu0 %308
    %310 = vrot.lane.b32.xlu0 %v273, 112
    %v311 = vpop.permute.xlu0 %310
    %312 = vrot.lane.b32.xlu0 %v276, 112
    %v313 = vpop.permute.xlu0 %312
    %314 = vrot.lane.b32.xlu0 %v278, 112
    %v315 = vpop.permute.xlu0 %314
    %316 = vrot.lane.b32.xlu0 %v281, 112
    %v317 = vpop.permute.xlu0 %316
    %318 = vrot.lane.b32.xlu0 %v283, 112
    %v319 = vpop.permute.xlu0 %318
    %320 = vrot.lane.b32.xlu0 %v286, 112
    %v321 = vpop.permute.xlu0 %320
    %322 = vrot.lane.b32.xlu0 %v288, 112
    %v323 = vpop.permute.xlu0 %322
    %324 = vrot.lane.b32.xlu0 %v291, 112
    %v325 = vpop.permute.xlu0 %324
    %326 = vrot.lane.b32.xlu0 %v293, 112
    %v327 = vpop.permute.xlu0 %326
    %328 = vrot.lane.b32.xlu0 %v296, 112
    %v329 = vpop.permute.xlu0 %328
    %330 = vrot.lane.b32.xlu0 %v298, 112
    %v331 = vpop.permute.xlu0 %330
    %332 = vrot.lane.b32.xlu0 %v301, 112
    %v333 = vpop.permute.xlu0 %332
    %334 = vrot.lane.b32.xlu0 %v303, 112
    %v335 = vpop.permute.xlu0 %334
    %v352 = vadd.f32 %v168, %v305
    %v353 = vadd.f32 %v171, %v307
    %v354 = vadd.f32 %v177, %v309
    %v355 = vadd.f32 %v180, %v311
    %v356 = vadd.f32 %v186, %v313
    %v357 = vadd.f32 %v189, %v315
    %v358 = vadd.f32 %v195, %v317
    %v359 = vadd.f32 %v198, %v319
    %v360 = vadd.f32 %v204, %v321
    %v361 = vadd.f32 %v207, %v323
    %v362 = vadd.f32 %v213, %v325
    %v363 = vadd.f32 %v216, %v327
    %v364 = vadd.f32 %v222, %v329
    %v365 = vadd.f32 %v225, %v331
    %v366 = vadd.f32 %v231, %v333
    %v367 = vadd.f32 %v234, %v335
    %vm368 = vcmask 1045504
    %v369 = vrot.slane %v168, 2
    %v370 = vrot.slane %v171, 2
    %v371 = vsel %vm368, %v369, %v370
    %v372 = vrot.slane %v174, 2
    %v373 = vsel %vm368, %v370, %v372
    %v374 = vrot.slane %v177, 2
    %v375 = vrot.slane %v180, 2
    %v376 = vsel %vm368, %v374, %v375
    %v377 = vrot.slane %v183, 2
    %v378 = vsel %vm368, %v375, %v377
    %v379 = vrot.slane %v186, 2
    %v380 = vrot.slane %v189, 2
    %v381 = vsel %vm368, %v379, %v380
    %v382 = vrot.slane %v192, 2
    %v383 = vsel %vm368, %v380, %v382
    %v384 = vrot.slane %v195, 2
    %v385 = vrot.slane %v198, 2
    %v386 = vsel %vm368, %v384, %v385
    %v387 = vrot.slane %v201, 2
    %v388 = vsel %vm368, %v385, %v387
    %v389 = vrot.slane %v204, 2
    %v390 = vrot.slane %v207, 2
    %v391 = vsel %vm368, %v389, %v390
    %v392 = vrot.slane %v210, 2
    %v393 = vsel %vm368, %v390, %v392
    %v394 = vrot.slane %v213, 2
    %v395 = vrot.slane %v216, 2
    %v396 = vsel %vm368, %v394, %v395
    %v397 = vrot.slane %v219, 2
    %v398 = vsel %vm368, %v395, %v397
    %v399 = vrot.slane %v222, 2
    %v400 = vrot.slane %v225, 2
    %v401 = vsel %vm368, %v399, %v400
    %v402 = vrot.slane %v228, 2
    %v403 = vsel %vm368, %v400, %v402
    %v404 = vrot.slane %v231, 2
    %v405 = vrot.slane %v234, 2
    %v406 = vsel %vm368, %v404, %v405
    %v407 = vrot.slane %v237, 2
    %v408 = vsel %vm368, %v405, %v407
    %409 = vrot.lane.b32.xlu0 %v371, 96
    %v410 = vpop.permute.xlu0 %409
    %411 = vrot.lane.b32.xlu0 %v373, 96
    %v412 = vpop.permute.xlu0 %411
    %413 = vrot.lane.b32.xlu0 %v376, 96
    %v414 = vpop.permute.xlu0 %413
    %415 = vrot.lane.b32.xlu0 %v378, 96
    %v416 = vpop.permute.xlu0 %415
    %417 = vrot.lane.b32.xlu0 %v381, 96
    %v418 = vpop.permute.xlu0 %417
    %419 = vrot.lane.b32.xlu0 %v383, 96
    %v420 = vpop.permute.xlu0 %419
    %421 = vrot.lane.b32.xlu0 %v386, 96
    %v422 = vpop.permute.xlu0 %421
    %423 = vrot.lane.b32.xlu0 %v388, 96
    %v424 = vpop.permute.xlu0 %423
    %425 = vrot.lane.b32.xlu0 %v391, 96
    %v426 = vpop.permute.xlu0 %425
    %427 = vrot.lane.b32.xlu0 %v393, 96
    %v428 = vpop.permute.xlu0 %427
    %429 = vrot.lane.b32.xlu0 %v396, 96
    %v430 = vpop.permute.xlu0 %429
    %431 = vrot.lane.b32.xlu0 %v398, 96
    %v432 = vpop.permute.xlu0 %431
    %433 = vrot.lane.b32.xlu0 %v401, 96
    %v434 = vpop.permute.xlu0 %433
    %435 = vrot.lane.b32.xlu0 %v403, 96
    %v436 = vpop.permute.xlu0 %435
    %437 = vrot.lane.b32.xlu0 %v406, 96
    %v438 = vpop.permute.xlu0 %437
    %439 = vrot.lane.b32.xlu0 %v408, 96
    %v440 = vpop.permute.xlu0 %439
    %v457 = vadd.f32 %v352, %v410
    %v458 = vadd.f32 %v353, %v412
    %v459 = vadd.f32 %v354, %v414
    %v460 = vadd.f32 %v355, %v416
    %v461 = vadd.f32 %v356, %v418
    %v462 = vadd.f32 %v357, %v420
    %v463 = vadd.f32 %v358, %v422
    %v464 = vadd.f32 %v359, %v424
    %v465 = vadd.f32 %v360, %v426
    %v466 = vadd.f32 %v361, %v428
    %v467 = vadd.f32 %v362, %v430
    %v468 = vadd.f32 %v363, %v432
    %v469 = vadd.f32 %v364, %v434
    %v470 = vadd.f32 %v365, %v436
    %v471 = vadd.f32 %v366, %v438
    %v472 = vadd.f32 %v367, %v440
    %vm473 = vcmask 1044480
    %v474 = vrot.slane %v168, 3
    %v475 = vrot.slane %v171, 3
    %v476 = vsel %vm473, %v474, %v475
    %v477 = vrot.slane %v174, 3
    %v478 = vsel %vm473, %v475, %v477
    %v479 = vrot.slane %v177, 3
    %v480 = vrot.slane %v180, 3
    %v481 = vsel %vm473, %v479, %v480
    %v482 = vrot.slane %v183, 3
    %v483 = vsel %vm473, %v480, %v482
    %v484 = vrot.slane %v186, 3
    %v485 = vrot.slane %v189, 3
    %v486 = vsel %vm473, %v484, %v485
    %v487 = vrot.slane %v192, 3
    %v488 = vsel %vm473, %v485, %v487
    %v489 = vrot.slane %v195, 3
    %v490 = vrot.slane %v198, 3
    %v491 = vsel %vm473, %v489, %v490
    %v492 = vrot.slane %v201, 3
    %v493 = vsel %vm473, %v490, %v492
    %v494 = vrot.slane %v204, 3
    %v495 = vrot.slane %v207, 3
    %v496 = vsel %vm473, %v494, %v495
    %v497 = vrot.slane %v210, 3
    %v498 = vsel %vm473, %v495, %v497
    %v499 = vrot.slane %v213, 3
    %v500 = vrot.slane %v216, 3
    %v501 = vsel %vm473, %v499, %v500
    %v502 = vrot.slane %v219, 3
    %v503 = vsel %vm473, %v500, %v502
    %v504 = vrot.slane %v222, 3
    %v505 = vrot.slane %v225, 3
    %v506 = vsel %vm473, %v504, %v505
    %v507 = vrot.slane %v228, 3
    %v508 = vsel %vm473, %v505, %v507
    %v509 = vrot.slane %v231, 3
    %v510 = vrot.slane %v234, 3
    %v511 = vsel %vm473, %v509, %v510
    %v512 = vrot.slane %v237, 3
    %v513 = vsel %vm473, %v510, %v512
    %514 = vrot.lane.b32.xlu0 %v476, 80
    %v515 = vpop.permute.xlu0 %514
    %516 = vrot.lane.b32.xlu0 %v478, 80
    %v517 = vpop.permute.xlu0 %516
    %518 = vrot.lane.b32.xlu0 %v481, 80
    %v519 = vpop.permute.xlu0 %518
    %520 = vrot.lane.b32.xlu0 %v483, 80
    %v521 = vpop.permute.xlu0 %520
    %522 = vrot.lane.b32.xlu0 %v486, 80
    %v523 = vpop.permute.xlu0 %522
    %524 = vrot.lane.b32.xlu0 %v488, 80
    %v525 = vpop.permute.xlu0 %524
    %526 = vrot.lane.b32.xlu0 %v491, 80
    %v527 = vpop.permute.xlu0 %526
    %528 = vrot.lane.b32.xlu0 %v493, 80
    %v529 = vpop.permute.xlu0 %528
    %530 = vrot.lane.b32.xlu0 %v496, 80
    %v531 = vpop.permute.xlu0 %530
    %532 = vrot.lane.b32.xlu0 %v498, 80
    %v533 = vpop.permute.xlu0 %532
    %534 = vrot.lane.b32.xlu0 %v501, 80
    %v535 = vpop.permute.xlu0 %534
    %536 = vrot.lane.b32.xlu0 %v503, 80
    %v537 = vpop.permute.xlu0 %536
    %538 = vrot.lane.b32.xlu0 %v506, 80
    %v539 = vpop.permute.xlu0 %538
    %540 = vrot.lane.b32.xlu0 %v508, 80
    %v541 = vpop.permute.xlu0 %540
    %542 = vrot.lane.b32.xlu0 %v511, 80
    %v543 = vpop.permute.xlu0 %542
    %544 = vrot.lane.b32.xlu0 %v513, 80
    %v545 = vpop.permute.xlu0 %544
    %v562 = vadd.f32 %v457, %v515
    %v563 = vadd.f32 %v458, %v517
    %v564 = vadd.f32 %v459, %v519
    %v565 = vadd.f32 %v460, %v521
    %v566 = vadd.f32 %v461, %v523
    %v567 = vadd.f32 %v462, %v525
    %v568 = vadd.f32 %v463, %v527
    %v569 = vadd.f32 %v464, %v529
    %v570 = vadd.f32 %v465, %v531
    %v571 = vadd.f32 %v466, %v533
    %v572 = vadd.f32 %v467, %v535
    %v573 = vadd.f32 %v468, %v537
    %v574 = vadd.f32 %v469, %v539
    %v575 = vadd.f32 %v470, %v541
    %v576 = vadd.f32 %v471, %v543
    %v577 = vadd.f32 %v472, %v545
    %vm578 = vcmask 1043456
    %v579 = vrot.slane %v168, 4
    %v580 = vrot.slane %v171, 4
    %v581 = vsel %vm578, %v579, %v580
    %v582 = vrot.slane %v174, 4
    %v583 = vsel %vm578, %v580, %v582
    %v584 = vrot.slane %v177, 4
    %v585 = vrot.slane %v180, 4
    %v586 = vsel %vm578, %v584, %v585
    %v587 = vrot.slane %v183, 4
    %v588 = vsel %vm578, %v585, %v587
    %v589 = vrot.slane %v186, 4
    %v590 = vrot.slane %v189, 4
    %v591 = vsel %vm578, %v589, %v590
    %v592 = vrot.slane %v192, 4
    %v593 = vsel %vm578, %v590, %v592
    %v594 = vrot.slane %v195, 4
    %v595 = vrot.slane %v198, 4
    %v596 = vsel %vm578, %v594, %v595
    %v597 = vrot.slane %v201, 4
    %v598 = vsel %vm578, %v595, %v597
    %v599 = vrot.slane %v204, 4
    %v600 = vrot.slane %v207, 4
    %v601 = vsel %vm578, %v599, %v600
    %v602 = vrot.slane %v210, 4
    %v603 = vsel %vm578, %v600, %v602
    %v604 = vrot.slane %v213, 4
    %v605 = vrot.slane %v216, 4
    %v606 = vsel %vm578, %v604, %v605
    %v607 = vrot.slane %v219, 4
    %v608 = vsel %vm578, %v605, %v607
    %v609 = vrot.slane %v222, 4
    %v610 = vrot.slane %v225, 4
    %v611 = vsel %vm578, %v609, %v610
    %v612 = vrot.slane %v228, 4
    %v613 = vsel %vm578, %v610, %v612
    %v614 = vrot.slane %v231, 4
    %v615 = vrot.slane %v234, 4
    %v616 = vsel %vm578, %v614, %v615
    %v617 = vrot.slane %v237, 4
    %v618 = vsel %vm578, %v615, %v617
    %619 = vrot.lane.b32.xlu0 %v581, 64
    %v620 = vpop.permute.xlu0 %619
    %621 = vrot.lane.b32.xlu0 %v583, 64
    %v622 = vpop.permute.xlu0 %621
    %623 = vrot.lane.b32.xlu0 %v586, 64
    %v624 = vpop.permute.xlu0 %623
    %625 = vrot.lane.b32.xlu0 %v588, 64
    %v626 = vpop.permute.xlu0 %625
    %627 = vrot.lane.b32.xlu0 %v591, 64
    %v628 = vpop.permute.xlu0 %627
    %629 = vrot.lane.b32.xlu0 %v593, 64
    %v630 = vpop.permute.xlu0 %629
    %631 = vrot.lane.b32.xlu0 %v596, 64
    %v632 = vpop.permute.xlu0 %631
    %633 = vrot.lane.b32.xlu0 %v598, 64
    %v634 = vpop.permute.xlu0 %633
    %635 = vrot.lane.b32.xlu0 %v601, 64
    %v636 = vpop.permute.xlu0 %635
    %637 = vrot.lane.b32.xlu0 %v603, 64
    %v638 = vpop.permute.xlu0 %637
    %639 = vrot.lane.b32.xlu0 %v606, 64
    %v640 = vpop.permute.xlu0 %639
    %641 = vrot.lane.b32.xlu0 %v608, 64
    %v642 = vpop.permute.xlu0 %641
    %643 = vrot.lane.b32.xlu0 %v611, 64
    %v644 = vpop.permute.xlu0 %643
    %645 = vrot.lane.b32.xlu0 %v613, 64
    %v646 = vpop.permute.xlu0 %645
    %647 = vrot.lane.b32.xlu0 %v616, 64
    %v648 = vpop.permute.xlu0 %647
    %649 = vrot.lane.b32.xlu0 %v618, 64
    %v650 = vpop.permute.xlu0 %649
    %v667 = vadd.f32 %v562, %v620
    %v668 = vadd.f32 %v563, %v622
    %v669 = vadd.f32 %v564, %v624
    %v670 = vadd.f32 %v565, %v626
    %v671 = vadd.f32 %v566, %v628
    %v672 = vadd.f32 %v567, %v630
    %v673 = vadd.f32 %v568, %v632
    %v674 = vadd.f32 %v569, %v634
    %v675 = vadd.f32 %v570, %v636
    %v676 = vadd.f32 %v571, %v638
    %v677 = vadd.f32 %v572, %v640
    %v678 = vadd.f32 %v573, %v642
    %v679 = vadd.f32 %v574, %v644
    %v680 = vadd.f32 %v575, %v646
    %v681 = vadd.f32 %v576, %v648
    %v682 = vadd.f32 %v577, %v650
    %v683 = vld [vmem:[%s2] sm:$0x1]
    %v685 = vperm.slane %v683, 0
    %v687 = vadd.f32 %v667, %v685
    %v688 = vadd.f32 %v668, %v685
    %v689 = vadd.f32 %v669, %v685
    %v690 = vadd.f32 %v670, %v685
    %v691 = vadd.f32 %v671, %v685
    %v692 = vadd.f32 %v672, %v685
    %v693 = vadd.f32 %v673, %v685
    %v694 = vadd.f32 %v674, %v685
    %v695 = vadd.f32 %v675, %v685
    %v696 = vadd.f32 %v676, %v685
    %v697 = vadd.f32 %v677, %v685
    %v698 = vadd.f32 %v678, %v685
    %v699 = vadd.f32 %v679, %v685
    %v700 = vadd.f32 %v680, %v685
    %v701 = vadd.f32 %v681, %v685
    %v702 = vadd.f32 %v682, %v685
    %v703 = vmax.f32 %v687, 0.0
    %v704 = vmax.f32 %v688, 0.0
    %v705 = vmax.f32 %v689, 0.0
    %v706 = vmax.f32 %v690, 0.0
    %v707 = vmax.f32 %v691, 0.0
    %v708 = vmax.f32 %v692, 0.0
    %v709 = vmax.f32 %v693, 0.0
    %v710 = vmax.f32 %v694, 0.0
    %v711 = vmax.f32 %v695, 0.0
    %v712 = vmax.f32 %v696, 0.0
    %v713 = vmax.f32 %v697, 0.0
    %v714 = vmax.f32 %v698, 0.0
    %v715 = vmax.f32 %v699, 0.0
    %v716 = vmax.f32 %v700, 0.0
    %v717 = vmax.f32 %v701, 0.0
    %v718 = vmax.f32 %v702, 0.0
    %vm735 = vcmask 1041408
    %v736 = vrot.slane %v703, 6
    %v737 = vrot.slane %v704, 6
    %v738 = vsel %vm735, %v736, %v737
    %v739 = vrot.slane %v705, 6
    %v740 = vrot.slane %v706, 6
    %v741 = vsel %vm735, %v739, %v740
    %v742 = vrot.slane %v707, 6
    %v743 = vrot.slane %v708, 6
    %v744 = vsel %vm735, %v742, %v743
    %v745 = vrot.slane %v709, 6
    %v746 = vrot.slane %v710, 6
    %v747 = vsel %vm735, %v745, %v746
    %v748 = vrot.slane %v711, 6
    %v749 = vrot.slane %v712, 6
    %v750 = vsel %vm735, %v748, %v749
    %v751 = vrot.slane %v713, 6
    %v752 = vrot.slane %v714, 6
    %v753 = vsel %vm735, %v751, %v752
    %v754 = vrot.slane %v715, 6
    %v755 = vrot.slane %v716, 6
    %v756 = vsel %vm735, %v754, %v755
    %v757 = vrot.slane %v717, 6
    %v758 = vrot.slane %v718, 6
    %v759 = vsel %vm735, %v757, %v758
    %v776 = vsel %vm735, 0.0, %v736
    %v777 = vsel %vm735, 0.0, %v739
    %v778 = vsel %vm735, 0.0, %v742
    %v779 = vsel %vm735, 0.0, %v745
    %v780 = vsel %vm735, 0.0, %v748
    %v781 = vsel %vm735, 0.0, %v751
    %v782 = vsel %vm735, 0.0, %v754
    %v783 = vsel %vm735, 0.0, %v757
    %v784 = vsel %vm735, %v737, 0.0
    %v785 = vsel %vm735, %v740, 0.0
    %v786 = vsel %vm735, %v743, 0.0
    %v787 = vsel %vm735, %v746, 0.0
    %v788 = vsel %vm735, %v749, 0.0
    %v789 = vsel %vm735, %v752, 0.0
    %v790 = vsel %vm735, %v755, 0.0
    %v791 = vsel %vm735, %v758, 0.0
    %v792 = vld [vmem:[%s3] sm:$0xff]
    %v793 = vld [vmem:[%s3 + $0x8] sm:$0xff]
    %v794 = vld [vmem:[%s3 + $0x10] sm:$0xff]
    %v795 = vld [vmem:[%s3 + $0x18] sm:$0xff]
    %vm796 = vcmask 130048
    %v798 = vsel %vm796, %v776, 0
    %v800 = vsel %vm796, %v738, 0
    %v803 = vsel %vm796, %v784, 0
    %v806 = vsel %vm796, %v777, 0
    %v808 = vsel %vm796, %v741, 0
    %v811 = vsel %vm796, %v785, 0
    %v814 = vsel %vm796, %v778, 0
    %v816 = vsel %vm796, %v744, 0
    %v819 = vsel %vm796, %v786, 0
    %v822 = vsel %vm796, %v779, 0
    %v824 = vsel %vm796, %v747, 0
    %v827 = vsel %vm796, %v787, 0
    %v830 = vsel %vm796, %v780, 0
    %v832 = vsel %vm796, %v750, 0
    %v835 = vsel %vm796, %v788, 0
    %v838 = vsel %vm796, %v781, 0
    %v840 = vsel %vm796, %v753, 0
    %v843 = vsel %vm796, %v789, 0
    %v846 = vsel %vm796, %v782, 0
    %v848 = vsel %vm796, %v756, 0
    %v851 = vsel %vm796, %v790, 0
    %v854 = vsel %vm796, %v783, 0
    %v856 = vsel %vm796, %v759, 0
    %v859 = vsel %vm796, %v791, 0
    %861 = vmatpush.msra.mxu0 0.0
    %862 = vmatpush.msra.mxu0 0.0
    %863 = vmatpush.msra.mxu0 0.0
    %864 = vmatpush.msra.mxu0 0.0
    %865 = vmatpush.msra.mxu0 0.0
    %866 = vmatpush.msra.mxu0 0.0
    %867 = vmatpush.msra.mxu0 0.0
    %868 = vmatpush.msra.mxu0 0.0
    %869 = vmatpush.msra.mxu0 0.0
    %870 = vmatpush.msra.mxu0 0.0
    %871 = vmatpush.msra.mxu0 0.0
    %872 = vmatpush.msra.mxu0 0.0
    %873 = vmatpush.msra.mxu0 0.0
    %874 = vmatpush.msra.mxu0 0.0
    %875 = vmatpush.msra.mxu0 %v794
    %876 = vmatpush.msra.mxu0 %v792
    %877 = vmatmul.f32.gmra.mxu0 %v798
    %v878 = vpop.f32.mrf.mxu0
    %v879 = vadd.f32 0.0, %v878
    %880 = vmatmul.f32.gmra.mxu0 %v800
    %v881 = vpop.f32.mrf.mxu0
    %v882 = vadd.f32 0.0, %v881
    %883 = vmatmul.f32.gmra.mxu0 %v803
    %v884 = vpop.f32.mrf.mxu0
    %v885 = vadd.f32 0.0, %v884
    %886 = vmatmul.f32.gmra.mxu0 %v806
    %v887 = vpop.f32.mrf.mxu0
    %v888 = vadd.f32 0.0, %v887
    %889 = vmatmul.f32.gmra.mxu0 %v808
    %v890 = vpop.f32.mrf.mxu0
    %v891 = vadd.f32 0.0, %v890
    %892 = vmatmul.f32.gmra.mxu0 %v811
    %v893 = vpop.f32.mrf.mxu0
    %v894 = vadd.f32 0.0, %v893
    %895 = vmatmul.f32.gmra.mxu0 %v814
    %v896 = vpop.f32.mrf.mxu0
    %v897 = vadd.f32 0.0, %v896
    %898 = vmatmul.f32.gmra.mxu0 %v816
    %v899 = vpop.f32.mrf.mxu0
    %v900 = vadd.f32 0.0, %v899
    %901 = vmatmul.f32.gmra.mxu0 %v819
    %v902 = vpop.f32.mrf.mxu0
    %v903 = vadd.f32 0.0, %v902
    %904 = vmatmul.f32.gmra.mxu0 %v822
    %v905 = vpop.f32.mrf.mxu0
    %v906 = vadd.f32 0.0, %v905
    %907 = vmatmul.f32.gmra.mxu0 %v824
    %v908 = vpop.f32.mrf.mxu0
    %v909 = vadd.f32 0.0, %v908
    %910 = vmatmul.f32.gmra.mxu0 %v827
    %v911 = vpop.f32.mrf.mxu0
    %v912 = vadd.f32 0.0, %v911
    %913 = vmatmul.f32.gmra.mxu0 %v830
    %v914 = vpop.f32.mrf.mxu0
    %v915 = vadd.f32 0.0, %v914
    %916 = vmatmul.f32.gmra.mxu0 %v832
    %v917 = vpop.f32.mrf.mxu0
    %v918 = vadd.f32 0.0, %v917
    %919 = vmatmul.f32.gmra.mxu0 %v835
    %v920 = vpop.f32.mrf.mxu0
    %v921 = vadd.f32 0.0, %v920
    %922 = vmatmul.f32.gmra.mxu0 %v838
    %v923 = vpop.f32.mrf.mxu0
    %v924 = vadd.f32 0.0, %v923
    %925 = vmatmul.f32.gmra.mxu0 %v840
    %v926 = vpop.f32.mrf.mxu0
    %v927 = vadd.f32 0.0, %v926
    %928 = vmatmul.f32.gmra.mxu0 %v843
    %v929 = vpop.f32.mrf.mxu0
    %v930 = vadd.f32 0.0, %v929
    %931 = vmatmul.f32.gmra.mxu0 %v846
    %v932 = vpop.f32.mrf.mxu0
    %v933 = vadd.f32 0.0, %v932
    %934 = vmatmul.f32.gmra.mxu0 %v848
    %v935 = vpop.f32.mrf.mxu0
    %v936 = vadd.f32 0.0, %v935
    %937 = vmatmul.f32.gmra.mxu0 %v851
    %v938 = vpop.f32.mrf.mxu0
    %v939 = vadd.f32 0.0, %v938
    %940 = vmatmul.f32.gmra.mxu0 %v854
    %v941 = vpop.f32.mrf.mxu0
    %v942 = vadd.f32 0.0, %v941
    %943 = vmatmul.f32.gmra.mxu0 %v856
    %v944 = vpop.f32.mrf.mxu0
    %v945 = vadd.f32 0.0, %v944
    %946 = vmatmul.f32.gmra.mxu0 %v859
    %v947 = vpop.f32.mrf.mxu0
    %v948 = vadd.f32 0.0, %v947
    %949 = vdwg.mxu0
    %950 = vmatpush.msra.mxu0 0.0
    %951 = vmatpush.msra.mxu0 0.0
    %952 = vmatpush.msra.mxu0 0.0
    %953 = vmatpush.msra.mxu0 0.0
    %954 = vmatpush.msra.mxu0 0.0
    %955 = vmatpush.msra.mxu0 0.0
    %956 = vmatpush.msra.mxu0 0.0
    %957 = vmatpush.msra.mxu0 0.0
    %958 = vmatpush.msra.mxu0 0.0
    %959 = vmatpush.msra.mxu0 0.0
    %960 = vmatpush.msra.mxu0 0.0
    %961 = vmatpush.msra.mxu0 0.0
    %962 = vmatpush.msra.mxu0 0.0
    %963 = vmatpush.msra.mxu0 0.0
    %964 = vmatpush.msra.mxu0 %v795
    %965 = vmatpush.msra.mxu0 %v793
    %966 = vmatmul.f32.gmra.mxu0 %v798
    %v967 = vpop.f32.mrf.mxu0
    %v968 = vadd.f32 0.0, %v967
    %969 = vmatmul.f32.gmra.mxu0 %v800
    %v970 = vpop.f32.mrf.mxu0
    %v971 = vadd.f32 0.0, %v970
    %972 = vmatmul.f32.gmra.mxu0 %v803
    %v973 = vpop.f32.mrf.mxu0
    %v974 = vadd.f32 0.0, %v973
    %975 = vmatmul.f32.gmra.mxu0 %v806
    %v976 = vpop.f32.mrf.mxu0
    %v977 = vadd.f32 0.0, %v976
    %978 = vmatmul.f32.gmra.mxu0 %v808
    %v979 = vpop.f32.mrf.mxu0
    %v980 = vadd.f32 0.0, %v979
    %981 = vmatmul.f32.gmra.mxu0 %v811
    %v982 = vpop.f32.mrf.mxu0
    %v983 = vadd.f32 0.0, %v982
    %984 = vmatmul.f32.gmra.mxu0 %v814
    %v985 = vpop.f32.mrf.mxu0
    %v986 = vadd.f32 0.0, %v985
    %987 = vmatmul.f32.gmra.mxu0 %v816
    %v988 = vpop.f32.mrf.mxu0
    %v989 = vadd.f32 0.0, %v988
    %990 = vmatmul.f32.gmra.mxu0 %v819
    %v991 = vpop.f32.mrf.mxu0
    %v992 = vadd.f32 0.0, %v991
    %993 = vmatmul.f32.gmra.mxu0 %v822
    %v994 = vpop.f32.mrf.mxu0
    %v995 = vadd.f32 0.0, %v994
    %996 = vmatmul.f32.gmra.mxu0 %v824
    %v997 = vpop.f32.mrf.mxu0
    %v998 = vadd.f32 0.0, %v997
    %999 = vmatmul.f32.gmra.mxu0 %v827
    %v1000 = vpop.f32.mrf.mxu0
    %v1001 = vadd.f32 0.0, %v1000
    %1002 = vmatmul.f32.gmra.mxu0 %v830
    %v1003 = vpop.f32.mrf.mxu0
    %v1004 = vadd.f32 0.0, %v1003
    %1005 = vmatmul.f32.gmra.mxu0 %v832
    %v1006 = vpop.f32.mrf.mxu0
    %v1007 = vadd.f32 0.0, %v1006
    %1008 = vmatmul.f32.gmra.mxu0 %v835
    %v1009 = vpop.f32.mrf.mxu0
    %v1010 = vadd.f32 0.0, %v1009
    %1011 = vmatmul.f32.gmra.mxu0 %v838
    %v1012 = vpop.f32.mrf.mxu0
    %v1013 = vadd.f32 0.0, %v1012
    %1014 = vmatmul.f32.gmra.mxu0 %v840
    %v1015 = vpop.f32.mrf.mxu0
    %v1016 = vadd.f32 0.0, %v1015
    %1017 = vmatmul.f32.gmra.mxu0 %v843
    %v1018 = vpop.f32.mrf.mxu0
    %v1019 = vadd.f32 0.0, %v1018
    %1020 = vmatmul.f32.gmra.mxu0 %v846
    %v1021 = vpop.f32.mrf.mxu0
    %v1022 = vadd.f32 0.0, %v1021
    %1023 = vmatmul.f32.gmra.mxu0 %v848
    %v1024 = vpop.f32.mrf.mxu0
    %v1025 = vadd.f32 0.0, %v1024
    %1026 = vmatmul.f32.gmra.mxu0 %v851
    %v1027 = vpop.f32.mrf.mxu0
    %v1028 = vadd.f32 0.0, %v1027
    %1029 = vmatmul.f32.gmra.mxu0 %v854
    %v1030 = vpop.f32.mrf.mxu0
    %v1031 = vadd.f32 0.0, %v1030
    %1032 = vmatmul.f32.gmra.mxu0 %v856
    %v1033 = vpop.f32.mrf.mxu0
    %v1034 = vadd.f32 0.0, %v1033
    %1035 = vmatmul.f32.gmra.mxu0 %v859
    %v1036 = vpop.f32.mrf.mxu0
    %v1037 = vadd.f32 0.0, %v1036
    %1038 = vdwg.mxu0
    %v1063 = vrot.slane %v879, 1
    %v1064 = vrot.slane %v882, 1
    %v1065 = vsel %vm263, %v1063, %v1064
    %v1066 = vrot.slane %v885, 1
    %v1067 = vsel %vm263, %v1064, %v1066
    %v1068 = vrot.slane %v888, 1
    %v1069 = vrot.slane %v891, 1
    %v1070 = vsel %vm263, %v1068, %v1069
    %v1071 = vrot.slane %v894, 1
    %v1072 = vsel %vm263, %v1069, %v1071
    %v1073 = vrot.slane %v897, 1
    %v1074 = vrot.slane %v900, 1
    %v1075 = vsel %vm263, %v1073, %v1074
    %v1076 = vrot.slane %v903, 1
    %v1077 = vsel %vm263, %v1074, %v1076
    %v1078 = vrot.slane %v906, 1
    %v1079 = vrot.slane %v909, 1
    %v1080 = vsel %vm263, %v1078, %v1079
    %v1081 = vrot.slane %v912, 1
    %v1082 = vsel %vm263, %v1079, %v1081
    %v1083 = vrot.slane %v915, 1
    %v1084 = vrot.slane %v918, 1
    %v1085 = vsel %vm263, %v1083, %v1084
    %v1086 = vrot.slane %v921, 1
    %v1087 = vsel %vm263, %v1084, %v1086
    %v1088 = vrot.slane %v924, 1
    %v1089 = vrot.slane %v927, 1
    %v1090 = vsel %vm263, %v1088, %v1089
    %v1091 = vrot.slane %v930, 1
    %v1092 = vsel %vm263, %v1089, %v1091
    %v1093 = vrot.slane %v933, 1
    %v1094 = vrot.slane %v936, 1
    %v1095 = vsel %vm263, %v1093, %v1094
    %v1096 = vrot.slane %v939, 1
    %v1097 = vsel %vm263, %v1094, %v1096
    %v1098 = vrot.slane %v942, 1
    %v1099 = vrot.slane %v945, 1
    %v1100 = vsel %vm263, %v1098, %v1099
    %v1101 = vrot.slane %v948, 1
    %v1102 = vsel %vm263, %v1099, %v1101
    %1103 = vrot.lane.b32.xlu0 %v1065, 96
    %v1104 = vpop.permute.xlu0 %1103
    %1105 = vrot.lane.b32.xlu0 %v1067, 96
    %v1106 = vpop.permute.xlu0 %1105
    %1107 = vrot.lane.b32.xlu0 %v1070, 96
    %v1108 = vpop.permute.xlu0 %1107
    %1109 = vrot.lane.b32.xlu0 %v1072, 96
    %v1110 = vpop.permute.xlu0 %1109
    %1111 = vrot.lane.b32.xlu0 %v1075, 96
    %v1112 = vpop.permute.xlu0 %1111
    %1113 = vrot.lane.b32.xlu0 %v1077, 96
    %v1114 = vpop.permute.xlu0 %1113
    %1115 = vrot.lane.b32.xlu0 %v1080, 96
    %v1116 = vpop.permute.xlu0 %1115
    %1117 = vrot.lane.b32.xlu0 %v1082, 96
    %v1118 = vpop.permute.xlu0 %1117
    %1119 = vrot.lane.b32.xlu0 %v1085, 96
    %v1120 = vpop.permute.xlu0 %1119
    %1121 = vrot.lane.b32.xlu0 %v1087, 96
    %v1122 = vpop.permute.xlu0 %1121
    %1123 = vrot.lane.b32.xlu0 %v1090, 96
    %v1124 = vpop.permute.xlu0 %1123
    %1125 = vrot.lane.b32.xlu0 %v1092, 96
    %v1126 = vpop.permute.xlu0 %1125
    %1127 = vrot.lane.b32.xlu0 %v1095, 96
    %v1128 = vpop.permute.xlu0 %1127
    %1129 = vrot.lane.b32.xlu0 %v1097, 96
    %v1130 = vpop.permute.xlu0 %1129
    %1131 = vrot.lane.b32.xlu0 %v1100, 96
    %v1132 = vpop.permute.xlu0 %1131
    %1133 = vrot.lane.b32.xlu0 %v1102, 96
    %v1134 = vpop.permute.xlu0 %1133
    %v1151 = vadd.f32 %v879, %v1104
    %v1152 = vadd.f32 %v882, %v1106
    %v1153 = vadd.f32 %v888, %v1108
    %v1154 = vadd.f32 %v891, %v1110
    %v1155 = vadd.f32 %v897, %v1112
    %v1156 = vadd.f32 %v900, %v1114
    %v1157 = vadd.f32 %v906, %v1116
    %v1158 = vadd.f32 %v909, %v1118
    %v1159 = vadd.f32 %v915, %v1120
    %v1160 = vadd.f32 %v918, %v1122
    %v1161 = vadd.f32 %v924, %v1124
    %v1162 = vadd.f32 %v927, %v1126
    %v1163 = vadd.f32 %v933, %v1128
    %v1164 = vadd.f32 %v936, %v1130
    %v1165 = vadd.f32 %v942, %v1132
    %v1166 = vadd.f32 %v945, %v1134
    %v1167 = vrot.slane %v879, 2
    %v1168 = vrot.slane %v882, 2
    %v1169 = vsel %vm368, %v1167, %v1168
    %v1170 = vrot.slane %v885, 2
    %v1171 = vsel %vm368, %v1168, %v1170
    %v1172 = vrot.slane %v888, 2
    %v1173 = vrot.slane %v891, 2
    %v1174 = vsel %vm368, %v1172, %v1173
    %v1175 = vrot.slane %v894, 2
    %v1176 = vsel %vm368, %v1173, %v1175
    %v1177 = vrot.slane %v897, 2
    %v1178 = vrot.slane %v900, 2
    %v1179 = vsel %vm368, %v1177, %v1178
    %v1180 = vrot.slane %v903, 2
    %v1181 = vsel %vm368, %v1178, %v1180
    %v1182 = vrot.slane %v906, 2
    %v1183 = vrot.slane %v909, 2
    %v1184 = vsel %vm368, %v1182, %v1183
    %v1185 = vrot.slane %v912, 2
    %v1186 = vsel %vm368, %v1183, %v1185
    %v1187 = vrot.slane %v915, 2
    %v1188 = vrot.slane %v918, 2
    %v1189 = vsel %vm368, %v1187, %v1188
    %v1190 = vrot.slane %v921, 2
    %v1191 = vsel %vm368, %v1188, %v1190
    %v1192 = vrot.slane %v924, 2
    %v1193 = vrot.slane %v927, 2
    %v1194 = vsel %vm368, %v1192, %v1193
    %v1195 = vrot.slane %v930, 2
    %v1196 = vsel %vm368, %v1193, %v1195
    %v1197 = vrot.slane %v933, 2
    %v1198 = vrot.slane %v936, 2
    %v1199 = vsel %vm368, %v1197, %v1198
    %v1200 = vrot.slane %v939, 2
    %v1201 = vsel %vm368, %v1198, %v1200
    %v1202 = vrot.slane %v942, 2
    %v1203 = vrot.slane %v945, 2
    %v1204 = vsel %vm368, %v1202, %v1203
    %v1205 = vrot.slane %v948, 2
    %v1206 = vsel %vm368, %v1203, %v1205
    %1207 = vrot.lane.b32.xlu0 %v1169, 64
    %v1208 = vpop.permute.xlu0 %1207
    %1209 = vrot.lane.b32.xlu0 %v1171, 64
    %v1210 = vpop.permute.xlu0 %1209
    %1211 = vrot.lane.b32.xlu0 %v1174, 64
    %v1212 = vpop.permute.xlu0 %1211
    %1213 = vrot.lane.b32.xlu0 %v1176, 64
    %v1214 = vpop.permute.xlu0 %1213
    %1215 = vrot.lane.b32.xlu0 %v1179, 64
    %v1216 = vpop.permute.xlu0 %1215
    %1217 = vrot.lane.b32.xlu0 %v1181, 64
    %v1218 = vpop.permute.xlu0 %1217
    %1219 = vrot.lane.b32.xlu0 %v1184, 64
    %v1220 = vpop.permute.xlu0 %1219
    %1221 = vrot.lane.b32.xlu0 %v1186, 64
    %v1222 = vpop.permute.xlu0 %1221
    %1223 = vrot.lane.b32.xlu0 %v1189, 64
    %v1224 = vpop.permute.xlu0 %1223
    %1225 = vrot.lane.b32.xlu0 %v1191, 64
    %v1226 = vpop.permute.xlu0 %1225
    %1227 = vrot.lane.b32.xlu0 %v1194, 64
    %v1228 = vpop.permute.xlu0 %1227
    %1229 = vrot.lane.b32.xlu0 %v1196, 64
    %v1230 = vpop.permute.xlu0 %1229
    %1231 = vrot.lane.b32.xlu0 %v1199, 64
    %v1232 = vpop.permute.xlu0 %1231
    %1233 = vrot.lane.b32.xlu0 %v1201, 64
    %v1234 = vpop.permute.xlu0 %1233
    %1235 = vrot.lane.b32.xlu0 %v1204, 64
    %v1236 = vpop.permute.xlu0 %1235
    %1237 = vrot.lane.b32.xlu0 %v1206, 64
    %v1238 = vpop.permute.xlu0 %1237
    %v1255 = vadd.f32 %v1151, %v1208
    %v1256 = vadd.f32 %v1152, %v1210
    %v1257 = vadd.f32 %v1153, %v1212
    %v1258 = vadd.f32 %v1154, %v1214
    %v1259 = vadd.f32 %v1155, %v1216
    %v1260 = vadd.f32 %v1156, %v1218
    %v1261 = vadd.f32 %v1157, %v1220
    %v1262 = vadd.f32 %v1158, %v1222
    %v1263 = vadd.f32 %v1159, %v1224
    %v1264 = vadd.f32 %v1160, %v1226
    %v1265 = vadd.f32 %v1161, %v1228
    %v1266 = vadd.f32 %v1162, %v1230
    %v1267 = vadd.f32 %v1163, %v1232
    %v1268 = vadd.f32 %v1164, %v1234
    %v1269 = vadd.f32 %v1165, %v1236
    %v1270 = vadd.f32 %v1166, %v1238
    %v1271 = vrot.slane %v879, 3
    %v1272 = vrot.slane %v882, 3
    %v1273 = vsel %vm473, %v1271, %v1272
    %v1274 = vrot.slane %v885, 3
    %v1275 = vsel %vm473, %v1272, %v1274
    %v1276 = vrot.slane %v888, 3
    %v1277 = vrot.slane %v891, 3
    %v1278 = vsel %vm473, %v1276, %v1277
    %v1279 = vrot.slane %v894, 3
    %v1280 = vsel %vm473, %v1277, %v1279
    %v1281 = vrot.slane %v897, 3
    %v1282 = vrot.slane %v900, 3
    %v1283 = vsel %vm473, %v1281, %v1282
    %v1284 = vrot.slane %v903, 3
    %v1285 = vsel %vm473, %v1282, %v1284
    %v1286 = vrot.slane %v906, 3
    %v1287 = vrot.slane %v909, 3
    %v1288 = vsel %vm473, %v1286, %v1287
    %v1289 = vrot.slane %v912, 3
    %v1290 = vsel %vm473, %v1287, %v1289
    %v1291 = vrot.slane %v915, 3
    %v1292 = vrot.slane %v918, 3
    %v1293 = vsel %vm473, %v1291, %v1292
    %v1294 = vrot.slane %v921, 3
    %v1295 = vsel %vm473, %v1292, %v1294
    %v1296 = vrot.slane %v924, 3
    %v1297 = vrot.slane %v927, 3
    %v1298 = vsel %vm473, %v1296, %v1297
    %v1299 = vrot.slane %v930, 3
    %v1300 = vsel %vm473, %v1297, %v1299
    %v1301 = vrot.slane %v933, 3
    %v1302 = vrot.slane %v936, 3
    %v1303 = vsel %vm473, %v1301, %v1302
    %v1304 = vrot.slane %v939, 3
    %v1305 = vsel %vm473, %v1302, %v1304
    %v1306 = vrot.slane %v942, 3
    %v1307 = vrot.slane %v945, 3
    %v1308 = vsel %vm473, %v1306, %v1307
    %v1309 = vrot.slane %v948, 3
    %v1310 = vsel %vm473, %v1307, %v1309
    %1311 = vrot.lane.b32.xlu0 %v1273, 32
    %v1312 = vpop.permute.xlu0 %1311
    %1313 = vrot.lane.b32.xlu0 %v1275, 32
    %v1314 = vpop.permute.xlu0 %1313
    %1315 = vrot.lane.b32.xlu0 %v1278, 32
    %v1316 = vpop.permute.xlu0 %1315
    %1317 = vrot.lane.b32.xlu0 %v1280, 32
    %v1318 = vpop.permute.xlu0 %1317
    %1319 = vrot.lane.b32.xlu0 %v1283, 32
    %v1320 = vpop.permute.xlu0 %1319
    %1321 = vrot.lane.b32.xlu0 %v1285, 32
    %v1322 = vpop.permute.xlu0 %1321
    %1323 = vrot.lane.b32.xlu0 %v1288, 32
    %v1324 = vpop.permute.xlu0 %1323
    %1325 = vrot.lane.b32.xlu0 %v1290, 32
    %v1326 = vpop.permute.xlu0 %1325
    %1327 = vrot.lane.b32.xlu0 %v1293, 32
    %v1328 = vpop.permute.xlu0 %1327
    %1329 = vrot.lane.b32.xlu0 %v1295, 32
    %v1330 = vpop.permute.xlu0 %1329
    %1331 = vrot.lane.b32.xlu0 %v1298, 32
    %v1332 = vpop.permute.xlu0 %1331
    %1333 = vrot.lane.b32.xlu0 %v1300, 32
    %v1334 = vpop.permute.xlu0 %1333
    %1335 = vrot.lane.b32.xlu0 %v1303, 32
    %v1336 = vpop.permute.xlu0 %1335
    %1337 = vrot.lane.b32.xlu0 %v1305, 32
    %v1338 = vpop.permute.xlu0 %1337
    %1339 = vrot.lane.b32.xlu0 %v1308, 32
    %v1340 = vpop.permute.xlu0 %1339
    %1341 = vrot.lane.b32.xlu0 %v1310, 32
    %v1342 = vpop.permute.xlu0 %1341
    %v1359 = vadd.f32 %v1255, %v1312
    %v1360 = vadd.f32 %v1256, %v1314
    %v1361 = vadd.f32 %v1257, %v1316
    %v1362 = vadd.f32 %v1258, %v1318
    %v1363 = vadd.f32 %v1259, %v1320
    %v1364 = vadd.f32 %v1260, %v1322
    %v1365 = vadd.f32 %v1261, %v1324
    %v1366 = vadd.f32 %v1262, %v1326
    %v1367 = vadd.f32 %v1263, %v1328
    %v1368 = vadd.f32 %v1264, %v1330
    %v1369 = vadd.f32 %v1265, %v1332
    %v1370 = vadd.f32 %v1266, %v1334
    %v1371 = vadd.f32 %v1267, %v1336
    %v1372 = vadd.f32 %v1268, %v1338
    %v1373 = vadd.f32 %v1269, %v1340
    %v1374 = vadd.f32 %v1270, %v1342
    %v1399 = vrot.slane %v968, 4
    %v1400 = vrot.slane %v971, 4
    %v1401 = vsel %vm578, %v1399, %v1400
    %v1402 = vrot.slane %v974, 4
    %v1403 = vsel %vm578, %v1400, %v1402
    %v1404 = vrot.slane %v977, 4
    %v1405 = vrot.slane %v980, 4
    %v1406 = vsel %vm578, %v1404, %v1405
    %v1407 = vrot.slane %v983, 4
    %v1408 = vsel %vm578, %v1405, %v1407
    %v1409 = vrot.slane %v986, 4
    %v1410 = vrot.slane %v989, 4
    %v1411 = vsel %vm578, %v1409, %v1410
    %v1412 = vrot.slane %v992, 4
    %v1413 = vsel %vm578, %v1410, %v1412
    %v1414 = vrot.slane %v995, 4
    %v1415 = vrot.slane %v998, 4
    %v1416 = vsel %vm578, %v1414, %v1415
    %v1417 = vrot.slane %v1001, 4
    %v1418 = vsel %vm578, %v1415, %v1417
    %v1419 = vrot.slane %v1004, 4
    %v1420 = vrot.slane %v1007, 4
    %v1421 = vsel %vm578, %v1419, %v1420
    %v1422 = vrot.slane %v1010, 4
    %v1423 = vsel %vm578, %v1420, %v1422
    %v1424 = vrot.slane %v1013, 4
    %v1425 = vrot.slane %v1016, 4
    %v1426 = vsel %vm578, %v1424, %v1425
    %v1427 = vrot.slane %v1019, 4
    %v1428 = vsel %vm578, %v1425, %v1427
    %v1429 = vrot.slane %v1022, 4
    %v1430 = vrot.slane %v1025, 4
    %v1431 = vsel %vm578, %v1429, %v1430
    %v1432 = vrot.slane %v1028, 4
    %v1433 = vsel %vm578, %v1430, %v1432
    %v1434 = vrot.slane %v1031, 4
    %v1435 = vrot.slane %v1034, 4
    %v1436 = vsel %vm578, %v1434, %v1435
    %v1437 = vrot.slane %v1037, 4
    %v1438 = vsel %vm578, %v1435, %v1437
    %v1455 = vadd.f32 %v1359, %v1401
    %v1456 = vadd.f32 %v1360, %v1403
    %v1457 = vadd.f32 %v1361, %v1406
    %v1458 = vadd.f32 %v1362, %v1408
    %v1459 = vadd.f32 %v1363, %v1411
    %v1460 = vadd.f32 %v1364, %v1413
    %v1461 = vadd.f32 %v1365, %v1416
    %v1462 = vadd.f32 %v1366, %v1418
    %v1463 = vadd.f32 %v1367, %v1421
    %v1464 = vadd.f32 %v1368, %v1423
    %v1465 = vadd.f32 %v1369, %v1426
    %v1466 = vadd.f32 %v1370, %v1428
    %v1467 = vadd.f32 %v1371, %v1431
    %v1468 = vadd.f32 %v1372, %v1433
    %v1469 = vadd.f32 %v1373, %v1436
    %v1470 = vadd.f32 %v1374, %v1438
    %v1471 = vld [vmem:[%s4] sm:$0x1]
    %v1473 = vperm.slane %v1471, 0
    %v1475 = vadd.f32 %v1455, %v1473
    %v1476 = vadd.f32 %v1456, %v1473
    %v1477 = vadd.f32 %v1457, %v1473
    %v1478 = vadd.f32 %v1458, %v1473
    %v1479 = vadd.f32 %v1459, %v1473
    %v1480 = vadd.f32 %v1460, %v1473
    %v1481 = vadd.f32 %v1461, %v1473
    %v1482 = vadd.f32 %v1462, %v1473
    %v1483 = vadd.f32 %v1463, %v1473
    %v1484 = vadd.f32 %v1464, %v1473
    %v1485 = vadd.f32 %v1465, %v1473
    %v1486 = vadd.f32 %v1466, %v1473
    %v1487 = vadd.f32 %v1467, %v1473
    %v1488 = vadd.f32 %v1468, %v1473
    %v1489 = vadd.f32 %v1469, %v1473
    %v1490 = vadd.f32 %v1470, %v1473
    %v1491 = vmax.f32 %v1475, 0.0
    %v1492 = vmax.f32 %v1476, 0.0
    %v1493 = vmax.f32 %v1477, 0.0
    %v1494 = vmax.f32 %v1478, 0.0
    %v1495 = vmax.f32 %v1479, 0.0
    %v1496 = vmax.f32 %v1480, 0.0
    %v1497 = vmax.f32 %v1481, 0.0
    %v1498 = vmax.f32 %v1482, 0.0
    %v1499 = vmax.f32 %v1483, 0.0
    %v1500 = vmax.f32 %v1484, 0.0
    %v1501 = vmax.f32 %v1485, 0.0
    %v1502 = vmax.f32 %v1486, 0.0
    %v1503 = vmax.f32 %v1487, 0.0
    %v1504 = vmax.f32 %v1488, 0.0
    %v1505 = vmax.f32 %v1489, 0.0
    %v1506 = vmax.f32 %v1490, 0.0
    %vm1507 = vcmask 261120
    %v1508 = vsel %vm1507, %v1491, 0.0
    %v1509 = vsel %vm1507, %v1492, 0.0
    %v1510 = vadd.f32 %v1508, %v1509
    %v1511 = vrot.slane %v1510, 4
    %v1512 = vadd.f32 %v1510, %v1511
    %v1513 = vrot.slane %v1512, 2
    %v1514 = vadd.f32 %v1512, %v1513
    %v1515 = vrot.slane %v1514, 1
    %v1516 = vadd.f32 %v1514, %v1515
    %v1517 = vsel %vm1507, %v1493, 0.0
    %v1518 = vsel %vm1507, %v1494, 0.0
    %v1519 = vadd.f32 %v1517, %v1518
    %v1520 = vrot.slane %v1519, 4
    %v1521 = vadd.f32 %v1519, %v1520
    %v1522 = vrot.slane %v1521, 2
    %v1523 = vadd.f32 %v1521, %v1522
    %v1524 = vrot.slane %v1523, 1
    %v1525 = vadd.f32 %v1523, %v1524
    %v1526 = vsel %vm1507, %v1495, 0.0
    %v1527 = vsel %vm1507, %v1496, 0.0
    %v1528 = vadd.f32 %v1526, %v1527
    %v1529 = vrot.slane %v1528, 4
    %v1530 = vadd.f32 %v1528, %v1529
    %v1531 = vrot.slane %v1530, 2
    %v1532 = vadd.f32 %v1530, %v1531
    %v1533 = vrot.slane %v1532, 1
    %v1534 = vadd.f32 %v1532, %v1533
    %v1535 = vsel %vm1507, %v1497, 0.0
    %v1536 = vsel %vm1507, %v1498, 0.0
    %v1537 = vadd.f32 %v1535, %v1536
    %v1538 = vrot.slane %v1537, 4
    %v1539 = vadd.f32 %v1537, %v1538
    %v1540 = vrot.slane %v1539, 2
    %v1541 = vadd.f32 %v1539, %v1540
    %v1542 = vrot.slane %v1541, 1
    %v1543 = vadd.f32 %v1541, %v1542
    %v1544 = vsel %vm1507, %v1499, 0.0
    %v1545 = vsel %vm1507, %v1500, 0.0
    %v1546 = vadd.f32 %v1544, %v1545
    %v1547 = vrot.slane %v1546, 4
    %v1548 = vadd.f32 %v1546, %v1547
    %v1549 = vrot.slane %v1548, 2
    %v1550 = vadd.f32 %v1548, %v1549
    %v1551 = vrot.slane %v1550, 1
    %v1552 = vadd.f32 %v1550, %v1551
    %v1553 = vsel %vm1507, %v1501, 0.0
    %v1554 = vsel %vm1507, %v1502, 0.0
    %v1555 = vadd.f32 %v1553, %v1554
    %v1556 = vrot.slane %v1555, 4
    %v1557 = vadd.f32 %v1555, %v1556
    %v1558 = vrot.slane %v1557, 2
    %v1559 = vadd.f32 %v1557, %v1558
    %v1560 = vrot.slane %v1559, 1
    %v1561 = vadd.f32 %v1559, %v1560
    %v1562 = vsel %vm1507, %v1503, 0.0
    %v1563 = vsel %vm1507, %v1504, 0.0
    %v1564 = vadd.f32 %v1562, %v1563
    %v1565 = vrot.slane %v1564, 4
    %v1566 = vadd.f32 %v1564, %v1565
    %v1567 = vrot.slane %v1566, 2
    %v1568 = vadd.f32 %v1566, %v1567
    %v1569 = vrot.slane %v1568, 1
    %v1570 = vadd.f32 %v1568, %v1569
    %v1571 = vsel %vm1507, %v1505, 0.0
    %v1572 = vsel %vm1507, %v1506, 0.0
    %v1573 = vadd.f32 %v1571, %v1572
    %v1574 = vrot.slane %v1573, 4
    %v1575 = vadd.f32 %v1573, %v1574
    %v1576 = vrot.slane %v1575, 2
    %v1577 = vadd.f32 %v1575, %v1576
    %v1578 = vrot.slane %v1577, 1
    %v1579 = vadd.f32 %v1577, %v1578
    %v1580 = vrcp.pop 16.0
    %v1581 = vmul.f32 16.0, %v1580
    %v1582 = vsub.f32 1.0, %v1581
    %v1583 = vmul.f32 %v1580, %v1582
    %v1584 = vadd.f32 %v1580, %v1583
    %vm1585 = vweird.f32 %v1580
    %v1586 = vsel %vm1585, %v1580, %v1584
    %v1587 = vmul.f32 %v1516, %v1586
    %v1588 = vmul.f32 %v1525, %v1586
    %v1589 = vmul.f32 %v1534, %v1586
    %v1590 = vmul.f32 %v1543, %v1586
    %v1591 = vmul.f32 %v1552, %v1586
    %v1592 = vmul.f32 %v1561, %v1586
    %v1593 = vmul.f32 %v1570, %v1586
    %v1594 = vmul.f32 %v1579, %v1586
    %v1595 = vld [vmem:[%s5] sm:$0x7]
    %v1596 = vld [vmem:[%s7] sm:$0x1]
    %v1598 = vperm.slane %v1596, 0
    %v1601 = vsel %vm146, %v1595, 0
    %1603 = vmatpush.msra.mxu0 0.0
    %1604 = vmatpush.msra.mxu0 0.0
    %1605 = vmatpush.msra.mxu0 0.0
    %1606 = vmatpush.msra.mxu0 0.0
    %1607 = vmatpush.msra.mxu0 0.0
    %1608 = vmatpush.msra.mxu0 0.0
    %1609 = vmatpush.msra.mxu0 0.0
    %1610 = vmatpush.msra.mxu0 0.0
    %1611 = vmatpush.msra.mxu0 0.0
    %1612 = vmatpush.msra.mxu0 0.0
    %1613 = vmatpush.msra.mxu0 0.0
    %1614 = vmatpush.msra.mxu0 0.0
    %1615 = vmatpush.msra.mxu0 0.0
    %1616 = vmatpush.msra.mxu0 0.0
    %1617 = vmatpush.msra.mxu0 0.0
    %1618 = vmatpush.msra.mxu0 %v1601
    %1619 = vmatmul.f32.gmra.mxu0 %v75
    %v1620 = vpop.f32.mrf.mxu0
    %v1621 = vadd.f32 %v1598, %v1620
    %1622 = vmatmul.f32.gmra.mxu0 %v78
    %v1623 = vpop.f32.mrf.mxu0
    %v1624 = vadd.f32 %v1598, %v1623
    %1625 = vmatmul.f32.gmra.mxu0 %v81
    %v1626 = vpop.f32.mrf.mxu0
    %v1627 = vadd.f32 %v1598, %v1626
    %1628 = vmatmul.f32.gmra.mxu0 %v84
    %v1629 = vpop.f32.mrf.mxu0
    %v1630 = vadd.f32 %v1598, %v1629
    %1631 = vmatmul.f32.gmra.mxu0 %v87
    %v1632 = vpop.f32.mrf.mxu0
    %v1633 = vadd.f32 %v1598, %v1632
    %1634 = vmatmul.f32.gmra.mxu0 %v90
    %v1635 = vpop.f32.mrf.mxu0
    %v1636 = vadd.f32 %v1598, %v1635
    %1637 = vmatmul.f32.gmra.mxu0 %v93
    %v1638 = vpop.f32.mrf.mxu0
    %v1639 = vadd.f32 %v1598, %v1638
    %1640 = vmatmul.f32.gmra.mxu0 %v96
    %v1641 = vpop.f32.mrf.mxu0
    %v1642 = vadd.f32 %v1598, %v1641
    %1643 = vmatmul.f32.gmra.mxu0 %v99
    %v1644 = vpop.f32.mrf.mxu0
    %v1645 = vadd.f32 %v1598, %v1644
    %1646 = vmatmul.f32.gmra.mxu0 %v102
    %v1647 = vpop.f32.mrf.mxu0
    %v1648 = vadd.f32 %v1598, %v1647
    %1649 = vmatmul.f32.gmra.mxu0 %v105
    %v1650 = vpop.f32.mrf.mxu0
    %v1651 = vadd.f32 %v1598, %v1650
    %1652 = vmatmul.f32.gmra.mxu0 %v108
    %v1653 = vpop.f32.mrf.mxu0
    %v1654 = vadd.f32 %v1598, %v1653
    %1655 = vmatmul.f32.gmra.mxu0 %v111
    %v1656 = vpop.f32.mrf.mxu0
    %v1657 = vadd.f32 %v1598, %v1656
    %1658 = vmatmul.f32.gmra.mxu0 %v114
    %v1659 = vpop.f32.mrf.mxu0
    %v1660 = vadd.f32 %v1598, %v1659
    %1661 = vmatmul.f32.gmra.mxu0 %v117
    %v1662 = vpop.f32.mrf.mxu0
    %v1663 = vadd.f32 %v1598, %v1662
    %1664 = vmatmul.f32.gmra.mxu0 %v120
    %v1665 = vpop.f32.mrf.mxu0
    %v1666 = vadd.f32 %v1598, %v1665
    %1667 = vmatmul.f32.gmra.mxu0 %v123
    %v1668 = vpop.f32.mrf.mxu0
    %v1669 = vadd.f32 %v1598, %v1668
    %1670 = vmatmul.f32.gmra.mxu0 %v126
    %v1671 = vpop.f32.mrf.mxu0
    %v1672 = vadd.f32 %v1598, %v1671
    %1673 = vmatmul.f32.gmra.mxu0 %v129
    %v1674 = vpop.f32.mrf.mxu0
    %v1675 = vadd.f32 %v1598, %v1674
    %1676 = vmatmul.f32.gmra.mxu0 %v132
    %v1677 = vpop.f32.mrf.mxu0
    %v1678 = vadd.f32 %v1598, %v1677
    %1679 = vmatmul.f32.gmra.mxu0 %v135
    %v1680 = vpop.f32.mrf.mxu0
    %v1681 = vadd.f32 %v1598, %v1680
    %1682 = vmatmul.f32.gmra.mxu0 %v138
    %v1683 = vpop.f32.mrf.mxu0
    %v1684 = vadd.f32 %v1598, %v1683
    %1685 = vmatmul.f32.gmra.mxu0 %v141
    %v1686 = vpop.f32.mrf.mxu0
    %v1687 = vadd.f32 %v1598, %v1686
    %1688 = vmatmul.f32.gmra.mxu0 %v144
    %v1689 = vpop.f32.mrf.mxu0
    %v1690 = vadd.f32 %v1598, %v1689
    %1691 = vdwg.mxu0
    %v1692 = vld [vmem:[%s6] sm:$0xff]
    %v1693 = vld [vmem:[%s6 + $0x8] sm:$0xff]
    %v1694 = vld [vmem:[%s6 + $0x10] sm:$0xff]
    %v1695 = vld [vmem:[%s6 + $0x18] sm:$0xff]
    %v1697 = vsel %vm1507, 0.0, 0
    %1699 = vmatpush.msra.mxu0 0.0
    %1700 = vmatpush.msra.mxu0 0.0
    %1701 = vmatpush.msra.mxu0 0.0
    %1702 = vmatpush.msra.mxu0 0.0
    %1703 = vmatpush.msra.mxu0 0.0
    %1704 = vmatpush.msra.mxu0 0.0
    %1705 = vmatpush.msra.mxu0 0.0
    %1706 = vmatpush.msra.mxu0 0.0
    %1707 = vmatpush.msra.mxu0 0.0
    %1708 = vmatpush.msra.mxu0 0.0
    %1709 = vmatpush.msra.mxu0 0.0
    %1710 = vmatpush.msra.mxu0 0.0
    %1711 = vmatpush.msra.mxu0 %v1695
    %1712 = vmatpush.msra.mxu0 %v1694
    %1713 = vmatpush.msra.mxu0 %v1693
    %1714 = vmatpush.msra.mxu0 %v1692
    %1715 = vmatmul.f32.gmra.mxu0 %v1697
    %v1716 = vpop.f32.mrf.mxu0
    %v1717 = vadd.f32 0.0, %v1716
    %1718 = vdwg.mxu0
    %v1720 = vrot.slane %v1717, 6
    %v1721 = vrot.slane %v1717, 7
    %v1722 = vrot.slane %v1717, 1
    %v1723 = vrot.slane %v1717, 2
    %v1724 = vrot.slane %v1717, 3
    %v1725 = vrot.slane %v1717, 4
    %v1726 = vrot.slane %v1717, 5
    %v1735 = vadd.f32 %v1621, %v1720
    %v1736 = vadd.f32 %v1630, %v1721
    %v1737 = vadd.f32 %v1639, %v1717
    %v1738 = vadd.f32 %v1648, %v1722
    %v1739 = vadd.f32 %v1657, %v1723
    %v1740 = vadd.f32 %v1666, %v1724
    %v1741 = vadd.f32 %v1675, %v1725
    %v1742 = vadd.f32 %v1684, %v1726
    %v1743 = vmul.f32 %v1735, 0.5
    %v1744 = vmul.f32 %v1736, 0.5
    %v1745 = vmul.f32 %v1737, 0.5
    %v1746 = vmul.f32 %v1738, 0.5
    %v1747 = vmul.f32 %v1739, 0.5
    %v1748 = vmul.f32 %v1740, 0.5
    %v1749 = vmul.f32 %v1741, 0.5
    %v1750 = vmul.f32 %v1742, 0.5
    %v1751 = vtanh.pop %v1743
    %v1752 = vtanh.pop %v1744
    %v1753 = vtanh.pop %v1745
    %v1754 = vtanh.pop %v1746
    %v1755 = vtanh.pop %v1747
    %v1756 = vtanh.pop %v1748
    %v1757 = vtanh.pop %v1749
    %v1758 = vtanh.pop %v1750
    %v1759 = vadd.f32 %v1751, 1.0
    %v1760 = vadd.f32 %v1752, 1.0
    %v1761 = vadd.f32 %v1753, 1.0
    %v1762 = vadd.f32 %v1754, 1.0
    %v1763 = vadd.f32 %v1755, 1.0
    %v1764 = vadd.f32 %v1756, 1.0
    %v1765 = vadd.f32 %v1757, 1.0
    %v1766 = vadd.f32 %v1758, 1.0
    %v1767 = vmul.f32 %v1759, 0.5
    %v1768 = vmul.f32 %v1760, 0.5
    %v1769 = vmul.f32 %v1761, 0.5
    %v1770 = vmul.f32 %v1762, 0.5
    %v1771 = vmul.f32 %v1763, 0.5
    %v1772 = vmul.f32 %v1764, 0.5
    %v1773 = vmul.f32 %v1765, 0.5
    %v1774 = vmul.f32 %v1766, 0.5
    %v1775 = vtanh.pop %v1735
    %v1776 = vtanh.pop %v1736
    %v1777 = vtanh.pop %v1737
    %v1778 = vtanh.pop %v1738
    %v1779 = vtanh.pop %v1739
    %v1780 = vtanh.pop %v1740
    %v1781 = vtanh.pop %v1741
    %v1782 = vtanh.pop %v1742
    %v1783 = vmul.f32 %v1767, 0.0
    %v1784 = vmul.f32 %v1768, 0.0
    %v1785 = vmul.f32 %v1769, 0.0
    %v1786 = vmul.f32 %v1770, 0.0
    %v1787 = vmul.f32 %v1771, 0.0
    %v1788 = vmul.f32 %v1772, 0.0
    %v1789 = vmul.f32 %v1773, 0.0
    %v1790 = vmul.f32 %v1774, 0.0
    %1799 = vrot.lane.b32.xlu0 %v1775, 64
    %v1800 = vpop.permute.xlu0 %1799
    %1801 = vrot.lane.b32.xlu0 %v1776, 64
    %v1802 = vpop.permute.xlu0 %1801
    %1803 = vrot.lane.b32.xlu0 %v1777, 64
    %v1804 = vpop.permute.xlu0 %1803
    %1805 = vrot.lane.b32.xlu0 %v1778, 64
    %v1806 = vpop.permute.xlu0 %1805
    %1807 = vrot.lane.b32.xlu0 %v1779, 64
    %v1808 = vpop.permute.xlu0 %1807
    %1809 = vrot.lane.b32.xlu0 %v1780, 64
    %v1810 = vpop.permute.xlu0 %1809
    %1811 = vrot.lane.b32.xlu0 %v1781, 64
    %v1812 = vpop.permute.xlu0 %1811
    %1813 = vrot.lane.b32.xlu0 %v1782, 64
    %v1814 = vpop.permute.xlu0 %1813
    %v1823 = vmul.f32 %v1767, %v1800
    %v1824 = vmul.f32 %v1768, %v1802
    %v1825 = vmul.f32 %v1769, %v1804
    %v1826 = vmul.f32 %v1770, %v1806
    %v1827 = vmul.f32 %v1771, %v1808
    %v1828 = vmul.f32 %v1772, %v1810
    %v1829 = vmul.f32 %v1773, %v1812
    %v1830 = vmul.f32 %v1774, %v1814
    %1839 = vrot.lane.b32.xlu0 %v1823, 32
    %v1840 = vpop.permute.xlu0 %1839
    %1841 = vrot.lane.b32.xlu0 %v1824, 32
    %v1842 = vpop.permute.xlu0 %1841
    %1843 = vrot.lane.b32.xlu0 %v1825, 32
    %v1844 = vpop.permute.xlu0 %1843
    %1845 = vrot.lane.b32.xlu0 %v1826, 32
    %v1846 = vpop.permute.xlu0 %1845
    %1847 = vrot.lane.b32.xlu0 %v1827, 32
    %v1848 = vpop.permute.xlu0 %1847
    %1849 = vrot.lane.b32.xlu0 %v1828, 32
    %v1850 = vpop.permute.xlu0 %1849
    %1851 = vrot.lane.b32.xlu0 %v1829, 32
    %v1852 = vpop.permute.xlu0 %1851
    %1853 = vrot.lane.b32.xlu0 %v1830, 32
    %v1854 = vpop.permute.xlu0 %1853
    %v1863 = vadd.f32 %v1783, %v1840
    %v1864 = vadd.f32 %v1784, %v1842
    %v1865 = vadd.f32 %v1785, %v1844
    %v1866 = vadd.f32 %v1786, %v1846
    %v1867 = vadd.f32 %v1787, %v1848
    %v1868 = vadd.f32 %v1788, %v1850
    %v1869 = vadd.f32 %v1789, %v1852
    %v1870 = vadd.f32 %v1790, %v1854
    %v1871 = vtanh.pop %v1863
    %v1872 = vtanh.pop %v1864
    %v1873 = vtanh.pop %v1865
    %v1874 = vtanh.pop %v1866
    %v1875 = vtanh.pop %v1867
    %v1876 = vtanh.pop %v1868
    %v1877 = vtanh.pop %v1869
    %v1878 = vtanh.pop %v1870
    %1887 = vrot.lane.b32.xlu0 %v1871, 64
    %v1888 = vpop.permute.xlu0 %1887
    %1889 = vrot.lane.b32.xlu0 %v1872, 64
    %v1890 = vpop.permute.xlu0 %1889
    %1891 = vrot.lane.b32.xlu0 %v1873, 64
    %v1892 = vpop.permute.xlu0 %1891
    %1893 = vrot.lane.b32.xlu0 %v1874, 64
    %v1894 = vpop.permute.xlu0 %1893
    %1895 = vrot.lane.b32.xlu0 %v1875, 64
    %v1896 = vpop.permute.xlu0 %1895
    %1897 = vrot.lane.b32.xlu0 %v1876, 64
    %v1898 = vpop.permute.xlu0 %1897
    %1899 = vrot.lane.b32.xlu0 %v1877, 64
    %v1900 = vpop.permute.xlu0 %1899
    %1901 = vrot.lane.b32.xlu0 %v1878, 64
    %v1902 = vpop.permute.xlu0 %1901
    %v1911 = vmul.f32 %v1767, %v1888
    %v1912 = vmul.f32 %v1768, %v1890
    %v1913 = vmul.f32 %v1769, %v1892
    %v1914 = vmul.f32 %v1770, %v1894
    %v1915 = vmul.f32 %v1771, %v1896
    %v1916 = vmul.f32 %v1772, %v1898
    %v1917 = vmul.f32 %v1773, %v1900
    %v1918 = vmul.f32 %v1774, %v1902
    %v1927 = vrot.slane %v1911, 2
    %v1928 = vrot.slane %v1912, 1
    %vm1929 = vcmask 1041409
    %v1930 = vsel %vm1929, %v1928, %v1927
    %vm1931 = vcmask 1042434
    %v1932 = vsel %vm1931, %v1913, %v1930
    %v1933 = vrot.slane %v1914, 7
    %vm1934 = vcmask 1043459
    %v1935 = vsel %vm1934, %v1933, %v1932
    %v1936 = vrot.slane %v1915, 6
    %vm1937 = vcmask 1044484
    %v1938 = vsel %vm1937, %v1936, %v1935
    %v1939 = vrot.slane %v1916, 5
    %vm1940 = vcmask 1045509
    %v1941 = vsel %vm1940, %v1939, %v1938
    %v1942 = vrot.slane %v1917, 4
    %vm1943 = vcmask 1046534
    %v1944 = vsel %vm1943, %v1942, %v1941
    %v1945 = vrot.slane %v1918, 3
    %vm1946 = vcmask 1047559
    %v1947 = vsel %vm1946, %v1945, %v1944
    %1948 = vrot.lane.b32.xlu0 %v1947, 32
    %v1949 = vpop.permute.xlu0 %1948
    %v1950 = vsel %vm1507, %v1949, 0
    %1952 = vmatpush.msra.mxu0 0.0
    %1953 = vmatpush.msra.mxu0 0.0
    %1954 = vmatpush.msra.mxu0 0.0
    %1955 = vmatpush.msra.mxu0 0.0
    %1956 = vmatpush.msra.mxu0 0.0
    %1957 = vmatpush.msra.mxu0 0.0
    %1958 = vmatpush.msra.mxu0 0.0
    %1959 = vmatpush.msra.mxu0 0.0
    %1960 = vmatpush.msra.mxu0 0.0
    %1961 = vmatpush.msra.mxu0 0.0
    %1962 = vmatpush.msra.mxu0 0.0
    %1963 = vmatpush.msra.mxu0 0.0
    %1964 = vmatpush.msra.mxu0 %v1695
    %1965 = vmatpush.msra.mxu0 %v1694
    %1966 = vmatpush.msra.mxu0 %v1693
    %1967 = vmatpush.msra.mxu0 %v1692
    %1968 = vmatmul.f32.gmra.mxu0 %v1950
    %v1969 = vpop.f32.mrf.mxu0
    %v1970 = vadd.f32 0.0, %v1969
    %1971 = vdwg.mxu0
    %v1973 = vrot.slane %v1970, 5
    %v1974 = vrot.slane %v1970, 6
    %v1975 = vrot.slane %v1970, 7
    %v1976 = vrot.slane %v1970, 1
    %v1977 = vrot.slane %v1970, 2
    %v1978 = vrot.slane %v1970, 3
    %v1979 = vrot.slane %v1970, 4
    %v1988 = vadd.f32 %v1621, %v1973
    %v1989 = vadd.f32 %v1630, %v1974
    %v1990 = vadd.f32 %v1639, %v1975
    %v1991 = vadd.f32 %v1648, %v1970
    %v1992 = vadd.f32 %v1657, %v1976
    %v1993 = vadd.f32 %v1666, %v1977
    %v1994 = vadd.f32 %v1675, %v1978
    %v1995 = vadd.f32 %v1684, %v1979
    %v1996 = vmul.f32 %v1988, 0.5
    %v1997 = vmul.f32 %v1989, 0.5
    %v1998 = vmul.f32 %v1990, 0.5
    %v1999 = vmul.f32 %v1991, 0.5
    %v2000 = vmul.f32 %v1992, 0.5
    %v2001 = vmul.f32 %v1993, 0.5
    %v2002 = vmul.f32 %v1994, 0.5
    %v2003 = vmul.f32 %v1995, 0.5
    %v2004 = vtanh.pop %v1996
    %v2005 = vtanh.pop %v1997
    %v2006 = vtanh.pop %v1998
    %v2007 = vtanh.pop %v1999
    %v2008 = vtanh.pop %v2000
    %v2009 = vtanh.pop %v2001
    %v2010 = vtanh.pop %v2002
    %v2011 = vtanh.pop %v2003
    %v2012 = vadd.f32 %v2004, 1.0
    %v2013 = vadd.f32 %v2005, 1.0
    %v2014 = vadd.f32 %v2006, 1.0
    %v2015 = vadd.f32 %v2007, 1.0
    %v2016 = vadd.f32 %v2008, 1.0
    %v2017 = vadd.f32 %v2009, 1.0
    %v2018 = vadd.f32 %v2010, 1.0
    %v2019 = vadd.f32 %v2011, 1.0
    %v2020 = vmul.f32 %v2012, 0.5
    %v2021 = vmul.f32 %v2013, 0.5
    %v2022 = vmul.f32 %v2014, 0.5
    %v2023 = vmul.f32 %v2015, 0.5
    %v2024 = vmul.f32 %v2016, 0.5
    %v2025 = vmul.f32 %v2017, 0.5
    %v2026 = vmul.f32 %v2018, 0.5
    %v2027 = vmul.f32 %v2019, 0.5
    %v2028 = vtanh.pop %v1988
    %v2029 = vtanh.pop %v1989
    %v2030 = vtanh.pop %v1990
    %v2031 = vtanh.pop %v1991
    %v2032 = vtanh.pop %v1992
    %v2033 = vtanh.pop %v1993
    %v2034 = vtanh.pop %v1994
    %v2035 = vtanh.pop %v1995
    %v2044 = vrot.slane %v1863, 7
    %v2045 = vrot.slane %v1864, 7
    %v2046 = vrot.slane %v1865, 7
    %v2047 = vrot.slane %v1866, 7
    %v2048 = vrot.slane %v1867, 7
    %v2049 = vrot.slane %v1868, 7
    %v2050 = vrot.slane %v1869, 7
    %v2051 = vrot.slane %v1870, 7
    %v2060 = vmul.f32 %v2020, %v2044
    %v2061 = vmul.f32 %v2021, %v2045
    %v2062 = vmul.f32 %v2022, %v2046
    %v2063 = vmul.f32 %v2023, %v2047
    %v2064 = vmul.f32 %v2024, %v2048
    %v2065 = vmul.f32 %v2025, %v2049
    %v2066 = vmul.f32 %v2026, %v2050
    %v2067 = vmul.f32 %v2027, %v2051
    %2076 = vrot.lane.b32.xlu0 %v2028, 64
    %v2077 = vpop.permute.xlu0 %2076
    %2078 = vrot.lane.b32.xlu0 %v2029, 64
    %v2079 = vpop.permute.xlu0 %2078
    %2080 = vrot.lane.b32.xlu0 %v2030, 64
    %v2081 = vpop.permute.xlu0 %2080
    %2082 = vrot.lane.b32.xlu0 %v2031, 64
    %v2083 = vpop.permute.xlu0 %2082
    %2084 = vrot.lane.b32.xlu0 %v2032, 64
    %v2085 = vpop.permute.xlu0 %2084
    %2086 = vrot.lane.b32.xlu0 %v2033, 64
    %v2087 = vpop.permute.xlu0 %2086
    %2088 = vrot.lane.b32.xlu0 %v2034, 64
    %v2089 = vpop.permute.xlu0 %2088
    %2090 = vrot.lane.b32.xlu0 %v2035, 64
    %v2091 = vpop.permute.xlu0 %2090
    %v2100 = vmul.f32 %v2020, %v2077
    %v2101 = vmul.f32 %v2021, %v2079
    %v2102 = vmul.f32 %v2022, %v2081
    %v2103 = vmul.f32 %v2023, %v2083
    %v2104 = vmul.f32 %v2024, %v2085
    %v2105 = vmul.f32 %v2025, %v2087
    %v2106 = vmul.f32 %v2026, %v2089
    %v2107 = vmul.f32 %v2027, %v2091
    %2116 = vrot.lane.b32.xlu0 %v2100, 32
    %v2117 = vpop.permute.xlu0 %2116
    %2118 = vrot.lane.b32.xlu0 %v2101, 32
    %v2119 = vpop.permute.xlu0 %2118
    %2120 = vrot.lane.b32.xlu0 %v2102, 32
    %v2121 = vpop.permute.xlu0 %2120
    %2122 = vrot.lane.b32.xlu0 %v2103, 32
    %v2123 = vpop.permute.xlu0 %2122
    %2124 = vrot.lane.b32.xlu0 %v2104, 32
    %v2125 = vpop.permute.xlu0 %2124
    %2126 = vrot.lane.b32.xlu0 %v2105, 32
    %v2127 = vpop.permute.xlu0 %2126
    %2128 = vrot.lane.b32.xlu0 %v2106, 32
    %v2129 = vpop.permute.xlu0 %2128
    %2130 = vrot.lane.b32.xlu0 %v2107, 32
    %v2131 = vpop.permute.xlu0 %2130
    %v2140 = vadd.f32 %v2060, %v2117
    %v2141 = vadd.f32 %v2061, %v2119
    %v2142 = vadd.f32 %v2062, %v2121
    %v2143 = vadd.f32 %v2063, %v2123
    %v2144 = vadd.f32 %v2064, %v2125
    %v2145 = vadd.f32 %v2065, %v2127
    %v2146 = vadd.f32 %v2066, %v2129
    %v2147 = vadd.f32 %v2067, %v2131
    %v2148 = vtanh.pop %v2140
    %v2149 = vtanh.pop %v2141
    %v2150 = vtanh.pop %v2142
    %v2151 = vtanh.pop %v2143
    %v2152 = vtanh.pop %v2144
    %v2153 = vtanh.pop %v2145
    %v2154 = vtanh.pop %v2146
    %v2155 = vtanh.pop %v2147
    %2164 = vrot.lane.b32.xlu0 %v2148, 64
    %v2165 = vpop.permute.xlu0 %2164
    %2166 = vrot.lane.b32.xlu0 %v2149, 64
    %v2167 = vpop.permute.xlu0 %2166
    %2168 = vrot.lane.b32.xlu0 %v2150, 64
    %v2169 = vpop.permute.xlu0 %2168
    %2170 = vrot.lane.b32.xlu0 %v2151, 64
    %v2171 = vpop.permute.xlu0 %2170
    %2172 = vrot.lane.b32.xlu0 %v2152, 64
    %v2173 = vpop.permute.xlu0 %2172
    %2174 = vrot.lane.b32.xlu0 %v2153, 64
    %v2175 = vpop.permute.xlu0 %2174
    %2176 = vrot.lane.b32.xlu0 %v2154, 64
    %v2177 = vpop.permute.xlu0 %2176
    %2178 = vrot.lane.b32.xlu0 %v2155, 64
    %v2179 = vpop.permute.xlu0 %2178
    %v2188 = vmul.f32 %v2020, %v2165
    %v2189 = vmul.f32 %v2021, %v2167
    %v2190 = vmul.f32 %v2022, %v2169
    %v2191 = vmul.f32 %v2023, %v2171
    %v2192 = vmul.f32 %v2024, %v2173
    %v2193 = vmul.f32 %v2025, %v2175
    %v2194 = vmul.f32 %v2026, %v2177
    %v2195 = vmul.f32 %v2027, %v2179
    %v2204 = vrot.slane %v2188, 3
    %v2205 = vrot.slane %v2189, 2
    %v2206 = vsel %vm1929, %v2205, %v2204
    %v2207 = vrot.slane %v2190, 1
    %v2208 = vsel %vm1931, %v2207, %v2206
    %v2209 = vsel %vm1934, %v2191, %v2208
    %v2210 = vrot.slane %v2192, 7
    %v2211 = vsel %vm1937, %v2210, %v2209
    %v2212 = vrot.slane %v2193, 6
    %v2213 = vsel %vm1940, %v2212, %v2211
    %v2214 = vrot.slane %v2194, 5
    %v2215 = vsel %vm1943, %v2214, %v2213
    %v2216 = vrot.slane %v2195, 4
    %v2217 = vsel %vm1946, %v2216, %v2215
    %2218 = vrot.lane.b32.xlu0 %v2217, 32
    %v2219 = vpop.permute.xlu0 %2218
    %v2220 = vsel %vm1507, %v2219, 0
    %2222 = vmatpush.msra.mxu0 0.0
    %2223 = vmatpush.msra.mxu0 0.0
    %2224 = vmatpush.msra.mxu0 0.0
    %2225 = vmatpush.msra.mxu0 0.0
    %2226 = vmatpush.msra.mxu0 0.0
    %2227 = vmatpush.msra.mxu0 0.0
    %2228 = vmatpush.msra.mxu0 0.0
    %2229 = vmatpush.msra.mxu0 0.0
    %2230 = vmatpush.msra.mxu0 0.0
    %2231 = vmatpush.msra.mxu0 0.0
    %2232 = vmatpush.msra.mxu0 0.0
    %2233 = vmatpush.msra.mxu0 0.0
    %2234 = vmatpush.msra.mxu0 %v1695
    %2235 = vmatpush.msra.mxu0 %v1694
    %2236 = vmatpush.msra.mxu0 %v1693
    %2237 = vmatpush.msra.mxu0 %v1692
    %2238 = vmatmul.f32.gmra.mxu0 %v2220
    %v2239 = vpop.f32.mrf.mxu0
    %v2240 = vadd.f32 0.0, %v2239
    %2241 = vdwg.mxu0
    %v2243 = vrot.slane %v2240, 4
    %v2244 = vrot.slane %v2240, 5
    %v2245 = vrot.slane %v2240, 6
    %v2246 = vrot.slane %v2240, 7
    %v2247 = vrot.slane %v2240, 1
    %v2248 = vrot.slane %v2240, 2
    %v2249 = vrot.slane %v2240, 3
    %v2258 = vadd.f32 %v1621, %v2243
    %v2259 = vadd.f32 %v1630, %v2244
    %v2260 = vadd.f32 %v1639, %v2245
    %v2261 = vadd.f32 %v1648, %v2246
    %v2262 = vadd.f32 %v1657, %v2240
    %v2263 = vadd.f32 %v1666, %v2247
    %v2264 = vadd.f32 %v1675, %v2248
    %v2265 = vadd.f32 %v1684, %v2249
    %v2266 = vmul.f32 %v2258, 0.5
    %v2267 = vmul.f32 %v2259, 0.5
    %v2268 = vmul.f32 %v2260, 0.5
    %v2269 = vmul.f32 %v2261, 0.5
    %v2270 = vmul.f32 %v2262, 0.5
    %v2271 = vmul.f32 %v2263, 0.5
    %v2272 = vmul.f32 %v2264, 0.5
    %v2273 = vmul.f32 %v2265, 0.5
    %v2274 = vtanh.pop %v2266
    %v2275 = vtanh.pop %v2267
    %v2276 = vtanh.pop %v2268
    %v2277 = vtanh.pop %v2269
    %v2278 = vtanh.pop %v2270
    %v2279 = vtanh.pop %v2271
    %v2280 = vtanh.pop %v2272
    %v2281 = vtanh.pop %v2273
    %v2282 = vadd.f32 %v2274, 1.0
    %v2283 = vadd.f32 %v2275, 1.0
    %v2284 = vadd.f32 %v2276, 1.0
    %v2285 = vadd.f32 %v2277, 1.0
    %v2286 = vadd.f32 %v2278, 1.0
    %v2287 = vadd.f32 %v2279, 1.0
    %v2288 = vadd.f32 %v2280, 1.0
    %v2289 = vadd.f32 %v2281, 1.0
    %v2290 = vmul.f32 %v2282, 0.5
    %v2291 = vmul.f32 %v2283, 0.5
    %v2292 = vmul.f32 %v2284, 0.5
    %v2293 = vmul.f32 %v2285, 0.5
    %v2294 = vmul.f32 %v2286, 0.5
    %v2295 = vmul.f32 %v2287, 0.5
    %v2296 = vmul.f32 %v2288, 0.5
    %v2297 = vmul.f32 %v2289, 0.5
    %v2298 = vtanh.pop %v2258
    %v2299 = vtanh.pop %v2259
    %v2300 = vtanh.pop %v2260
    %v2301 = vtanh.pop %v2261
    %v2302 = vtanh.pop %v2262
    %v2303 = vtanh.pop %v2263
    %v2304 = vtanh.pop %v2264
    %v2305 = vtanh.pop %v2265
    %v2314 = vrot.slane %v2140, 7
    %v2315 = vrot.slane %v2141, 7
    %v2316 = vrot.slane %v2142, 7
    %v2317 = vrot.slane %v2143, 7
    %v2318 = vrot.slane %v2144, 7
    %v2319 = vrot.slane %v2145, 7
    %v2320 = vrot.slane %v2146, 7
    %v2321 = vrot.slane %v2147, 7
    %v2330 = vmul.f32 %v2290, %v2314
    %v2331 = vmul.f32 %v2291, %v2315
    %v2332 = vmul.f32 %v2292, %v2316
    %v2333 = vmul.f32 %v2293, %v2317
    %v2334 = vmul.f32 %v2294, %v2318
    %v2335 = vmul.f32 %v2295, %v2319
    %v2336 = vmul.f32 %v2296, %v2320
    %v2337 = vmul.f32 %v2297, %v2321
    %2346 = vrot.lane.b32.xlu0 %v2298, 64
    %v2347 = vpop.permute.xlu0 %2346
    %2348 = vrot.lane.b32.xlu0 %v2299, 64
    %v2349 = vpop.permute.xlu0 %2348
    %2350 = vrot.lane.b32.xlu0 %v2300, 64
    %v2351 = vpop.permute.xlu0 %2350
    %2352 = vrot.lane.b32.xlu0 %v2301, 64
    %v2353 = vpop.permute.xlu0 %2352
    %2354 = vrot.lane.b32.xlu0 %v2302, 64
    %v2355 = vpop.permute.xlu0 %2354
    %2356 = vrot.lane.b32.xlu0 %v2303, 64
    %v2357 = vpop.permute.xlu0 %2356
    %2358 = vrot.lane.b32.xlu0 %v2304, 64
    %v2359 = vpop.permute.xlu0 %2358
    %2360 = vrot.lane.b32.xlu0 %v2305, 64
    %v2361 = vpop.permute.xlu0 %2360
    %v2370 = vmul.f32 %v2290, %v2347
    %v2371 = vmul.f32 %v2291, %v2349
    %v2372 = vmul.f32 %v2292, %v2351
    %v2373 = vmul.f32 %v2293, %v2353
    %v2374 = vmul.f32 %v2294, %v2355
    %v2375 = vmul.f32 %v2295, %v2357
    %v2376 = vmul.f32 %v2296, %v2359
    %v2377 = vmul.f32 %v2297, %v2361
    %2386 = vrot.lane.b32.xlu0 %v2370, 32
    %v2387 = vpop.permute.xlu0 %2386
    %2388 = vrot.lane.b32.xlu0 %v2371, 32
    %v2389 = vpop.permute.xlu0 %2388
    %2390 = vrot.lane.b32.xlu0 %v2372, 32
    %v2391 = vpop.permute.xlu0 %2390
    %2392 = vrot.lane.b32.xlu0 %v2373, 32
    %v2393 = vpop.permute.xlu0 %2392
    %2394 = vrot.lane.b32.xlu0 %v2374, 32
    %v2395 = vpop.permute.xlu0 %2394
    %2396 = vrot.lane.b32.xlu0 %v2375, 32
    %v2397 = vpop.permute.xlu0 %2396
    %2398 = vrot.lane.b32.xlu0 %v2376, 32
    %v2399 = vpop.permute.xlu0 %2398
    %2400 = vrot.lane.b32.xlu0 %v2377, 32
    %v2401 = vpop.permute.xlu0 %2400
    %v2410 = vadd.f32 %v2330, %v2387
    %v2411 = vadd.f32 %v2331, %v2389
    %v2412 = vadd.f32 %v2332, %v2391
    %v2413 = vadd.f32 %v2333, %v2393
    %v2414 = vadd.f32 %v2334, %v2395
    %v2415 = vadd.f32 %v2335, %v2397
    %v2416 = vadd.f32 %v2336, %v2399
    %v2417 = vadd.f32 %v2337, %v2401
    %v2418 = vtanh.pop %v2410
    %v2419 = vtanh.pop %v2411
    %v2420 = vtanh.pop %v2412
    %v2421 = vtanh.pop %v2413
    %v2422 = vtanh.pop %v2414
    %v2423 = vtanh.pop %v2415
    %v2424 = vtanh.pop %v2416
    %v2425 = vtanh.pop %v2417
    %2434 = vrot.lane.b32.xlu0 %v2418, 64
    %v2435 = vpop.permute.xlu0 %2434
    %2436 = vrot.lane.b32.xlu0 %v2419, 64
    %v2437 = vpop.permute.xlu0 %2436
    %2438 = vrot.lane.b32.xlu0 %v2420, 64
    %v2439 = vpop.permute.xlu0 %2438
    %2440 = vrot.lane.b32.xlu0 %v2421, 64
    %v2441 = vpop.permute.xlu0 %2440
    %2442 = vrot.lane.b32.xlu0 %v2422, 64
    %v2443 = vpop.permute.xlu0 %2442
    %2444 = vrot.lane.b32.xlu0 %v2423, 64
    %v2445 = vpop.permute.xlu0 %2444
    %2446 = vrot.lane.b32.xlu0 %v2424, 64
    %v2447 = vpop.permute.xlu0 %2446
    %2448 = vrot.lane.b32.xlu0 %v2425, 64
    %v2449 = vpop.permute.xlu0 %2448
    %v2458 = vmul.f32 %v2290, %v2435
    %v2459 = vmul.f32 %v2291, %v2437
    %v2460 = vmul.f32 %v2292, %v2439
    %v2461 = vmul.f32 %v2293, %v2441
    %v2462 = vmul.f32 %v2294, %v2443
    %v2463 = vmul.f32 %v2295, %v2445
    %v2464 = vmul.f32 %v2296, %v2447
    %v2465 = vmul.f32 %v2297, %v2449
    %v2474 = vrot.slane %v2458, 4
    %v2475 = vrot.slane %v2459, 3
    %v2476 = vsel %vm1929, %v2475, %v2474
    %v2477 = vrot.slane %v2460, 2
    %v2478 = vsel %vm1931, %v2477, %v2476
    %v2479 = vrot.slane %v2461, 1
    %v2480 = vsel %vm1934, %v2479, %v2478
    %v2481 = vsel %vm1937, %v2462, %v2480
    %v2482 = vrot.slane %v2463, 7
    %v2483 = vsel %vm1940, %v2482, %v2481
    %v2484 = vrot.slane %v2464, 6
    %v2485 = vsel %vm1943, %v2484, %v2483
    %v2486 = vrot.slane %v2465, 5
    %v2487 = vsel %vm1946, %v2486, %v2485
    %2488 = vrot.lane.b32.xlu0 %v2487, 32
    %v2489 = vpop.permute.xlu0 %2488
    %v2490 = vsel %vm1507, %v2489, 0
    %2492 = vmatpush.msra.mxu0 0.0
    %2493 = vmatpush.msra.mxu0 0.0
    %2494 = vmatpush.msra.mxu0 0.0
    %2495 = vmatpush.msra.mxu0 0.0
    %2496 = vmatpush.msra.mxu0 0.0
    %2497 = vmatpush.msra.mxu0 0.0
    %2498 = vmatpush.msra.mxu0 0.0
    %2499 = vmatpush.msra.mxu0 0.0
    %2500 = vmatpush.msra.mxu0 0.0
    %2501 = vmatpush.msra.mxu0 0.0
    %2502 = vmatpush.msra.mxu0 0.0
    %2503 = vmatpush.msra.mxu0 0.0
    %2504 = vmatpush.msra.mxu0 %v1695
    %2505 = vmatpush.msra.mxu0 %v1694
    %2506 = vmatpush.msra.mxu0 %v1693
    %2507 = vmatpush.msra.mxu0 %v1692
    %2508 = vmatmul.f32.gmra.mxu0 %v2490
    %v2509 = vpop.f32.mrf.mxu0
    %v2510 = vadd.f32 0.0, %v2509
    %2511 = vdwg.mxu0
    %v2513 = vrot.slane %v2510, 3
    %v2514 = vrot.slane %v2510, 4
    %v2515 = vrot.slane %v2510, 5
    %v2516 = vrot.slane %v2510, 6
    %v2517 = vrot.slane %v2510, 7
    %v2518 = vrot.slane %v2510, 1
    %v2519 = vrot.slane %v2510, 2
    %v2528 = vadd.f32 %v1621, %v2513
    %v2529 = vadd.f32 %v1630, %v2514
    %v2530 = vadd.f32 %v1639, %v2515
    %v2531 = vadd.f32 %v1648, %v2516
    %v2532 = vadd.f32 %v1657, %v2517
    %v2533 = vadd.f32 %v1666, %v2510
    %v2534 = vadd.f32 %v1675, %v2518
    %v2535 = vadd.f32 %v1684, %v2519
    %v2536 = vmul.f32 %v2528, 0.5
    %v2537 = vmul.f32 %v2529, 0.5
    %v2538 = vmul.f32 %v2530, 0.5
    %v2539 = vmul.f32 %v2531, 0.5
    %v2540 = vmul.f32 %v2532, 0.5
    %v2541 = vmul.f32 %v2533, 0.5
    %v2542 = vmul.f32 %v2534, 0.5
    %v2543 = vmul.f32 %v2535, 0.5
    %v2544 = vtanh.pop %v2536
    %v2545 = vtanh.pop %v2537
    %v2546 = vtanh.pop %v2538
    %v2547 = vtanh.pop %v2539
    %v2548 = vtanh.pop %v2540
    %v2549 = vtanh.pop %v2541
    %v2550 = vtanh.pop %v2542
    %v2551 = vtanh.pop %v2543
    %v2552 = vadd.f32 %v2544, 1.0
    %v2553 = vadd.f32 %v2545, 1.0
    %v2554 = vadd.f32 %v2546, 1.0
    %v2555 = vadd.f32 %v2547, 1.0
    %v2556 = vadd.f32 %v2548, 1.0
    %v2557 = vadd.f32 %v2549, 1.0
    %v2558 = vadd.f32 %v2550, 1.0
    %v2559 = vadd.f32 %v2551, 1.0
    %v2560 = vmul.f32 %v2552, 0.5
    %v2561 = vmul.f32 %v2553, 0.5
    %v2562 = vmul.f32 %v2554, 0.5
    %v2563 = vmul.f32 %v2555, 0.5
    %v2564 = vmul.f32 %v2556, 0.5
    %v2565 = vmul.f32 %v2557, 0.5
    %v2566 = vmul.f32 %v2558, 0.5
    %v2567 = vmul.f32 %v2559, 0.5
    %v2568 = vtanh.pop %v2528
    %v2569 = vtanh.pop %v2529
    %v2570 = vtanh.pop %v2530
    %v2571 = vtanh.pop %v2531
    %v2572 = vtanh.pop %v2532
    %v2573 = vtanh.pop %v2533
    %v2574 = vtanh.pop %v2534
    %v2575 = vtanh.pop %v2535
    %v2584 = vrot.slane %v2410, 7
    %v2585 = vrot.slane %v2411, 7
    %v2586 = vrot.slane %v2412, 7
    %v2587 = vrot.slane %v2413, 7
    %v2588 = vrot.slane %v2414, 7
    %v2589 = vrot.slane %v2415, 7
    %v2590 = vrot.slane %v2416, 7
    %v2591 = vrot.slane %v2417, 7
    %v2600 = vmul.f32 %v2560, %v2584
    %v2601 = vmul.f32 %v2561, %v2585
    %v2602 = vmul.f32 %v2562, %v2586
    %v2603 = vmul.f32 %v2563, %v2587
    %v2604 = vmul.f32 %v2564, %v2588
    %v2605 = vmul.f32 %v2565, %v2589
    %v2606 = vmul.f32 %v2566, %v2590
    %v2607 = vmul.f32 %v2567, %v2591
    %2616 = vrot.lane.b32.xlu0 %v2568, 64
    %v2617 = vpop.permute.xlu0 %2616
    %2618 = vrot.lane.b32.xlu0 %v2569, 64
    %v2619 = vpop.permute.xlu0 %2618
    %2620 = vrot.lane.b32.xlu0 %v2570, 64
    %v2621 = vpop.permute.xlu0 %2620
    %2622 = vrot.lane.b32.xlu0 %v2571, 64
    %v2623 = vpop.permute.xlu0 %2622
    %2624 = vrot.lane.b32.xlu0 %v2572, 64
    %v2625 = vpop.permute.xlu0 %2624
    %2626 = vrot.lane.b32.xlu0 %v2573, 64
    %v2627 = vpop.permute.xlu0 %2626
    %2628 = vrot.lane.b32.xlu0 %v2574, 64
    %v2629 = vpop.permute.xlu0 %2628
    %2630 = vrot.lane.b32.xlu0 %v2575, 64
    %v2631 = vpop.permute.xlu0 %2630
    %v2640 = vmul.f32 %v2560, %v2617
    %v2641 = vmul.f32 %v2561, %v2619
    %v2642 = vmul.f32 %v2562, %v2621
    %v2643 = vmul.f32 %v2563, %v2623
    %v2644 = vmul.f32 %v2564, %v2625
    %v2645 = vmul.f32 %v2565, %v2627
    %v2646 = vmul.f32 %v2566, %v2629
    %v2647 = vmul.f32 %v2567, %v2631
    %2656 = vrot.lane.b32.xlu0 %v2640, 32
    %v2657 = vpop.permute.xlu0 %2656
    %2658 = vrot.lane.b32.xlu0 %v2641, 32
    %v2659 = vpop.permute.xlu0 %2658
    %2660 = vrot.lane.b32.xlu0 %v2642, 32
    %v2661 = vpop.permute.xlu0 %2660
    %2662 = vrot.lane.b32.xlu0 %v2643, 32
    %v2663 = vpop.permute.xlu0 %2662
    %2664 = vrot.lane.b32.xlu0 %v2644, 32
    %v2665 = vpop.permute.xlu0 %2664
    %2666 = vrot.lane.b32.xlu0 %v2645, 32
    %v2667 = vpop.permute.xlu0 %2666
    %2668 = vrot.lane.b32.xlu0 %v2646, 32
    %v2669 = vpop.permute.xlu0 %2668
    %2670 = vrot.lane.b32.xlu0 %v2647, 32
    %v2671 = vpop.permute.xlu0 %2670
    %v2680 = vadd.f32 %v2600, %v2657
    %v2681 = vadd.f32 %v2601, %v2659
    %v2682 = vadd.f32 %v2602, %v2661
    %v2683 = vadd.f32 %v2603, %v2663
    %v2684 = vadd.f32 %v2604, %v2665
    %v2685 = vadd.f32 %v2605, %v2667
    %v2686 = vadd.f32 %v2606, %v2669
    %v2687 = vadd.f32 %v2607, %v2671
    %v2688 = vtanh.pop %v2680
    %v2689 = vtanh.pop %v2681
    %v2690 = vtanh.pop %v2682
    %v2691 = vtanh.pop %v2683
    %v2692 = vtanh.pop %v2684
    %v2693 = vtanh.pop %v2685
    %v2694 = vtanh.pop %v2686
    %v2695 = vtanh.pop %v2687
    %2704 = vrot.lane.b32.xlu0 %v2688, 64
    %v2705 = vpop.permute.xlu0 %2704
    %2706 = vrot.lane.b32.xlu0 %v2689, 64
    %v2707 = vpop.permute.xlu0 %2706
    %2708 = vrot.lane.b32.xlu0 %v2690, 64
    %v2709 = vpop.permute.xlu0 %2708
    %2710 = vrot.lane.b32.xlu0 %v2691, 64
    %v2711 = vpop.permute.xlu0 %2710
    %2712 = vrot.lane.b32.xlu0 %v2692, 64
    %v2713 = vpop.permute.xlu0 %2712
    %2714 = vrot.lane.b32.xlu0 %v2693, 64
    %v2715 = vpop.permute.xlu0 %2714
    %2716 = vrot.lane.b32.xlu0 %v2694, 64
    %v2717 = vpop.permute.xlu0 %2716
    %2718 = vrot.lane.b32.xlu0 %v2695, 64
    %v2719 = vpop.permute.xlu0 %2718
    %v2728 = vmul.f32 %v2560, %v2705
    %v2729 = vmul.f32 %v2561, %v2707
    %v2730 = vmul.f32 %v2562, %v2709
    %v2731 = vmul.f32 %v2563, %v2711
    %v2732 = vmul.f32 %v2564, %v2713
    %v2733 = vmul.f32 %v2565, %v2715
    %v2734 = vmul.f32 %v2566, %v2717
    %v2735 = vmul.f32 %v2567, %v2719
    %v2744 = vrot.slane %v2728, 5
    %v2745 = vrot.slane %v2729, 4
    %v2746 = vsel %vm1929, %v2745, %v2744
    %v2747 = vrot.slane %v2730, 3
    %v2748 = vsel %vm1931, %v2747, %v2746
    %v2749 = vrot.slane %v2731, 2
    %v2750 = vsel %vm1934, %v2749, %v2748
    %v2751 = vrot.slane %v2732, 1
    %v2752 = vsel %vm1937, %v2751, %v2750
    %v2753 = vsel %vm1940, %v2733, %v2752
    %v2754 = vrot.slane %v2734, 7
    %v2755 = vsel %vm1943, %v2754, %v2753
    %v2756 = vrot.slane %v2735, 6
    %v2757 = vsel %vm1946, %v2756, %v2755
    %2758 = vrot.lane.b32.xlu0 %v2757, 32
    %v2759 = vpop.permute.xlu0 %2758
    %v2760 = vsel %vm1507, %v2759, 0
    %2762 = vmatpush.msra.mxu0 0.0
    %2763 = vmatpush.msra.mxu0 0.0
    %2764 = vmatpush.msra.mxu0 0.0
    %2765 = vmatpush.msra.mxu0 0.0
    %2766 = vmatpush.msra.mxu0 0.0
    %2767 = vmatpush.msra.mxu0 0.0
    %2768 = vmatpush.msra.mxu0 0.0
    %2769 = vmatpush.msra.mxu0 0.0
    %2770 = vmatpush.msra.mxu0 0.0
    %2771 = vmatpush.msra.mxu0 0.0
    %2772 = vmatpush.msra.mxu0 0.0
    %2773 = vmatpush.msra.mxu0 0.0
    %2774 = vmatpush.msra.mxu0 %v1695
    %2775 = vmatpush.msra.mxu0 %v1694
    %2776 = vmatpush.msra.mxu0 %v1693
    %2777 = vmatpush.msra.mxu0 %v1692
    %2778 = vmatmul.f32.gmra.mxu0 %v2760
    %v2779 = vpop.f32.mrf.mxu0
    %v2780 = vadd.f32 0.0, %v2779
    %2781 = vdwg.mxu0
    %v2783 = vrot.slane %v2780, 2
    %v2784 = vrot.slane %v2780, 3
    %v2785 = vrot.slane %v2780, 4
    %v2786 = vrot.slane %v2780, 5
    %v2787 = vrot.slane %v2780, 6
    %v2788 = vrot.slane %v2780, 7
    %v2789 = vrot.slane %v2780, 1
    %v2798 = vadd.f32 %v1621, %v2783
    %v2799 = vadd.f32 %v1630, %v2784
    %v2800 = vadd.f32 %v1639, %v2785
    %v2801 = vadd.f32 %v1648, %v2786
    %v2802 = vadd.f32 %v1657, %v2787
    %v2803 = vadd.f32 %v1666, %v2788
    %v2804 = vadd.f32 %v1675, %v2780
    %v2805 = vadd.f32 %v1684, %v2789
    %v2806 = vmul.f32 %v2798, 0.5
    %v2807 = vmul.f32 %v2799, 0.5
    %v2808 = vmul.f32 %v2800, 0.5
    %v2809 = vmul.f32 %v2801, 0.5
    %v2810 = vmul.f32 %v2802, 0.5
    %v2811 = vmul.f32 %v2803, 0.5
    %v2812 = vmul.f32 %v2804, 0.5
    %v2813 = vmul.f32 %v2805, 0.5
    %v2814 = vtanh.pop %v2806
    %v2815 = vtanh.pop %v2807
    %v2816 = vtanh.pop %v2808
    %v2817 = vtanh.pop %v2809
    %v2818 = vtanh.pop %v2810
    %v2819 = vtanh.pop %v2811
    %v2820 = vtanh.pop %v2812
    %v2821 = vtanh.pop %v2813
    %v2822 = vadd.f32 %v2814, 1.0
    %v2823 = vadd.f32 %v2815, 1.0
    %v2824 = vadd.f32 %v2816, 1.0
    %v2825 = vadd.f32 %v2817, 1.0
    %v2826 = vadd.f32 %v2818, 1.0
    %v2827 = vadd.f32 %v2819, 1.0
    %v2828 = vadd.f32 %v2820, 1.0
    %v2829 = vadd.f32 %v2821, 1.0
    %v2830 = vmul.f32 %v2822, 0.5
    %v2831 = vmul.f32 %v2823, 0.5
    %v2832 = vmul.f32 %v2824, 0.5
    %v2833 = vmul.f32 %v2825, 0.5
    %v2834 = vmul.f32 %v2826, 0.5
    %v2835 = vmul.f32 %v2827, 0.5
    %v2836 = vmul.f32 %v2828, 0.5
    %v2837 = vmul.f32 %v2829, 0.5
    %v2838 = vtanh.pop %v2798
    %v2839 = vtanh.pop %v2799
    %v2840 = vtanh.pop %v2800
    %v2841 = vtanh.pop %v2801
    %v2842 = vtanh.pop %v2802
    %v2843 = vtanh.pop %v2803
    %v2844 = vtanh.pop %v2804
    %v2845 = vtanh.pop %v2805
    %v2854 = vrot.slane %v2680, 7
    %v2855 = vrot.slane %v2681, 7
    %v2856 = vrot.slane %v2682, 7
    %v2857 = vrot.slane %v2683, 7
    %v2858 = vrot.slane %v2684, 7
    %v2859 = vrot.slane %v2685, 7
    %v2860 = vrot.slane %v2686, 7
    %v2861 = vrot.slane %v2687, 7
    %v2870 = vmul.f32 %v2830, %v2854
    %v2871 = vmul.f32 %v2831, %v2855
    %v2872 = vmul.f32 %v2832, %v2856
    %v2873 = vmul.f32 %v2833, %v2857
    %v2874 = vmul.f32 %v2834, %v2858
    %v2875 = vmul.f32 %v2835, %v2859
    %v2876 = vmul.f32 %v2836, %v2860
    %v2877 = vmul.f32 %v2837, %v2861
    %2886 = vrot.lane.b32.xlu0 %v2838, 64
    %v2887 = vpop.permute.xlu0 %2886
    %2888 = vrot.lane.b32.xlu0 %v2839, 64
    %v2889 = vpop.permute.xlu0 %2888
    %2890 = vrot.lane.b32.xlu0 %v2840, 64
    %v2891 = vpop.permute.xlu0 %2890
    %2892 = vrot.lane.b32.xlu0 %v2841, 64
    %v2893 = vpop.permute.xlu0 %2892
    %2894 = vrot.lane.b32.xlu0 %v2842, 64
    %v2895 = vpop.permute.xlu0 %2894
    %2896 = vrot.lane.b32.xlu0 %v2843, 64
    %v2897 = vpop.permute.xlu0 %2896
    %2898 = vrot.lane.b32.xlu0 %v2844, 64
    %v2899 = vpop.permute.xlu0 %2898
    %2900 = vrot.lane.b32.xlu0 %v2845, 64
    %v2901 = vpop.permute.xlu0 %2900
    %v2910 = vmul.f32 %v2830, %v2887
    %v2911 = vmul.f32 %v2831, %v2889
    %v2912 = vmul.f32 %v2832, %v2891
    %v2913 = vmul.f32 %v2833, %v2893
    %v2914 = vmul.f32 %v2834, %v2895
    %v2915 = vmul.f32 %v2835, %v2897
    %v2916 = vmul.f32 %v2836, %v2899
    %v2917 = vmul.f32 %v2837, %v2901
    %2926 = vrot.lane.b32.xlu0 %v2910, 32
    %v2927 = vpop.permute.xlu0 %2926
    %2928 = vrot.lane.b32.xlu0 %v2911, 32
    %v2929 = vpop.permute.xlu0 %2928
    %2930 = vrot.lane.b32.xlu0 %v2912, 32
    %v2931 = vpop.permute.xlu0 %2930
    %2932 = vrot.lane.b32.xlu0 %v2913, 32
    %v2933 = vpop.permute.xlu0 %2932
    %2934 = vrot.lane.b32.xlu0 %v2914, 32
    %v2935 = vpop.permute.xlu0 %2934
    %2936 = vrot.lane.b32.xlu0 %v2915, 32
    %v2937 = vpop.permute.xlu0 %2936
    %2938 = vrot.lane.b32.xlu0 %v2916, 32
    %v2939 = vpop.permute.xlu0 %2938
    %2940 = vrot.lane.b32.xlu0 %v2917, 32
    %v2941 = vpop.permute.xlu0 %2940
    %v2950 = vadd.f32 %v2870, %v2927
    %v2951 = vadd.f32 %v2871, %v2929
    %v2952 = vadd.f32 %v2872, %v2931
    %v2953 = vadd.f32 %v2873, %v2933
    %v2954 = vadd.f32 %v2874, %v2935
    %v2955 = vadd.f32 %v2875, %v2937
    %v2956 = vadd.f32 %v2876, %v2939
    %v2957 = vadd.f32 %v2877, %v2941
    %v2958 = vtanh.pop %v2950
    %v2959 = vtanh.pop %v2951
    %v2960 = vtanh.pop %v2952
    %v2961 = vtanh.pop %v2953
    %v2962 = vtanh.pop %v2954
    %v2963 = vtanh.pop %v2955
    %v2964 = vtanh.pop %v2956
    %v2965 = vtanh.pop %v2957
    %2974 = vrot.lane.b32.xlu0 %v2958, 64
    %v2975 = vpop.permute.xlu0 %2974
    %2976 = vrot.lane.b32.xlu0 %v2959, 64
    %v2977 = vpop.permute.xlu0 %2976
    %2978 = vrot.lane.b32.xlu0 %v2960, 64
    %v2979 = vpop.permute.xlu0 %2978
    %2980 = vrot.lane.b32.xlu0 %v2961, 64
    %v2981 = vpop.permute.xlu0 %2980
    %2982 = vrot.lane.b32.xlu0 %v2962, 64
    %v2983 = vpop.permute.xlu0 %2982
    %2984 = vrot.lane.b32.xlu0 %v2963, 64
    %v2985 = vpop.permute.xlu0 %2984
    %2986 = vrot.lane.b32.xlu0 %v2964, 64
    %v2987 = vpop.permute.xlu0 %2986
    %2988 = vrot.lane.b32.xlu0 %v2965, 64
    %v2989 = vpop.permute.xlu0 %2988
    %v2998 = vmul.f32 %v2830, %v2975
    %v2999 = vmul.f32 %v2831, %v2977
    %v3000 = vmul.f32 %v2832, %v2979
    %v3001 = vmul.f32 %v2833, %v2981
    %v3002 = vmul.f32 %v2834, %v2983
    %v3003 = vmul.f32 %v2835, %v2985
    %v3004 = vmul.f32 %v2836, %v2987
    %v3005 = vmul.f32 %v2837, %v2989
    %v3014 = vrot.slane %v2998, 6
    %v3015 = vrot.slane %v2999, 5
    %v3016 = vsel %vm1929, %v3015, %v3014
    %v3017 = vrot.slane %v3000, 4
    %v3018 = vsel %vm1931, %v3017, %v3016
    %v3019 = vrot.slane %v3001, 3
    %v3020 = vsel %vm1934, %v3019, %v3018
    %v3021 = vrot.slane %v3002, 2
    %v3022 = vsel %vm1937, %v3021, %v3020
    %v3023 = vrot.slane %v3003, 1
    %v3024 = vsel %vm1940, %v3023, %v3022
    %v3025 = vsel %vm1943, %v3004, %v3024
    %v3026 = vrot.slane %v3005, 7
    %v3027 = vsel %vm1946, %v3026, %v3025
    %3028 = vrot.lane.b32.xlu0 %v3027, 32
    %v3029 = vpop.permute.xlu0 %3028
    %v3030 = vsel %vm1507, %v3029, 0
    %3032 = vmatpush.msra.mxu0 0.0
    %3033 = vmatpush.msra.mxu0 0.0
    %3034 = vmatpush.msra.mxu0 0.0
    %3035 = vmatpush.msra.mxu0 0.0
    %3036 = vmatpush.msra.mxu0 0.0
    %3037 = vmatpush.msra.mxu0 0.0
    %3038 = vmatpush.msra.mxu0 0.0
    %3039 = vmatpush.msra.mxu0 0.0
    %3040 = vmatpush.msra.mxu0 0.0
    %3041 = vmatpush.msra.mxu0 0.0
    %3042 = vmatpush.msra.mxu0 0.0
    %3043 = vmatpush.msra.mxu0 0.0
    %3044 = vmatpush.msra.mxu0 %v1695
    %3045 = vmatpush.msra.mxu0 %v1694
    %3046 = vmatpush.msra.mxu0 %v1693
    %3047 = vmatpush.msra.mxu0 %v1692
    %3048 = vmatmul.f32.gmra.mxu0 %v3030
    %v3049 = vpop.f32.mrf.mxu0
    %v3050 = vadd.f32 0.0, %v3049
    %3051 = vdwg.mxu0
    %v3053 = vrot.slane %v3050, 1
    %v3054 = vrot.slane %v3050, 2
    %v3055 = vrot.slane %v3050, 3
    %v3056 = vrot.slane %v3050, 4
    %v3057 = vrot.slane %v3050, 5
    %v3058 = vrot.slane %v3050, 6
    %v3059 = vrot.slane %v3050, 7
    %v3068 = vadd.f32 %v1621, %v3053
    %v3069 = vadd.f32 %v1630, %v3054
    %v3070 = vadd.f32 %v1639, %v3055
    %v3071 = vadd.f32 %v1648, %v3056
    %v3072 = vadd.f32 %v1657, %v3057
    %v3073 = vadd.f32 %v1666, %v3058
    %v3074 = vadd.f32 %v1675, %v3059
    %v3075 = vadd.f32 %v1684, %v3050
    %v3076 = vmul.f32 %v3068, 0.5
    %v3077 = vmul.f32 %v3069, 0.5
    %v3078 = vmul.f32 %v3070, 0.5
    %v3079 = vmul.f32 %v3071, 0.5
    %v3080 = vmul.f32 %v3072, 0.5
    %v3081 = vmul.f32 %v3073, 0.5
    %v3082 = vmul.f32 %v3074, 0.5
    %v3083 = vmul.f32 %v3075, 0.5
    %v3084 = vtanh.pop %v3076
    %v3085 = vtanh.pop %v3077
    %v3086 = vtanh.pop %v3078
    %v3087 = vtanh.pop %v3079
    %v3088 = vtanh.pop %v3080
    %v3089 = vtanh.pop %v3081
    %v3090 = vtanh.pop %v3082
    %v3091 = vtanh.pop %v3083
    %v3092 = vadd.f32 %v3084, 1.0
    %v3093 = vadd.f32 %v3085, 1.0
    %v3094 = vadd.f32 %v3086, 1.0
    %v3095 = vadd.f32 %v3087, 1.0
    %v3096 = vadd.f32 %v3088, 1.0
    %v3097 = vadd.f32 %v3089, 1.0
    %v3098 = vadd.f32 %v3090, 1.0
    %v3099 = vadd.f32 %v3091, 1.0
    %v3100 = vmul.f32 %v3092, 0.5
    %v3101 = vmul.f32 %v3093, 0.5
    %v3102 = vmul.f32 %v3094, 0.5
    %v3103 = vmul.f32 %v3095, 0.5
    %v3104 = vmul.f32 %v3096, 0.5
    %v3105 = vmul.f32 %v3097, 0.5
    %v3106 = vmul.f32 %v3098, 0.5
    %v3107 = vmul.f32 %v3099, 0.5
    %v3108 = vtanh.pop %v3068
    %v3109 = vtanh.pop %v3069
    %v3110 = vtanh.pop %v3070
    %v3111 = vtanh.pop %v3071
    %v3112 = vtanh.pop %v3072
    %v3113 = vtanh.pop %v3073
    %v3114 = vtanh.pop %v3074
    %v3115 = vtanh.pop %v3075
    %v3124 = vrot.slane %v2950, 7
    %v3125 = vrot.slane %v2951, 7
    %v3126 = vrot.slane %v2952, 7
    %v3127 = vrot.slane %v2953, 7
    %v3128 = vrot.slane %v2954, 7
    %v3129 = vrot.slane %v2955, 7
    %v3130 = vrot.slane %v2956, 7
    %v3131 = vrot.slane %v2957, 7
    %v3140 = vmul.f32 %v3100, %v3124
    %v3141 = vmul.f32 %v3101, %v3125
    %v3142 = vmul.f32 %v3102, %v3126
    %v3143 = vmul.f32 %v3103, %v3127
    %v3144 = vmul.f32 %v3104, %v3128
    %v3145 = vmul.f32 %v3105, %v3129
    %v3146 = vmul.f32 %v3106, %v3130
    %v3147 = vmul.f32 %v3107, %v3131
    %3156 = vrot.lane.b32.xlu0 %v3108, 64
    %v3157 = vpop.permute.xlu0 %3156
    %3158 = vrot.lane.b32.xlu0 %v3109, 64
    %v3159 = vpop.permute.xlu0 %3158
    %3160 = vrot.lane.b32.xlu0 %v3110, 64
    %v3161 = vpop.permute.xlu0 %3160
    %3162 = vrot.lane.b32.xlu0 %v3111, 64
    %v3163 = vpop.permute.xlu0 %3162
    %3164 = vrot.lane.b32.xlu0 %v3112, 64
    %v3165 = vpop.permute.xlu0 %3164
    %3166 = vrot.lane.b32.xlu0 %v3113, 64
    %v3167 = vpop.permute.xlu0 %3166
    %3168 = vrot.lane.b32.xlu0 %v3114, 64
    %v3169 = vpop.permute.xlu0 %3168
    %3170 = vrot.lane.b32.xlu0 %v3115, 64
    %v3171 = vpop.permute.xlu0 %3170
    %v3180 = vmul.f32 %v3100, %v3157
    %v3181 = vmul.f32 %v3101, %v3159
    %v3182 = vmul.f32 %v3102, %v3161
    %v3183 = vmul.f32 %v3103, %v3163
    %v3184 = vmul.f32 %v3104, %v3165
    %v3185 = vmul.f32 %v3105, %v3167
    %v3186 = vmul.f32 %v3106, %v3169
    %v3187 = vmul.f32 %v3107, %v3171
    %3196 = vrot.lane.b32.xlu0 %v3180, 32
    %v3197 = vpop.permute.xlu0 %3196
    %3198 = vrot.lane.b32.xlu0 %v3181, 32
    %v3199 = vpop.permute.xlu0 %3198
    %3200 = vrot.lane.b32.xlu0 %v3182, 32
    %v3201 = vpop.permute.xlu0 %3200
    %3202 = vrot.lane.b32.xlu0 %v3183, 32
    %v3203 = vpop.permute.xlu0 %3202
    %3204 = vrot.lane.b32.xlu0 %v3184, 32
    %v3205 = vpop.permute.xlu0 %3204
    %3206 = vrot.lane.b32.xlu0 %v3185, 32
    %v3207 = vpop.permute.xlu0 %3206
    %3208 = vrot.lane.b32.xlu0 %v3186, 32
    %v3209 = vpop.permute.xlu0 %3208
    %3210 = vrot.lane.b32.xlu0 %v3187, 32
    %v3211 = vpop.permute.xlu0 %3210
    %v3220 = vadd.f32 %v3140, %v3197
    %v3221 = vadd.f32 %v3141, %v3199
    %v3222 = vadd.f32 %v3142, %v3201
    %v3223 = vadd.f32 %v3143, %v3203
    %v3224 = vadd.f32 %v3144, %v3205
    %v3225 = vadd.f32 %v3145, %v3207
    %v3226 = vadd.f32 %v3146, %v3209
    %v3227 = vadd.f32 %v3147, %v3211
    %v3228 = vtanh.pop %v3220
    %v3229 = vtanh.pop %v3221
    %v3230 = vtanh.pop %v3222
    %v3231 = vtanh.pop %v3223
    %v3232 = vtanh.pop %v3224
    %v3233 = vtanh.pop %v3225
    %v3234 = vtanh.pop %v3226
    %v3235 = vtanh.pop %v3227
    %3244 = vrot.lane.b32.xlu0 %v3228, 64
    %v3245 = vpop.permute.xlu0 %3244
    %3246 = vrot.lane.b32.xlu0 %v3229, 64
    %v3247 = vpop.permute.xlu0 %3246
    %3248 = vrot.lane.b32.xlu0 %v3230, 64
    %v3249 = vpop.permute.xlu0 %3248
    %3250 = vrot.lane.b32.xlu0 %v3231, 64
    %v3251 = vpop.permute.xlu0 %3250
    %3252 = vrot.lane.b32.xlu0 %v3232, 64
    %v3253 = vpop.permute.xlu0 %3252
    %3254 = vrot.lane.b32.xlu0 %v3233, 64
    %v3255 = vpop.permute.xlu0 %3254
    %3256 = vrot.lane.b32.xlu0 %v3234, 64
    %v3257 = vpop.permute.xlu0 %3256
    %3258 = vrot.lane.b32.xlu0 %v3235, 64
    %v3259 = vpop.permute.xlu0 %3258
    %v3268 = vmul.f32 %v3100, %v3245
    %v3269 = vmul.f32 %v3101, %v3247
    %v3270 = vmul.f32 %v3102, %v3249
    %v3271 = vmul.f32 %v3103, %v3251
    %v3272 = vmul.f32 %v3104, %v3253
    %v3273 = vmul.f32 %v3105, %v3255
    %v3274 = vmul.f32 %v3106, %v3257
    %v3275 = vmul.f32 %v3107, %v3259
    %v3284 = vrot.slane %v3268, 7
    %v3285 = vrot.slane %v3269, 6
    %v3286 = vsel %vm1929, %v3285, %v3284
    %v3287 = vrot.slane %v3270, 5
    %v3288 = vsel %vm1931, %v3287, %v3286
    %v3289 = vrot.slane %v3271, 4
    %v3290 = vsel %vm1934, %v3289, %v3288
    %v3291 = vrot.slane %v3272, 3
    %v3292 = vsel %vm1937, %v3291, %v3290
    %v3293 = vrot.slane %v3273, 2
    %v3294 = vsel %vm1940, %v3293, %v3292
    %v3295 = vrot.slane %v3274, 1
    %v3296 = vsel %vm1943, %v3295, %v3294
    %v3297 = vsel %vm1946, %v3275, %v3296
    %3298 = vrot.lane.b32.xlu0 %v3297, 32
    %v3299 = vpop.permute.xlu0 %3298
    %v3300 = vsel %vm1507, %v3299, 0
    %3302 = vmatpush.msra.mxu0 0.0
    %3303 = vmatpush.msra.mxu0 0.0
    %3304 = vmatpush.msra.mxu0 0.0
    %3305 = vmatpush.msra.mxu0 0.0
    %3306 = vmatpush.msra.mxu0 0.0
    %3307 = vmatpush.msra.mxu0 0.0
    %3308 = vmatpush.msra.mxu0 0.0
    %3309 = vmatpush.msra.mxu0 0.0
    %3310 = vmatpush.msra.mxu0 0.0
    %3311 = vmatpush.msra.mxu0 0.0
    %3312 = vmatpush.msra.mxu0 0.0
    %3313 = vmatpush.msra.mxu0 0.0
    %3314 = vmatpush.msra.mxu0 %v1695
    %3315 = vmatpush.msra.mxu0 %v1694
    %3316 = vmatpush.msra.mxu0 %v1693
    %3317 = vmatpush.msra.mxu0 %v1692
    %3318 = vmatmul.f32.gmra.mxu0 %v3300
    %v3319 = vpop.f32.mrf.mxu0
    %v3320 = vadd.f32 0.0, %v3319
    %3321 = vdwg.mxu0
    %v3323 = vrot.slane %v3320, 1
    %v3324 = vrot.slane %v3320, 2
    %v3325 = vrot.slane %v3320, 3
    %v3326 = vrot.slane %v3320, 4
    %v3327 = vrot.slane %v3320, 5
    %v3328 = vrot.slane %v3320, 6
    %v3329 = vrot.slane %v3320, 7
    %v3338 = vadd.f32 %v1624, %v3320
    %v3339 = vadd.f32 %v1633, %v3323
    %v3340 = vadd.f32 %v1642, %v3324
    %v3341 = vadd.f32 %v1651, %v3325
    %v3342 = vadd.f32 %v1660, %v3326
    %v3343 = vadd.f32 %v1669, %v3327
    %v3344 = vadd.f32 %v1678, %v3328
    %v3345 = vadd.f32 %v1687, %v3329
    %v3346 = vmul.f32 %v3338, 0.5
    %v3347 = vmul.f32 %v3339, 0.5
    %v3348 = vmul.f32 %v3340, 0.5
    %v3349 = vmul.f32 %v3341, 0.5
    %v3350 = vmul.f32 %v3342, 0.5
    %v3351 = vmul.f32 %v3343, 0.5
    %v3352 = vmul.f32 %v3344, 0.5
    %v3353 = vmul.f32 %v3345, 0.5
    %v3354 = vtanh.pop %v3346
    %v3355 = vtanh.pop %v3347
    %v3356 = vtanh.pop %v3348
    %v3357 = vtanh.pop %v3349
    %v3358 = vtanh.pop %v3350
    %v3359 = vtanh.pop %v3351
    %v3360 = vtanh.pop %v3352
    %v3361 = vtanh.pop %v3353
    %v3362 = vadd.f32 %v3354, 1.0
    %v3363 = vadd.f32 %v3355, 1.0
    %v3364 = vadd.f32 %v3356, 1.0
    %v3365 = vadd.f32 %v3357, 1.0
    %v3366 = vadd.f32 %v3358, 1.0
    %v3367 = vadd.f32 %v3359, 1.0
    %v3368 = vadd.f32 %v3360, 1.0
    %v3369 = vadd.f32 %v3361, 1.0
    %v3370 = vmul.f32 %v3362, 0.5
    %v3371 = vmul.f32 %v3363, 0.5
    %v3372 = vmul.f32 %v3364, 0.5
    %v3373 = vmul.f32 %v3365, 0.5
    %v3374 = vmul.f32 %v3366, 0.5
    %v3375 = vmul.f32 %v3367, 0.5
    %v3376 = vmul.f32 %v3368, 0.5
    %v3377 = vmul.f32 %v3369, 0.5
    %v3378 = vtanh.pop %v3338
    %v3379 = vtanh.pop %v3339
    %v3380 = vtanh.pop %v3340
    %v3381 = vtanh.pop %v3341
    %v3382 = vtanh.pop %v3342
    %v3383 = vtanh.pop %v3343
    %v3384 = vtanh.pop %v3344
    %v3385 = vtanh.pop %v3345
    %v3394 = vrot.slane %v3220, 7
    %v3395 = vrot.slane %v3221, 7
    %v3396 = vrot.slane %v3222, 7
    %v3397 = vrot.slane %v3223, 7
    %v3398 = vrot.slane %v3224, 7
    %v3399 = vrot.slane %v3225, 7
    %v3400 = vrot.slane %v3226, 7
    %v3401 = vrot.slane %v3227, 7
    %v3410 = vmul.f32 %v3370, %v3394
    %v3411 = vmul.f32 %v3371, %v3395
    %v3412 = vmul.f32 %v3372, %v3396
    %v3413 = vmul.f32 %v3373, %v3397
    %v3414 = vmul.f32 %v3374, %v3398
    %v3415 = vmul.f32 %v3375, %v3399
    %v3416 = vmul.f32 %v3376, %v3400
    %v3417 = vmul.f32 %v3377, %v3401
    %3426 = vrot.lane.b32.xlu0 %v3378, 64
    %v3427 = vpop.permute.xlu0 %3426
    %3428 = vrot.lane.b32.xlu0 %v3379, 64
    %v3429 = vpop.permute.xlu0 %3428
    %3430 = vrot.lane.b32.xlu0 %v3380, 64
    %v3431 = vpop.permute.xlu0 %3430
    %3432 = vrot.lane.b32.xlu0 %v3381, 64
    %v3433 = vpop.permute.xlu0 %3432
    %3434 = vrot.lane.b32.xlu0 %v3382, 64
    %v3435 = vpop.permute.xlu0 %3434
    %3436 = vrot.lane.b32.xlu0 %v3383, 64
    %v3437 = vpop.permute.xlu0 %3436
    %3438 = vrot.lane.b32.xlu0 %v3384, 64
    %v3439 = vpop.permute.xlu0 %3438
    %3440 = vrot.lane.b32.xlu0 %v3385, 64
    %v3441 = vpop.permute.xlu0 %3440
    %v3450 = vmul.f32 %v3370, %v3427
    %v3451 = vmul.f32 %v3371, %v3429
    %v3452 = vmul.f32 %v3372, %v3431
    %v3453 = vmul.f32 %v3373, %v3433
    %v3454 = vmul.f32 %v3374, %v3435
    %v3455 = vmul.f32 %v3375, %v3437
    %v3456 = vmul.f32 %v3376, %v3439
    %v3457 = vmul.f32 %v3377, %v3441
    %3466 = vrot.lane.b32.xlu0 %v3450, 32
    %v3467 = vpop.permute.xlu0 %3466
    %3468 = vrot.lane.b32.xlu0 %v3451, 32
    %v3469 = vpop.permute.xlu0 %3468
    %3470 = vrot.lane.b32.xlu0 %v3452, 32
    %v3471 = vpop.permute.xlu0 %3470
    %3472 = vrot.lane.b32.xlu0 %v3453, 32
    %v3473 = vpop.permute.xlu0 %3472
    %3474 = vrot.lane.b32.xlu0 %v3454, 32
    %v3475 = vpop.permute.xlu0 %3474
    %3476 = vrot.lane.b32.xlu0 %v3455, 32
    %v3477 = vpop.permute.xlu0 %3476
    %3478 = vrot.lane.b32.xlu0 %v3456, 32
    %v3479 = vpop.permute.xlu0 %3478
    %3480 = vrot.lane.b32.xlu0 %v3457, 32
    %v3481 = vpop.permute.xlu0 %3480
    %v3490 = vadd.f32 %v3410, %v3467
    %v3491 = vadd.f32 %v3411, %v3469
    %v3492 = vadd.f32 %v3412, %v3471
    %v3493 = vadd.f32 %v3413, %v3473
    %v3494 = vadd.f32 %v3414, %v3475
    %v3495 = vadd.f32 %v3415, %v3477
    %v3496 = vadd.f32 %v3416, %v3479
    %v3497 = vadd.f32 %v3417, %v3481
    %v3498 = vtanh.pop %v3490
    %v3499 = vtanh.pop %v3491
    %v3500 = vtanh.pop %v3492
    %v3501 = vtanh.pop %v3493
    %v3502 = vtanh.pop %v3494
    %v3503 = vtanh.pop %v3495
    %v3504 = vtanh.pop %v3496
    %v3505 = vtanh.pop %v3497
    %3514 = vrot.lane.b32.xlu0 %v3498, 64
    %v3515 = vpop.permute.xlu0 %3514
    %3516 = vrot.lane.b32.xlu0 %v3499, 64
    %v3517 = vpop.permute.xlu0 %3516
    %3518 = vrot.lane.b32.xlu0 %v3500, 64
    %v3519 = vpop.permute.xlu0 %3518
    %3520 = vrot.lane.b32.xlu0 %v3501, 64
    %v3521 = vpop.permute.xlu0 %3520
    %3522 = vrot.lane.b32.xlu0 %v3502, 64
    %v3523 = vpop.permute.xlu0 %3522
    %3524 = vrot.lane.b32.xlu0 %v3503, 64
    %v3525 = vpop.permute.xlu0 %3524
    %3526 = vrot.lane.b32.xlu0 %v3504, 64
    %v3527 = vpop.permute.xlu0 %3526
    %3528 = vrot.lane.b32.xlu0 %v3505, 64
    %v3529 = vpop.permute.xlu0 %3528
    %v3538 = vmul.f32 %v3370, %v3515
    %v3539 = vmul.f32 %v3371, %v3517
    %v3540 = vmul.f32 %v3372, %v3519
    %v3541 = vmul.f32 %v3373, %v3521
    %v3542 = vmul.f32 %v3374, %v3523
    %v3543 = vmul.f32 %v3375, %v3525
    %v3544 = vmul.f32 %v3376, %v3527
    %v3545 = vmul.f32 %v3377, %v3529
    %v3554 = vrot.slane %v3539, 7
    %v3555 = vsel %vm1929, %v3554, %v3538
    %v3556 = vrot.slane %v3540, 6
    %v3557 = vsel %vm1931, %v3556, %v3555
    %v3558 = vrot.slane %v3541, 5
    %v3559 = vsel %vm1934, %v3558, %v3557
    %v3560 = vrot.slane %v3542, 4
    %v3561 = vsel %vm1937, %v3560, %v3559
    %v3562 = vrot.slane %v3543, 3
    %v3563 = vsel %vm1940, %v3562, %v3561
    %v3564 = vrot.slane %v3544, 2
    %v3565 = vsel %vm1943, %v3564, %v3563
    %v3566 = vrot.slane %v3545, 1
    %v3567 = vsel %vm1946, %v3566, %v3565
    %3568 = vrot.lane.b32.xlu0 %v3567, 32
    %v3569 = vpop.permute.xlu0 %3568
    %v3570 = vsel %vm1507, %v3569, 0
    %3572 = vmatpush.msra.mxu0 0.0
    %3573 = vmatpush.msra.mxu0 0.0
    %3574 = vmatpush.msra.mxu0 0.0
    %3575 = vmatpush.msra.mxu0 0.0
    %3576 = vmatpush.msra.mxu0 0.0
    %3577 = vmatpush.msra.mxu0 0.0
    %3578 = vmatpush.msra.mxu0 0.0
    %3579 = vmatpush.msra.mxu0 0.0
    %3580 = vmatpush.msra.mxu0 0.0
    %3581 = vmatpush.msra.mxu0 0.0
    %3582 = vmatpush.msra.mxu0 0.0
    %3583 = vmatpush.msra.mxu0 0.0
    %3584 = vmatpush.msra.mxu0 %v1695
    %3585 = vmatpush.msra.mxu0 %v1694
    %3586 = vmatpush.msra.mxu0 %v1693
    %3587 = vmatpush.msra.mxu0 %v1692
    %3588 = vmatmul.f32.gmra.mxu0 %v3570
    %v3589 = vpop.f32.mrf.mxu0
    %v3590 = vadd.f32 0.0, %v3589
    %3591 = vdwg.mxu0
    %v3593 = vrot.slane %v3590, 7
    %v3594 = vrot.slane %v3590, 1
    %v3595 = vrot.slane %v3590, 2
    %v3596 = vrot.slane %v3590, 3
    %v3597 = vrot.slane %v3590, 4
    %v3598 = vrot.slane %v3590, 5
    %v3599 = vrot.slane %v3590, 6
    %v3608 = vadd.f32 %v1624, %v3593
    %v3609 = vadd.f32 %v1633, %v3590
    %v3610 = vadd.f32 %v1642, %v3594
    %v3611 = vadd.f32 %v1651, %v3595
    %v3612 = vadd.f32 %v1660, %v3596
    %v3613 = vadd.f32 %v1669, %v3597
    %v3614 = vadd.f32 %v1678, %v3598
    %v3615 = vadd.f32 %v1687, %v3599
    %v3616 = vmul.f32 %v3608, 0.5
    %v3617 = vmul.f32 %v3609, 0.5
    %v3618 = vmul.f32 %v3610, 0.5
    %v3619 = vmul.f32 %v3611, 0.5
    %v3620 = vmul.f32 %v3612, 0.5
    %v3621 = vmul.f32 %v3613, 0.5
    %v3622 = vmul.f32 %v3614, 0.5
    %v3623 = vmul.f32 %v3615, 0.5
    %v3624 = vtanh.pop %v3616
    %v3625 = vtanh.pop %v3617
    %v3626 = vtanh.pop %v3618
    %v3627 = vtanh.pop %v3619
    %v3628 = vtanh.pop %v3620
    %v3629 = vtanh.pop %v3621
    %v3630 = vtanh.pop %v3622
    %v3631 = vtanh.pop %v3623
    %v3632 = vadd.f32 %v3624, 1.0
    %v3633 = vadd.f32 %v3625, 1.0
    %v3634 = vadd.f32 %v3626, 1.0
    %v3635 = vadd.f32 %v3627, 1.0
    %v3636 = vadd.f32 %v3628, 1.0
    %v3637 = vadd.f32 %v3629, 1.0
    %v3638 = vadd.f32 %v3630, 1.0
    %v3639 = vadd.f32 %v3631, 1.0
    %v3640 = vmul.f32 %v3632, 0.5
    %v3641 = vmul.f32 %v3633, 0.5
    %v3642 = vmul.f32 %v3634, 0.5
    %v3643 = vmul.f32 %v3635, 0.5
    %v3644 = vmul.f32 %v3636, 0.5
    %v3645 = vmul.f32 %v3637, 0.5
    %v3646 = vmul.f32 %v3638, 0.5
    %v3647 = vmul.f32 %v3639, 0.5
    %v3648 = vtanh.pop %v3608
    %v3649 = vtanh.pop %v3609
    %v3650 = vtanh.pop %v3610
    %v3651 = vtanh.pop %v3611
    %v3652 = vtanh.pop %v3612
    %v3653 = vtanh.pop %v3613
    %v3654 = vtanh.pop %v3614
    %v3655 = vtanh.pop %v3615
    %v3664 = vrot.slane %v3490, 7
    %v3665 = vrot.slane %v3491, 7
    %v3666 = vrot.slane %v3492, 7
    %v3667 = vrot.slane %v3493, 7
    %v3668 = vrot.slane %v3494, 7
    %v3669 = vrot.slane %v3495, 7
    %v3670 = vrot.slane %v3496, 7
    %v3671 = vrot.slane %v3497, 7
    %v3680 = vmul.f32 %v3640, %v3664
    %v3681 = vmul.f32 %v3641, %v3665
    %v3682 = vmul.f32 %v3642, %v3666
    %v3683 = vmul.f32 %v3643, %v3667
    %v3684 = vmul.f32 %v3644, %v3668
    %v3685 = vmul.f32 %v3645, %v3669
    %v3686 = vmul.f32 %v3646, %v3670
    %v3687 = vmul.f32 %v3647, %v3671
    %3696 = vrot.lane.b32.xlu0 %v3648, 64
    %v3697 = vpop.permute.xlu0 %3696
    %3698 = vrot.lane.b32.xlu0 %v3649, 64
    %v3699 = vpop.permute.xlu0 %3698
    %3700 = vrot.lane.b32.xlu0 %v3650, 64
    %v3701 = vpop.permute.xlu0 %3700
    %3702 = vrot.lane.b32.xlu0 %v3651, 64
    %v3703 = vpop.permute.xlu0 %3702
    %3704 = vrot.lane.b32.xlu0 %v3652, 64
    %v3705 = vpop.permute.xlu0 %3704
    %3706 = vrot.lane.b32.xlu0 %v3653, 64
    %v3707 = vpop.permute.xlu0 %3706
    %3708 = vrot.lane.b32.xlu0 %v3654, 64
    %v3709 = vpop.permute.xlu0 %3708
    %3710 = vrot.lane.b32.xlu0 %v3655, 64
    %v3711 = vpop.permute.xlu0 %3710
    %v3720 = vmul.f32 %v3640, %v3697
    %v3721 = vmul.f32 %v3641, %v3699
    %v3722 = vmul.f32 %v3642, %v3701
    %v3723 = vmul.f32 %v3643, %v3703
    %v3724 = vmul.f32 %v3644, %v3705
    %v3725 = vmul.f32 %v3645, %v3707
    %v3726 = vmul.f32 %v3646, %v3709
    %v3727 = vmul.f32 %v3647, %v3711
    %3736 = vrot.lane.b32.xlu0 %v3720, 32
    %v3737 = vpop.permute.xlu0 %3736
    %3738 = vrot.lane.b32.xlu0 %v3721, 32
    %v3739 = vpop.permute.xlu0 %3738
    %3740 = vrot.lane.b32.xlu0 %v3722, 32
    %v3741 = vpop.permute.xlu0 %3740
    %3742 = vrot.lane.b32.xlu0 %v3723, 32
    %v3743 = vpop.permute.xlu0 %3742
    %3744 = vrot.lane.b32.xlu0 %v3724, 32
    %v3745 = vpop.permute.xlu0 %3744
    %3746 = vrot.lane.b32.xlu0 %v3725, 32
    %v3747 = vpop.permute.xlu0 %3746
    %3748 = vrot.lane.b32.xlu0 %v3726, 32
    %v3749 = vpop.permute.xlu0 %3748
    %3750 = vrot.lane.b32.xlu0 %v3727, 32
    %v3751 = vpop.permute.xlu0 %3750
    %v3760 = vadd.f32 %v3680, %v3737
    %v3761 = vadd.f32 %v3681, %v3739
    %v3762 = vadd.f32 %v3682, %v3741
    %v3763 = vadd.f32 %v3683, %v3743
    %v3764 = vadd.f32 %v3684, %v3745
    %v3765 = vadd.f32 %v3685, %v3747
    %v3766 = vadd.f32 %v3686, %v3749
    %v3767 = vadd.f32 %v3687, %v3751
    %v3768 = vtanh.pop %v3760
    %v3769 = vtanh.pop %v3761
    %v3770 = vtanh.pop %v3762
    %v3771 = vtanh.pop %v3763
    %v3772 = vtanh.pop %v3764
    %v3773 = vtanh.pop %v3765
    %v3774 = vtanh.pop %v3766
    %v3775 = vtanh.pop %v3767
    %3784 = vrot.lane.b32.xlu0 %v3768, 64
    %v3785 = vpop.permute.xlu0 %3784
    %3786 = vrot.lane.b32.xlu0 %v3769, 64
    %v3787 = vpop.permute.xlu0 %3786
    %3788 = vrot.lane.b32.xlu0 %v3770, 64
    %v3789 = vpop.permute.xlu0 %3788
    %3790 = vrot.lane.b32.xlu0 %v3771, 64
    %v3791 = vpop.permute.xlu0 %3790
    %3792 = vrot.lane.b32.xlu0 %v3772, 64
    %v3793 = vpop.permute.xlu0 %3792
    %3794 = vrot.lane.b32.xlu0 %v3773, 64
    %v3795 = vpop.permute.xlu0 %3794
    %3796 = vrot.lane.b32.xlu0 %v3774, 64
    %v3797 = vpop.permute.xlu0 %3796
    %3798 = vrot.lane.b32.xlu0 %v3775, 64
    %v3799 = vpop.permute.xlu0 %3798
    %v3808 = vmul.f32 %v3640, %v3785
    %v3809 = vmul.f32 %v3641, %v3787
    %v3810 = vmul.f32 %v3642, %v3789
    %v3811 = vmul.f32 %v3643, %v3791
    %v3812 = vmul.f32 %v3644, %v3793
    %v3813 = vmul.f32 %v3645, %v3795
    %v3814 = vmul.f32 %v3646, %v3797
    %v3815 = vmul.f32 %v3647, %v3799
    %v3824 = vrot.slane %v3808, 1
    %v3825 = vsel %vm1929, %v3809, %v3824
    %v3826 = vrot.slane %v3810, 7
    %v3827 = vsel %vm1931, %v3826, %v3825
    %v3828 = vrot.slane %v3811, 6
    %v3829 = vsel %vm1934, %v3828, %v3827
    %v3830 = vrot.slane %v3812, 5
    %v3831 = vsel %vm1937, %v3830, %v3829
    %v3832 = vrot.slane %v3813, 4
    %v3833 = vsel %vm1940, %v3832, %v3831
    %v3834 = vrot.slane %v3814, 3
    %v3835 = vsel %vm1943, %v3834, %v3833
    %v3836 = vrot.slane %v3815, 2
    %v3837 = vsel %vm1946, %v3836, %v3835
    %3838 = vrot.lane.b32.xlu0 %v3837, 32
    %v3839 = vpop.permute.xlu0 %3838
    %v3840 = vsel %vm1507, %v3839, 0
    %3842 = vmatpush.msra.mxu0 0.0
    %3843 = vmatpush.msra.mxu0 0.0
    %3844 = vmatpush.msra.mxu0 0.0
    %3845 = vmatpush.msra.mxu0 0.0
    %3846 = vmatpush.msra.mxu0 0.0
    %3847 = vmatpush.msra.mxu0 0.0
    %3848 = vmatpush.msra.mxu0 0.0
    %3849 = vmatpush.msra.mxu0 0.0
    %3850 = vmatpush.msra.mxu0 0.0
    %3851 = vmatpush.msra.mxu0 0.0
    %3852 = vmatpush.msra.mxu0 0.0
    %3853 = vmatpush.msra.mxu0 0.0
    %3854 = vmatpush.msra.mxu0 %v1695
    %3855 = vmatpush.msra.mxu0 %v1694
    %3856 = vmatpush.msra.mxu0 %v1693
    %3857 = vmatpush.msra.mxu0 %v1692
    %3858 = vmatmul.f32.gmra.mxu0 %v3840
    %v3859 = vpop.f32.mrf.mxu0
    %v3860 = vadd.f32 0.0, %v3859
    %3861 = vdwg.mxu0
    %v3863 = vrot.slane %v3860, 6
    %v3864 = vrot.slane %v3860, 7
    %v3865 = vrot.slane %v3860, 1
    %v3866 = vrot.slane %v3860, 2
    %v3867 = vrot.slane %v3860, 3
    %v3868 = vrot.slane %v3860, 4
    %v3869 = vrot.slane %v3860, 5
    %v3878 = vadd.f32 %v1624, %v3863
    %v3879 = vadd.f32 %v1633, %v3864
    %v3880 = vadd.f32 %v1642, %v3860
    %v3881 = vadd.f32 %v1651, %v3865
    %v3882 = vadd.f32 %v1660, %v3866
    %v3883 = vadd.f32 %v1669, %v3867
    %v3884 = vadd.f32 %v1678, %v3868
    %v3885 = vadd.f32 %v1687, %v3869
    %v3886 = vmul.f32 %v3878, 0.5
    %v3887 = vmul.f32 %v3879, 0.5
    %v3888 = vmul.f32 %v3880, 0.5
    %v3889 = vmul.f32 %v3881, 0.5
    %v3890 = vmul.f32 %v3882, 0.5
    %v3891 = vmul.f32 %v3883, 0.5
    %v3892 = vmul.f32 %v3884, 0.5
    %v3893 = vmul.f32 %v3885, 0.5
    %v3894 = vtanh.pop %v3886
    %v3895 = vtanh.pop %v3887
    %v3896 = vtanh.pop %v3888
    %v3897 = vtanh.pop %v3889
    %v3898 = vtanh.pop %v3890
    %v3899 = vtanh.pop %v3891
    %v3900 = vtanh.pop %v3892
    %v3901 = vtanh.pop %v3893
    %v3902 = vadd.f32 %v3894, 1.0
    %v3903 = vadd.f32 %v3895, 1.0
    %v3904 = vadd.f32 %v3896, 1.0
    %v3905 = vadd.f32 %v3897, 1.0
    %v3906 = vadd.f32 %v3898, 1.0
    %v3907 = vadd.f32 %v3899, 1.0
    %v3908 = vadd.f32 %v3900, 1.0
    %v3909 = vadd.f32 %v3901, 1.0
    %v3910 = vmul.f32 %v3902, 0.5
    %v3911 = vmul.f32 %v3903, 0.5
    %v3912 = vmul.f32 %v3904, 0.5
    %v3913 = vmul.f32 %v3905, 0.5
    %v3914 = vmul.f32 %v3906, 0.5
    %v3915 = vmul.f32 %v3907, 0.5
    %v3916 = vmul.f32 %v3908, 0.5
    %v3917 = vmul.f32 %v3909, 0.5
    %v3918 = vtanh.pop %v3878
    %v3919 = vtanh.pop %v3879
    %v3920 = vtanh.pop %v3880
    %v3921 = vtanh.pop %v3881
    %v3922 = vtanh.pop %v3882
    %v3923 = vtanh.pop %v3883
    %v3924 = vtanh.pop %v3884
    %v3925 = vtanh.pop %v3885
    %v3934 = vrot.slane %v3760, 7
    %v3935 = vrot.slane %v3761, 7
    %v3936 = vrot.slane %v3762, 7
    %v3937 = vrot.slane %v3763, 7
    %v3938 = vrot.slane %v3764, 7
    %v3939 = vrot.slane %v3765, 7
    %v3940 = vrot.slane %v3766, 7
    %v3941 = vrot.slane %v3767, 7
    %v3950 = vmul.f32 %v3910, %v3934
    %v3951 = vmul.f32 %v3911, %v3935
    %v3952 = vmul.f32 %v3912, %v3936
    %v3953 = vmul.f32 %v3913, %v3937
    %v3954 = vmul.f32 %v3914, %v3938
    %v3955 = vmul.f32 %v3915, %v3939
    %v3956 = vmul.f32 %v3916, %v3940
    %v3957 = vmul.f32 %v3917, %v3941
    %3966 = vrot.lane.b32.xlu0 %v3918, 64
    %v3967 = vpop.permute.xlu0 %3966
    %3968 = vrot.lane.b32.xlu0 %v3919, 64
    %v3969 = vpop.permute.xlu0 %3968
    %3970 = vrot.lane.b32.xlu0 %v3920, 64
    %v3971 = vpop.permute.xlu0 %3970
    %3972 = vrot.lane.b32.xlu0 %v3921, 64
    %v3973 = vpop.permute.xlu0 %3972
    %3974 = vrot.lane.b32.xlu0 %v3922, 64
    %v3975 = vpop.permute.xlu0 %3974
    %3976 = vrot.lane.b32.xlu0 %v3923, 64
    %v3977 = vpop.permute.xlu0 %3976
    %3978 = vrot.lane.b32.xlu0 %v3924, 64
    %v3979 = vpop.permute.xlu0 %3978
    %3980 = vrot.lane.b32.xlu0 %v3925, 64
    %v3981 = vpop.permute.xlu0 %3980
    %v3990 = vmul.f32 %v3910, %v3967
    %v3991 = vmul.f32 %v3911, %v3969
    %v3992 = vmul.f32 %v3912, %v3971
    %v3993 = vmul.f32 %v3913, %v3973
    %v3994 = vmul.f32 %v3914, %v3975
    %v3995 = vmul.f32 %v3915, %v3977
    %v3996 = vmul.f32 %v3916, %v3979
    %v3997 = vmul.f32 %v3917, %v3981
    %4006 = vrot.lane.b32.xlu0 %v3990, 32
    %v4007 = vpop.permute.xlu0 %4006
    %4008 = vrot.lane.b32.xlu0 %v3991, 32
    %v4009 = vpop.permute.xlu0 %4008
    %4010 = vrot.lane.b32.xlu0 %v3992, 32
    %v4011 = vpop.permute.xlu0 %4010
    %4012 = vrot.lane.b32.xlu0 %v3993, 32
    %v4013 = vpop.permute.xlu0 %4012
    %4014 = vrot.lane.b32.xlu0 %v3994, 32
    %v4015 = vpop.permute.xlu0 %4014
    %4016 = vrot.lane.b32.xlu0 %v3995, 32
    %v4017 = vpop.permute.xlu0 %4016
    %4018 = vrot.lane.b32.xlu0 %v3996, 32
    %v4019 = vpop.permute.xlu0 %4018
    %4020 = vrot.lane.b32.xlu0 %v3997, 32
    %v4021 = vpop.permute.xlu0 %4020
    %v4030 = vadd.f32 %v3950, %v4007
    %v4031 = vadd.f32 %v3951, %v4009
    %v4032 = vadd.f32 %v3952, %v4011
    %v4033 = vadd.f32 %v3953, %v4013
    %v4034 = vadd.f32 %v3954, %v4015
    %v4035 = vadd.f32 %v3955, %v4017
    %v4036 = vadd.f32 %v3956, %v4019
    %v4037 = vadd.f32 %v3957, %v4021
    %v4038 = vtanh.pop %v4030
    %v4039 = vtanh.pop %v4031
    %v4040 = vtanh.pop %v4032
    %v4041 = vtanh.pop %v4033
    %v4042 = vtanh.pop %v4034
    %v4043 = vtanh.pop %v4035
    %v4044 = vtanh.pop %v4036
    %v4045 = vtanh.pop %v4037
    %4054 = vrot.lane.b32.xlu0 %v4038, 64
    %v4055 = vpop.permute.xlu0 %4054
    %4056 = vrot.lane.b32.xlu0 %v4039, 64
    %v4057 = vpop.permute.xlu0 %4056
    %4058 = vrot.lane.b32.xlu0 %v4040, 64
    %v4059 = vpop.permute.xlu0 %4058
    %4060 = vrot.lane.b32.xlu0 %v4041, 64
    %v4061 = vpop.permute.xlu0 %4060
    %4062 = vrot.lane.b32.xlu0 %v4042, 64
    %v4063 = vpop.permute.xlu0 %4062
    %4064 = vrot.lane.b32.xlu0 %v4043, 64
    %v4065 = vpop.permute.xlu0 %4064
    %4066 = vrot.lane.b32.xlu0 %v4044, 64
    %v4067 = vpop.permute.xlu0 %4066
    %4068 = vrot.lane.b32.xlu0 %v4045, 64
    %v4069 = vpop.permute.xlu0 %4068
    %v4078 = vmul.f32 %v3910, %v4055
    %v4079 = vmul.f32 %v3911, %v4057
    %v4080 = vmul.f32 %v3912, %v4059
    %v4081 = vmul.f32 %v3913, %v4061
    %v4082 = vmul.f32 %v3914, %v4063
    %v4083 = vmul.f32 %v3915, %v4065
    %v4084 = vmul.f32 %v3916, %v4067
    %v4085 = vmul.f32 %v3917, %v4069
    %v4094 = vrot.slane %v4078, 2
    %v4095 = vrot.slane %v4079, 1
    %v4096 = vsel %vm1929, %v4095, %v4094
    %v4097 = vsel %vm1931, %v4080, %v4096
    %v4098 = vrot.slane %v4081, 7
    %v4099 = vsel %vm1934, %v4098, %v4097
    %v4100 = vrot.slane %v4082, 6
    %v4101 = vsel %vm1937, %v4100, %v4099
    %v4102 = vrot.slane %v4083, 5
    %v4103 = vsel %vm1940, %v4102, %v4101
    %v4104 = vrot.slane %v4084, 4
    %v4105 = vsel %vm1943, %v4104, %v4103
    %v4106 = vrot.slane %v4085, 3
    %v4107 = vsel %vm1946, %v4106, %v4105
    %4108 = vrot.lane.b32.xlu0 %v4107, 32
    %v4109 = vpop.permute.xlu0 %4108
    %v4110 = vsel %vm1507, %v4109, 0
    %4112 = vmatpush.msra.mxu0 0.0
    %4113 = vmatpush.msra.mxu0 0.0
    %4114 = vmatpush.msra.mxu0 0.0
    %4115 = vmatpush.msra.mxu0 0.0
    %4116 = vmatpush.msra.mxu0 0.0
    %4117 = vmatpush.msra.mxu0 0.0
    %4118 = vmatpush.msra.mxu0 0.0
    %4119 = vmatpush.msra.mxu0 0.0
    %4120 = vmatpush.msra.mxu0 0.0
    %4121 = vmatpush.msra.mxu0 0.0
    %4122 = vmatpush.msra.mxu0 0.0
    %4123 = vmatpush.msra.mxu0 0.0
    %4124 = vmatpush.msra.mxu0 %v1695
    %4125 = vmatpush.msra.mxu0 %v1694
    %4126 = vmatpush.msra.mxu0 %v1693
    %4127 = vmatpush.msra.mxu0 %v1692
    %4128 = vmatmul.f32.gmra.mxu0 %v4110
    %v4129 = vpop.f32.mrf.mxu0
    %v4130 = vadd.f32 0.0, %v4129
    %4131 = vdwg.mxu0
    %v4133 = vrot.slane %v4130, 5
    %v4134 = vrot.slane %v4130, 6
    %v4135 = vrot.slane %v4130, 7
    %v4136 = vrot.slane %v4130, 1
    %v4137 = vrot.slane %v4130, 2
    %v4138 = vrot.slane %v4130, 3
    %v4139 = vrot.slane %v4130, 4
    %v4148 = vadd.f32 %v1624, %v4133
    %v4149 = vadd.f32 %v1633, %v4134
    %v4150 = vadd.f32 %v1642, %v4135
    %v4151 = vadd.f32 %v1651, %v4130
    %v4152 = vadd.f32 %v1660, %v4136
    %v4153 = vadd.f32 %v1669, %v4137
    %v4154 = vadd.f32 %v1678, %v4138
    %v4155 = vadd.f32 %v1687, %v4139
    %v4156 = vmul.f32 %v4148, 0.5
    %v4157 = vmul.f32 %v4149, 0.5
    %v4158 = vmul.f32 %v4150, 0.5
    %v4159 = vmul.f32 %v4151, 0.5
    %v4160 = vmul.f32 %v4152, 0.5
    %v4161 = vmul.f32 %v4153, 0.5
    %v4162 = vmul.f32 %v4154, 0.5
    %v4163 = vmul.f32 %v4155, 0.5
    %v4164 = vtanh.pop %v4156
    %v4165 = vtanh.pop %v4157
    %v4166 = vtanh.pop %v4158
    %v4167 = vtanh.pop %v4159
    %v4168 = vtanh.pop %v4160
    %v4169 = vtanh.pop %v4161
    %v4170 = vtanh.pop %v4162
    %v4171 = vtanh.pop %v4163
    %v4172 = vadd.f32 %v4164, 1.0
    %v4173 = vadd.f32 %v4165, 1.0
    %v4174 = vadd.f32 %v4166, 1.0
    %v4175 = vadd.f32 %v4167, 1.0
    %v4176 = vadd.f32 %v4168, 1.0
    %v4177 = vadd.f32 %v4169, 1.0
    %v4178 = vadd.f32 %v4170, 1.0
    %v4179 = vadd.f32 %v4171, 1.0
    %v4180 = vmul.f32 %v4172, 0.5
    %v4181 = vmul.f32 %v4173, 0.5
    %v4182 = vmul.f32 %v4174, 0.5
    %v4183 = vmul.f32 %v4175, 0.5
    %v4184 = vmul.f32 %v4176, 0.5
    %v4185 = vmul.f32 %v4177, 0.5
    %v4186 = vmul.f32 %v4178, 0.5
    %v4187 = vmul.f32 %v4179, 0.5
    %v4188 = vtanh.pop %v4148
    %v4189 = vtanh.pop %v4149
    %v4190 = vtanh.pop %v4150
    %v4191 = vtanh.pop %v4151
    %v4192 = vtanh.pop %v4152
    %v4193 = vtanh.pop %v4153
    %v4194 = vtanh.pop %v4154
    %v4195 = vtanh.pop %v4155
    %v4204 = vrot.slane %v4030, 7
    %v4205 = vrot.slane %v4031, 7
    %v4206 = vrot.slane %v4032, 7
    %v4207 = vrot.slane %v4033, 7
    %v4208 = vrot.slane %v4034, 7
    %v4209 = vrot.slane %v4035, 7
    %v4210 = vrot.slane %v4036, 7
    %v4211 = vrot.slane %v4037, 7
    %v4220 = vmul.f32 %v4180, %v4204
    %v4221 = vmul.f32 %v4181, %v4205
    %v4222 = vmul.f32 %v4182, %v4206
    %v4223 = vmul.f32 %v4183, %v4207
    %v4224 = vmul.f32 %v4184, %v4208
    %v4225 = vmul.f32 %v4185, %v4209
    %v4226 = vmul.f32 %v4186, %v4210
    %v4227 = vmul.f32 %v4187, %v4211
    %4236 = vrot.lane.b32.xlu0 %v4188, 64
    %v4237 = vpop.permute.xlu0 %4236
    %4238 = vrot.lane.b32.xlu0 %v4189, 64
    %v4239 = vpop.permute.xlu0 %4238
    %4240 = vrot.lane.b32.xlu0 %v4190, 64
    %v4241 = vpop.permute.xlu0 %4240
    %4242 = vrot.lane.b32.xlu0 %v4191, 64
    %v4243 = vpop.permute.xlu0 %4242
    %4244 = vrot.lane.b32.xlu0 %v4192, 64
    %v4245 = vpop.permute.xlu0 %4244
    %4246 = vrot.lane.b32.xlu0 %v4193, 64
    %v4247 = vpop.permute.xlu0 %4246
    %4248 = vrot.lane.b32.xlu0 %v4194, 64
    %v4249 = vpop.permute.xlu0 %4248
    %4250 = vrot.lane.b32.xlu0 %v4195, 64
    %v4251 = vpop.permute.xlu0 %4250
    %v4260 = vmul.f32 %v4180, %v4237
    %v4261 = vmul.f32 %v4181, %v4239
    %v4262 = vmul.f32 %v4182, %v4241
    %v4263 = vmul.f32 %v4183, %v4243
    %v4264 = vmul.f32 %v4184, %v4245
    %v4265 = vmul.f32 %v4185, %v4247
    %v4266 = vmul.f32 %v4186, %v4249
    %v4267 = vmul.f32 %v4187, %v4251
    %4276 = vrot.lane.b32.xlu0 %v4260, 32
    %v4277 = vpop.permute.xlu0 %4276
    %4278 = vrot.lane.b32.xlu0 %v4261, 32
    %v4279 = vpop.permute.xlu0 %4278
    %4280 = vrot.lane.b32.xlu0 %v4262, 32
    %v4281 = vpop.permute.xlu0 %4280
    %4282 = vrot.lane.b32.xlu0 %v4263, 32
    %v4283 = vpop.permute.xlu0 %4282
    %4284 = vrot.lane.b32.xlu0 %v4264, 32
    %v4285 = vpop.permute.xlu0 %4284
    %4286 = vrot.lane.b32.xlu0 %v4265, 32
    %v4287 = vpop.permute.xlu0 %4286
    %4288 = vrot.lane.b32.xlu0 %v4266, 32
    %v4289 = vpop.permute.xlu0 %4288
    %4290 = vrot.lane.b32.xlu0 %v4267, 32
    %v4291 = vpop.permute.xlu0 %4290
    %v4300 = vadd.f32 %v4220, %v4277
    %v4301 = vadd.f32 %v4221, %v4279
    %v4302 = vadd.f32 %v4222, %v4281
    %v4303 = vadd.f32 %v4223, %v4283
    %v4304 = vadd.f32 %v4224, %v4285
    %v4305 = vadd.f32 %v4225, %v4287
    %v4306 = vadd.f32 %v4226, %v4289
    %v4307 = vadd.f32 %v4227, %v4291
    %v4308 = vtanh.pop %v4300
    %v4309 = vtanh.pop %v4301
    %v4310 = vtanh.pop %v4302
    %v4311 = vtanh.pop %v4303
    %v4312 = vtanh.pop %v4304
    %v4313 = vtanh.pop %v4305
    %v4314 = vtanh.pop %v4306
    %v4315 = vtanh.pop %v4307
    %4324 = vrot.lane.b32.xlu0 %v4308, 64
    %v4325 = vpop.permute.xlu0 %4324
    %4326 = vrot.lane.b32.xlu0 %v4309, 64
    %v4327 = vpop.permute.xlu0 %4326
    %4328 = vrot.lane.b32.xlu0 %v4310, 64
    %v4329 = vpop.permute.xlu0 %4328
    %4330 = vrot.lane.b32.xlu0 %v4311, 64
    %v4331 = vpop.permute.xlu0 %4330
    %4332 = vrot.lane.b32.xlu0 %v4312, 64
    %v4333 = vpop.permute.xlu0 %4332
    %4334 = vrot.lane.b32.xlu0 %v4313, 64
    %v4335 = vpop.permute.xlu0 %4334
    %4336 = vrot.lane.b32.xlu0 %v4314, 64
    %v4337 = vpop.permute.xlu0 %4336
    %4338 = vrot.lane.b32.xlu0 %v4315, 64
    %v4339 = vpop.permute.xlu0 %4338
    %v4348 = vmul.f32 %v4180, %v4325
    %v4349 = vmul.f32 %v4181, %v4327
    %v4350 = vmul.f32 %v4182, %v4329
    %v4351 = vmul.f32 %v4183, %v4331
    %v4352 = vmul.f32 %v4184, %v4333
    %v4353 = vmul.f32 %v4185, %v4335
    %v4354 = vmul.f32 %v4186, %v4337
    %v4355 = vmul.f32 %v4187, %v4339
    %v4364 = vrot.slane %v4348, 3
    %v4365 = vrot.slane %v4349, 2
    %v4366 = vsel %vm1929, %v4365, %v4364
    %v4367 = vrot.slane %v4350, 1
    %v4368 = vsel %vm1931, %v4367, %v4366
    %v4369 = vsel %vm1934, %v4351, %v4368
    %v4370 = vrot.slane %v4352, 7
    %v4371 = vsel %vm1937, %v4370, %v4369
    %v4372 = vrot.slane %v4353, 6
    %v4373 = vsel %vm1940, %v4372, %v4371
    %v4374 = vrot.slane %v4354, 5
    %v4375 = vsel %vm1943, %v4374, %v4373
    %v4376 = vrot.slane %v4355, 4
    %v4377 = vsel %vm1946, %v4376, %v4375
    %4378 = vrot.lane.b32.xlu0 %v4377, 32
    %v4379 = vpop.permute.xlu0 %4378
    %v4380 = vsel %vm1507, %v4379, 0
    %4382 = vmatpush.msra.mxu0 0.0
    %4383 = vmatpush.msra.mxu0 0.0
    %4384 = vmatpush.msra.mxu0 0.0
    %4385 = vmatpush.msra.mxu0 0.0
    %4386 = vmatpush.msra.mxu0 0.0
    %4387 = vmatpush.msra.mxu0 0.0
    %4388 = vmatpush.msra.mxu0 0.0
    %4389 = vmatpush.msra.mxu0 0.0
    %4390 = vmatpush.msra.mxu0 0.0
    %4391 = vmatpush.msra.mxu0 0.0
    %4392 = vmatpush.msra.mxu0 0.0
    %4393 = vmatpush.msra.mxu0 0.0
    %4394 = vmatpush.msra.mxu0 %v1695
    %4395 = vmatpush.msra.mxu0 %v1694
    %4396 = vmatpush.msra.mxu0 %v1693
    %4397 = vmatpush.msra.mxu0 %v1692
    %4398 = vmatmul.f32.gmra.mxu0 %v4380
    %v4399 = vpop.f32.mrf.mxu0
    %v4400 = vadd.f32 0.0, %v4399
    %4401 = vdwg.mxu0
    %v4403 = vrot.slane %v4400, 4
    %v4404 = vrot.slane %v4400, 5
    %v4405 = vrot.slane %v4400, 6
    %v4406 = vrot.slane %v4400, 7
    %v4407 = vrot.slane %v4400, 1
    %v4408 = vrot.slane %v4400, 2
    %v4409 = vrot.slane %v4400, 3
    %v4418 = vadd.f32 %v1624, %v4403
    %v4419 = vadd.f32 %v1633, %v4404
    %v4420 = vadd.f32 %v1642, %v4405
    %v4421 = vadd.f32 %v1651, %v4406
    %v4422 = vadd.f32 %v1660, %v4400
    %v4423 = vadd.f32 %v1669, %v4407
    %v4424 = vadd.f32 %v1678, %v4408
    %v4425 = vadd.f32 %v1687, %v4409
    %v4426 = vmul.f32 %v4418, 0.5
    %v4427 = vmul.f32 %v4419, 0.5
    %v4428 = vmul.f32 %v4420, 0.5
    %v4429 = vmul.f32 %v4421, 0.5
    %v4430 = vmul.f32 %v4422, 0.5
    %v4431 = vmul.f32 %v4423, 0.5
    %v4432 = vmul.f32 %v4424, 0.5
    %v4433 = vmul.f32 %v4425, 0.5
    %v4434 = vtanh.pop %v4426
    %v4435 = vtanh.pop %v4427
    %v4436 = vtanh.pop %v4428
    %v4437 = vtanh.pop %v4429
    %v4438 = vtanh.pop %v4430
    %v4439 = vtanh.pop %v4431
    %v4440 = vtanh.pop %v4432
    %v4441 = vtanh.pop %v4433
    %v4442 = vadd.f32 %v4434, 1.0
    %v4443 = vadd.f32 %v4435, 1.0
    %v4444 = vadd.f32 %v4436, 1.0
    %v4445 = vadd.f32 %v4437, 1.0
    %v4446 = vadd.f32 %v4438, 1.0
    %v4447 = vadd.f32 %v4439, 1.0
    %v4448 = vadd.f32 %v4440, 1.0
    %v4449 = vadd.f32 %v4441, 1.0
    %v4450 = vmul.f32 %v4442, 0.5
    %v4451 = vmul.f32 %v4443, 0.5
    %v4452 = vmul.f32 %v4444, 0.5
    %v4453 = vmul.f32 %v4445, 0.5
    %v4454 = vmul.f32 %v4446, 0.5
    %v4455 = vmul.f32 %v4447, 0.5
    %v4456 = vmul.f32 %v4448, 0.5
    %v4457 = vmul.f32 %v4449, 0.5
    %v4458 = vtanh.pop %v4418
    %v4459 = vtanh.pop %v4419
    %v4460 = vtanh.pop %v4420
    %v4461 = vtanh.pop %v4421
    %v4462 = vtanh.pop %v4422
    %v4463 = vtanh.pop %v4423
    %v4464 = vtanh.pop %v4424
    %v4465 = vtanh.pop %v4425
    %v4474 = vrot.slane %v4300, 7
    %v4475 = vrot.slane %v4301, 7
    %v4476 = vrot.slane %v4302, 7
    %v4477 = vrot.slane %v4303, 7
    %v4478 = vrot.slane %v4304, 7
    %v4479 = vrot.slane %v4305, 7
    %v4480 = vrot.slane %v4306, 7
    %v4481 = vrot.slane %v4307, 7
    %v4490 = vmul.f32 %v4450, %v4474
    %v4491 = vmul.f32 %v4451, %v4475
    %v4492 = vmul.f32 %v4452, %v4476
    %v4493 = vmul.f32 %v4453, %v4477
    %v4494 = vmul.f32 %v4454, %v4478
    %v4495 = vmul.f32 %v4455, %v4479
    %v4496 = vmul.f32 %v4456, %v4480
    %v4497 = vmul.f32 %v4457, %v4481
    %4506 = vrot.lane.b32.xlu0 %v4458, 64
    %v4507 = vpop.permute.xlu0 %4506
    %4508 = vrot.lane.b32.xlu0 %v4459, 64
    %v4509 = vpop.permute.xlu0 %4508
    %4510 = vrot.lane.b32.xlu0 %v4460, 64
    %v4511 = vpop.permute.xlu0 %4510
    %4512 = vrot.lane.b32.xlu0 %v4461, 64
    %v4513 = vpop.permute.xlu0 %4512
    %4514 = vrot.lane.b32.xlu0 %v4462, 64
    %v4515 = vpop.permute.xlu0 %4514
    %4516 = vrot.lane.b32.xlu0 %v4463, 64
    %v4517 = vpop.permute.xlu0 %4516
    %4518 = vrot.lane.b32.xlu0 %v4464, 64
    %v4519 = vpop.permute.xlu0 %4518
    %4520 = vrot.lane.b32.xlu0 %v4465, 64
    %v4521 = vpop.permute.xlu0 %4520
    %v4530 = vmul.f32 %v4450, %v4507
    %v4531 = vmul.f32 %v4451, %v4509
    %v4532 = vmul.f32 %v4452, %v4511
    %v4533 = vmul.f32 %v4453, %v4513
    %v4534 = vmul.f32 %v4454, %v4515
    %v4535 = vmul.f32 %v4455, %v4517
    %v4536 = vmul.f32 %v4456, %v4519
    %v4537 = vmul.f32 %v4457, %v4521
    %4546 = vrot.lane.b32.xlu0 %v4530, 32
    %v4547 = vpop.permute.xlu0 %4546
    %4548 = vrot.lane.b32.xlu0 %v4531, 32
    %v4549 = vpop.permute.xlu0 %4548
    %4550 = vrot.lane.b32.xlu0 %v4532, 32
    %v4551 = vpop.permute.xlu0 %4550
    %4552 = vrot.lane.b32.xlu0 %v4533, 32
    %v4553 = vpop.permute.xlu0 %4552
    %4554 = vrot.lane.b32.xlu0 %v4534, 32
    %v4555 = vpop.permute.xlu0 %4554
    %4556 = vrot.lane.b32.xlu0 %v4535, 32
    %v4557 = vpop.permute.xlu0 %4556
    %4558 = vrot.lane.b32.xlu0 %v4536, 32
    %v4559 = vpop.permute.xlu0 %4558
    %4560 = vrot.lane.b32.xlu0 %v4537, 32
    %v4561 = vpop.permute.xlu0 %4560
    %v4570 = vadd.f32 %v4490, %v4547
    %v4571 = vadd.f32 %v4491, %v4549
    %v4572 = vadd.f32 %v4492, %v4551
    %v4573 = vadd.f32 %v4493, %v4553
    %v4574 = vadd.f32 %v4494, %v4555
    %v4575 = vadd.f32 %v4495, %v4557
    %v4576 = vadd.f32 %v4496, %v4559
    %v4577 = vadd.f32 %v4497, %v4561
    %v4578 = vtanh.pop %v4570
    %v4579 = vtanh.pop %v4571
    %v4580 = vtanh.pop %v4572
    %v4581 = vtanh.pop %v4573
    %v4582 = vtanh.pop %v4574
    %v4583 = vtanh.pop %v4575
    %v4584 = vtanh.pop %v4576
    %v4585 = vtanh.pop %v4577
    %4594 = vrot.lane.b32.xlu0 %v4578, 64
    %v4595 = vpop.permute.xlu0 %4594
    %4596 = vrot.lane.b32.xlu0 %v4579, 64
    %v4597 = vpop.permute.xlu0 %4596
    %4598 = vrot.lane.b32.xlu0 %v4580, 64
    %v4599 = vpop.permute.xlu0 %4598
    %4600 = vrot.lane.b32.xlu0 %v4581, 64
    %v4601 = vpop.permute.xlu0 %4600
    %4602 = vrot.lane.b32.xlu0 %v4582, 64
    %v4603 = vpop.permute.xlu0 %4602
    %4604 = vrot.lane.b32.xlu0 %v4583, 64
    %v4605 = vpop.permute.xlu0 %4604
    %4606 = vrot.lane.b32.xlu0 %v4584, 64
    %v4607 = vpop.permute.xlu0 %4606
    %4608 = vrot.lane.b32.xlu0 %v4585, 64
    %v4609 = vpop.permute.xlu0 %4608
    %v4618 = vmul.f32 %v4450, %v4595
    %v4619 = vmul.f32 %v4451, %v4597
    %v4620 = vmul.f32 %v4452, %v4599
    %v4621 = vmul.f32 %v4453, %v4601
    %v4622 = vmul.f32 %v4454, %v4603
    %v4623 = vmul.f32 %v4455, %v4605
    %v4624 = vmul.f32 %v4456, %v4607
    %v4625 = vmul.f32 %v4457, %v4609
    %v4634 = vrot.slane %v4618, 4
    %v4635 = vrot.slane %v4619, 3
    %v4636 = vsel %vm1929, %v4635, %v4634
    %v4637 = vrot.slane %v4620, 2
    %v4638 = vsel %vm1931, %v4637, %v4636
    %v4639 = vrot.slane %v4621, 1
    %v4640 = vsel %vm1934, %v4639, %v4638
    %v4641 = vsel %vm1937, %v4622, %v4640
    %v4642 = vrot.slane %v4623, 7
    %v4643 = vsel %vm1940, %v4642, %v4641
    %v4644 = vrot.slane %v4624, 6
    %v4645 = vsel %vm1943, %v4644, %v4643
    %v4646 = vrot.slane %v4625, 5
    %v4647 = vsel %vm1946, %v4646, %v4645
    %4648 = vrot.lane.b32.xlu0 %v4647, 32
    %v4649 = vpop.permute.xlu0 %4648
    %v4650 = vsel %vm1507, %v4649, 0
    %4652 = vmatpush.msra.mxu0 0.0
    %4653 = vmatpush.msra.mxu0 0.0
    %4654 = vmatpush.msra.mxu0 0.0
    %4655 = vmatpush.msra.mxu0 0.0
    %4656 = vmatpush.msra.mxu0 0.0
    %4657 = vmatpush.msra.mxu0 0.0
    %4658 = vmatpush.msra.mxu0 0.0
    %4659 = vmatpush.msra.mxu0 0.0
    %4660 = vmatpush.msra.mxu0 0.0
    %4661 = vmatpush.msra.mxu0 0.0
    %4662 = vmatpush.msra.mxu0 0.0
    %4663 = vmatpush.msra.mxu0 0.0
    %4664 = vmatpush.msra.mxu0 %v1695
    %4665 = vmatpush.msra.mxu0 %v1694
    %4666 = vmatpush.msra.mxu0 %v1693
    %4667 = vmatpush.msra.mxu0 %v1692
    %4668 = vmatmul.f32.gmra.mxu0 %v4650
    %v4669 = vpop.f32.mrf.mxu0
    %v4670 = vadd.f32 0.0, %v4669
    %4671 = vdwg.mxu0
    %v4673 = vrot.slane %v4670, 3
    %v4674 = vrot.slane %v4670, 4
    %v4675 = vrot.slane %v4670, 5
    %v4676 = vrot.slane %v4670, 6
    %v4677 = vrot.slane %v4670, 7
    %v4678 = vrot.slane %v4670, 1
    %v4679 = vrot.slane %v4670, 2
    %v4688 = vadd.f32 %v1624, %v4673
    %v4689 = vadd.f32 %v1633, %v4674
    %v4690 = vadd.f32 %v1642, %v4675
    %v4691 = vadd.f32 %v1651, %v4676
    %v4692 = vadd.f32 %v1660, %v4677
    %v4693 = vadd.f32 %v1669, %v4670
    %v4694 = vadd.f32 %v1678, %v4678
    %v4695 = vadd.f32 %v1687, %v4679
    %v4696 = vmul.f32 %v4688, 0.5
    %v4697 = vmul.f32 %v4689, 0.5
    %v4698 = vmul.f32 %v4690, 0.5
    %v4699 = vmul.f32 %v4691, 0.5
    %v4700 = vmul.f32 %v4692, 0.5
    %v4701 = vmul.f32 %v4693, 0.5
    %v4702 = vmul.f32 %v4694, 0.5
    %v4703 = vmul.f32 %v4695, 0.5
    %v4704 = vtanh.pop %v4696
    %v4705 = vtanh.pop %v4697
    %v4706 = vtanh.pop %v4698
    %v4707 = vtanh.pop %v4699
    %v4708 = vtanh.pop %v4700
    %v4709 = vtanh.pop %v4701
    %v4710 = vtanh.pop %v4702
    %v4711 = vtanh.pop %v4703
    %v4712 = vadd.f32 %v4704, 1.0
    %v4713 = vadd.f32 %v4705, 1.0
    %v4714 = vadd.f32 %v4706, 1.0
    %v4715 = vadd.f32 %v4707, 1.0
    %v4716 = vadd.f32 %v4708, 1.0
    %v4717 = vadd.f32 %v4709, 1.0
    %v4718 = vadd.f32 %v4710, 1.0
    %v4719 = vadd.f32 %v4711, 1.0
    %v4720 = vmul.f32 %v4712, 0.5
    %v4721 = vmul.f32 %v4713, 0.5
    %v4722 = vmul.f32 %v4714, 0.5
    %v4723 = vmul.f32 %v4715, 0.5
    %v4724 = vmul.f32 %v4716, 0.5
    %v4725 = vmul.f32 %v4717, 0.5
    %v4726 = vmul.f32 %v4718, 0.5
    %v4727 = vmul.f32 %v4719, 0.5
    %v4728 = vtanh.pop %v4688
    %v4729 = vtanh.pop %v4689
    %v4730 = vtanh.pop %v4690
    %v4731 = vtanh.pop %v4691
    %v4732 = vtanh.pop %v4692
    %v4733 = vtanh.pop %v4693
    %v4734 = vtanh.pop %v4694
    %v4735 = vtanh.pop %v4695
    %v4744 = vrot.slane %v4570, 7
    %v4745 = vrot.slane %v4571, 7
    %v4746 = vrot.slane %v4572, 7
    %v4747 = vrot.slane %v4573, 7
    %v4748 = vrot.slane %v4574, 7
    %v4749 = vrot.slane %v4575, 7
    %v4750 = vrot.slane %v4576, 7
    %v4751 = vrot.slane %v4577, 7
    %v4760 = vmul.f32 %v4720, %v4744
    %v4761 = vmul.f32 %v4721, %v4745
    %v4762 = vmul.f32 %v4722, %v4746
    %v4763 = vmul.f32 %v4723, %v4747
    %v4764 = vmul.f32 %v4724, %v4748
    %v4765 = vmul.f32 %v4725, %v4749
    %v4766 = vmul.f32 %v4726, %v4750
    %v4767 = vmul.f32 %v4727, %v4751
    %4776 = vrot.lane.b32.xlu0 %v4728, 64
    %v4777 = vpop.permute.xlu0 %4776
    %4778 = vrot.lane.b32.xlu0 %v4729, 64
    %v4779 = vpop.permute.xlu0 %4778
    %4780 = vrot.lane.b32.xlu0 %v4730, 64
    %v4781 = vpop.permute.xlu0 %4780
    %4782 = vrot.lane.b32.xlu0 %v4731, 64
    %v4783 = vpop.permute.xlu0 %4782
    %4784 = vrot.lane.b32.xlu0 %v4732, 64
    %v4785 = vpop.permute.xlu0 %4784
    %4786 = vrot.lane.b32.xlu0 %v4733, 64
    %v4787 = vpop.permute.xlu0 %4786
    %4788 = vrot.lane.b32.xlu0 %v4734, 64
    %v4789 = vpop.permute.xlu0 %4788
    %4790 = vrot.lane.b32.xlu0 %v4735, 64
    %v4791 = vpop.permute.xlu0 %4790
    %v4800 = vmul.f32 %v4720, %v4777
    %v4801 = vmul.f32 %v4721, %v4779
    %v4802 = vmul.f32 %v4722, %v4781
    %v4803 = vmul.f32 %v4723, %v4783
    %v4804 = vmul.f32 %v4724, %v4785
    %v4805 = vmul.f32 %v4725, %v4787
    %v4806 = vmul.f32 %v4726, %v4789
    %v4807 = vmul.f32 %v4727, %v4791
    %4816 = vrot.lane.b32.xlu0 %v4800, 32
    %v4817 = vpop.permute.xlu0 %4816
    %4818 = vrot.lane.b32.xlu0 %v4801, 32
    %v4819 = vpop.permute.xlu0 %4818
    %4820 = vrot.lane.b32.xlu0 %v4802, 32
    %v4821 = vpop.permute.xlu0 %4820
    %4822 = vrot.lane.b32.xlu0 %v4803, 32
    %v4823 = vpop.permute.xlu0 %4822
    %4824 = vrot.lane.b32.xlu0 %v4804, 32
    %v4825 = vpop.permute.xlu0 %4824
    %4826 = vrot.lane.b32.xlu0 %v4805, 32
    %v4827 = vpop.permute.xlu0 %4826
    %4828 = vrot.lane.b32.xlu0 %v4806, 32
    %v4829 = vpop.permute.xlu0 %4828
    %4830 = vrot.lane.b32.xlu0 %v4807, 32
    %v4831 = vpop.permute.xlu0 %4830
    %v4840 = vadd.f32 %v4760, %v4817
    %v4841 = vadd.f32 %v4761, %v4819
    %v4842 = vadd.f32 %v4762, %v4821
    %v4843 = vadd.f32 %v4763, %v4823
    %v4844 = vadd.f32 %v4764, %v4825
    %v4845 = vadd.f32 %v4765, %v4827
    %v4846 = vadd.f32 %v4766, %v4829
    %v4847 = vadd.f32 %v4767, %v4831
    %v4848 = vtanh.pop %v4840
    %v4849 = vtanh.pop %v4841
    %v4850 = vtanh.pop %v4842
    %v4851 = vtanh.pop %v4843
    %v4852 = vtanh.pop %v4844
    %v4853 = vtanh.pop %v4845
    %v4854 = vtanh.pop %v4846
    %v4855 = vtanh.pop %v4847
    %4864 = vrot.lane.b32.xlu0 %v4848, 64
    %v4865 = vpop.permute.xlu0 %4864
    %4866 = vrot.lane.b32.xlu0 %v4849, 64
    %v4867 = vpop.permute.xlu0 %4866
    %4868 = vrot.lane.b32.xlu0 %v4850, 64
    %v4869 = vpop.permute.xlu0 %4868
    %4870 = vrot.lane.b32.xlu0 %v4851, 64
    %v4871 = vpop.permute.xlu0 %4870
    %4872 = vrot.lane.b32.xlu0 %v4852, 64
    %v4873 = vpop.permute.xlu0 %4872
    %4874 = vrot.lane.b32.xlu0 %v4853, 64
    %v4875 = vpop.permute.xlu0 %4874
    %4876 = vrot.lane.b32.xlu0 %v4854, 64
    %v4877 = vpop.permute.xlu0 %4876
    %4878 = vrot.lane.b32.xlu0 %v4855, 64
    %v4879 = vpop.permute.xlu0 %4878
    %v4888 = vmul.f32 %v4720, %v4865
    %v4889 = vmul.f32 %v4721, %v4867
    %v4890 = vmul.f32 %v4722, %v4869
    %v4891 = vmul.f32 %v4723, %v4871
    %v4892 = vmul.f32 %v4724, %v4873
    %v4893 = vmul.f32 %v4725, %v4875
    %v4894 = vmul.f32 %v4726, %v4877
    %v4895 = vmul.f32 %v4727, %v4879
    %v4904 = vrot.slane %v4888, 5
    %v4905 = vrot.slane %v4889, 4
    %v4906 = vsel %vm1929, %v4905, %v4904
    %v4907 = vrot.slane %v4890, 3
    %v4908 = vsel %vm1931, %v4907, %v4906
    %v4909 = vrot.slane %v4891, 2
    %v4910 = vsel %vm1934, %v4909, %v4908
    %v4911 = vrot.slane %v4892, 1
    %v4912 = vsel %vm1937, %v4911, %v4910
    %v4913 = vsel %vm1940, %v4893, %v4912
    %v4914 = vrot.slane %v4894, 7
    %v4915 = vsel %vm1943, %v4914, %v4913
    %v4916 = vrot.slane %v4895, 6
    %v4917 = vsel %vm1946, %v4916, %v4915
    %4918 = vrot.lane.b32.xlu0 %v4917, 32
    %v4919 = vpop.permute.xlu0 %4918
    %v4920 = vsel %vm1507, %v4919, 0
    %4922 = vmatpush.msra.mxu0 0.0
    %4923 = vmatpush.msra.mxu0 0.0
    %4924 = vmatpush.msra.mxu0 0.0
    %4925 = vmatpush.msra.mxu0 0.0
    %4926 = vmatpush.msra.mxu0 0.0
    %4927 = vmatpush.msra.mxu0 0.0
    %4928 = vmatpush.msra.mxu0 0.0
    %4929 = vmatpush.msra.mxu0 0.0
    %4930 = vmatpush.msra.mxu0 0.0
    %4931 = vmatpush.msra.mxu0 0.0
    %4932 = vmatpush.msra.mxu0 0.0
    %4933 = vmatpush.msra.mxu0 0.0
    %4934 = vmatpush.msra.mxu0 %v1695
    %4935 = vmatpush.msra.mxu0 %v1694
    %4936 = vmatpush.msra.mxu0 %v1693
    %4937 = vmatpush.msra.mxu0 %v1692
    %4938 = vmatmul.f32.gmra.mxu0 %v4920
    %v4939 = vpop.f32.mrf.mxu0
    %v4940 = vadd.f32 0.0, %v4939
    %4941 = vdwg.mxu0
    %v4943 = vrot.slane %v4940, 2
    %v4944 = vrot.slane %v4940, 3
    %v4945 = vrot.slane %v4940, 4
    %v4946 = vrot.slane %v4940, 5
    %v4947 = vrot.slane %v4940, 6
    %v4948 = vrot.slane %v4940, 7
    %v4949 = vrot.slane %v4940, 1
    %v4958 = vadd.f32 %v1624, %v4943
    %v4959 = vadd.f32 %v1633, %v4944
    %v4960 = vadd.f32 %v1642, %v4945
    %v4961 = vadd.f32 %v1651, %v4946
    %v4962 = vadd.f32 %v1660, %v4947
    %v4963 = vadd.f32 %v1669, %v4948
    %v4964 = vadd.f32 %v1678, %v4940
    %v4965 = vadd.f32 %v1687, %v4949
    %v4966 = vmul.f32 %v4958, 0.5
    %v4967 = vmul.f32 %v4959, 0.5
    %v4968 = vmul.f32 %v4960, 0.5
    %v4969 = vmul.f32 %v4961, 0.5
    %v4970 = vmul.f32 %v4962, 0.5
    %v4971 = vmul.f32 %v4963, 0.5
    %v4972 = vmul.f32 %v4964, 0.5
    %v4973 = vmul.f32 %v4965, 0.5
    %v4974 = vtanh.pop %v4966
    %v4975 = vtanh.pop %v4967
    %v4976 = vtanh.pop %v4968
    %v4977 = vtanh.pop %v4969
    %v4978 = vtanh.pop %v4970
    %v4979 = vtanh.pop %v4971
    %v4980 = vtanh.pop %v4972
    %v4981 = vtanh.pop %v4973
    %v4982 = vadd.f32 %v4974, 1.0
    %v4983 = vadd.f32 %v4975, 1.0
    %v4984 = vadd.f32 %v4976, 1.0
    %v4985 = vadd.f32 %v4977, 1.0
    %v4986 = vadd.f32 %v4978, 1.0
    %v4987 = vadd.f32 %v4979, 1.0
    %v4988 = vadd.f32 %v4980, 1.0
    %v4989 = vadd.f32 %v4981, 1.0
    %v4990 = vmul.f32 %v4982, 0.5
    %v4991 = vmul.f32 %v4983, 0.5
    %v4992 = vmul.f32 %v4984, 0.5
    %v4993 = vmul.f32 %v4985, 0.5
    %v4994 = vmul.f32 %v4986, 0.5
    %v4995 = vmul.f32 %v4987, 0.5
    %v4996 = vmul.f32 %v4988, 0.5
    %v4997 = vmul.f32 %v4989, 0.5
    %v4998 = vtanh.pop %v4958
    %v4999 = vtanh.pop %v4959
    %v5000 = vtanh.pop %v4960
    %v5001 = vtanh.pop %v4961
    %v5002 = vtanh.pop %v4962
    %v5003 = vtanh.pop %v4963
    %v5004 = vtanh.pop %v4964
    %v5005 = vtanh.pop %v4965
    %v5014 = vrot.slane %v4840, 7
    %v5015 = vrot.slane %v4841, 7
    %v5016 = vrot.slane %v4842, 7
    %v5017 = vrot.slane %v4843, 7
    %v5018 = vrot.slane %v4844, 7
    %v5019 = vrot.slane %v4845, 7
    %v5020 = vrot.slane %v4846, 7
    %v5021 = vrot.slane %v4847, 7
    %v5030 = vmul.f32 %v4990, %v5014
    %v5031 = vmul.f32 %v4991, %v5015
    %v5032 = vmul.f32 %v4992, %v5016
    %v5033 = vmul.f32 %v4993, %v5017
    %v5034 = vmul.f32 %v4994, %v5018
    %v5035 = vmul.f32 %v4995, %v5019
    %v5036 = vmul.f32 %v4996, %v5020
    %v5037 = vmul.f32 %v4997, %v5021
    %5046 = vrot.lane.b32.xlu0 %v4998, 64
    %v5047 = vpop.permute.xlu0 %5046
    %5048 = vrot.lane.b32.xlu0 %v4999, 64
    %v5049 = vpop.permute.xlu0 %5048
    %5050 = vrot.lane.b32.xlu0 %v5000, 64
    %v5051 = vpop.permute.xlu0 %5050
    %5052 = vrot.lane.b32.xlu0 %v5001, 64
    %v5053 = vpop.permute.xlu0 %5052
    %5054 = vrot.lane.b32.xlu0 %v5002, 64
    %v5055 = vpop.permute.xlu0 %5054
    %5056 = vrot.lane.b32.xlu0 %v5003, 64
    %v5057 = vpop.permute.xlu0 %5056
    %5058 = vrot.lane.b32.xlu0 %v5004, 64
    %v5059 = vpop.permute.xlu0 %5058
    %5060 = vrot.lane.b32.xlu0 %v5005, 64
    %v5061 = vpop.permute.xlu0 %5060
    %v5070 = vmul.f32 %v4990, %v5047
    %v5071 = vmul.f32 %v4991, %v5049
    %v5072 = vmul.f32 %v4992, %v5051
    %v5073 = vmul.f32 %v4993, %v5053
    %v5074 = vmul.f32 %v4994, %v5055
    %v5075 = vmul.f32 %v4995, %v5057
    %v5076 = vmul.f32 %v4996, %v5059
    %v5077 = vmul.f32 %v4997, %v5061
    %5086 = vrot.lane.b32.xlu0 %v5070, 32
    %v5087 = vpop.permute.xlu0 %5086
    %5088 = vrot.lane.b32.xlu0 %v5071, 32
    %v5089 = vpop.permute.xlu0 %5088
    %5090 = vrot.lane.b32.xlu0 %v5072, 32
    %v5091 = vpop.permute.xlu0 %5090
    %5092 = vrot.lane.b32.xlu0 %v5073, 32
    %v5093 = vpop.permute.xlu0 %5092
    %5094 = vrot.lane.b32.xlu0 %v5074, 32
    %v5095 = vpop.permute.xlu0 %5094
    %5096 = vrot.lane.b32.xlu0 %v5075, 32
    %v5097 = vpop.permute.xlu0 %5096
    %5098 = vrot.lane.b32.xlu0 %v5076, 32
    %v5099 = vpop.permute.xlu0 %5098
    %5100 = vrot.lane.b32.xlu0 %v5077, 32
    %v5101 = vpop.permute.xlu0 %5100
    %v5110 = vadd.f32 %v5030, %v5087
    %v5111 = vadd.f32 %v5031, %v5089
    %v5112 = vadd.f32 %v5032, %v5091
    %v5113 = vadd.f32 %v5033, %v5093
    %v5114 = vadd.f32 %v5034, %v5095
    %v5115 = vadd.f32 %v5035, %v5097
    %v5116 = vadd.f32 %v5036, %v5099
    %v5117 = vadd.f32 %v5037, %v5101
    %v5118 = vtanh.pop %v5110
    %v5119 = vtanh.pop %v5111
    %v5120 = vtanh.pop %v5112
    %v5121 = vtanh.pop %v5113
    %v5122 = vtanh.pop %v5114
    %v5123 = vtanh.pop %v5115
    %v5124 = vtanh.pop %v5116
    %v5125 = vtanh.pop %v5117
    %5134 = vrot.lane.b32.xlu0 %v5118, 64
    %v5135 = vpop.permute.xlu0 %5134
    %5136 = vrot.lane.b32.xlu0 %v5119, 64
    %v5137 = vpop.permute.xlu0 %5136
    %5138 = vrot.lane.b32.xlu0 %v5120, 64
    %v5139 = vpop.permute.xlu0 %5138
    %5140 = vrot.lane.b32.xlu0 %v5121, 64
    %v5141 = vpop.permute.xlu0 %5140
    %5142 = vrot.lane.b32.xlu0 %v5122, 64
    %v5143 = vpop.permute.xlu0 %5142
    %5144 = vrot.lane.b32.xlu0 %v5123, 64
    %v5145 = vpop.permute.xlu0 %5144
    %5146 = vrot.lane.b32.xlu0 %v5124, 64
    %v5147 = vpop.permute.xlu0 %5146
    %5148 = vrot.lane.b32.xlu0 %v5125, 64
    %v5149 = vpop.permute.xlu0 %5148
    %v5158 = vmul.f32 %v4990, %v5135
    %v5159 = vmul.f32 %v4991, %v5137
    %v5160 = vmul.f32 %v4992, %v5139
    %v5161 = vmul.f32 %v4993, %v5141
    %v5162 = vmul.f32 %v4994, %v5143
    %v5163 = vmul.f32 %v4995, %v5145
    %v5164 = vmul.f32 %v4996, %v5147
    %v5165 = vmul.f32 %v4997, %v5149
    %v5174 = vrot.slane %v5158, 6
    %v5175 = vrot.slane %v5159, 5
    %v5176 = vsel %vm1929, %v5175, %v5174
    %v5177 = vrot.slane %v5160, 4
    %v5178 = vsel %vm1931, %v5177, %v5176
    %v5179 = vrot.slane %v5161, 3
    %v5180 = vsel %vm1934, %v5179, %v5178
    %v5181 = vrot.slane %v5162, 2
    %v5182 = vsel %vm1937, %v5181, %v5180
    %v5183 = vrot.slane %v5163, 1
    %v5184 = vsel %vm1940, %v5183, %v5182
    %v5185 = vsel %vm1943, %v5164, %v5184
    %v5186 = vrot.slane %v5165, 7
    %v5187 = vsel %vm1946, %v5186, %v5185
    %5188 = vrot.lane.b32.xlu0 %v5187, 32
    %v5189 = vpop.permute.xlu0 %5188
    %v5190 = vsel %vm1507, %v5189, 0
    %5192 = vmatpush.msra.mxu0 0.0
    %5193 = vmatpush.msra.mxu0 0.0
    %5194 = vmatpush.msra.mxu0 0.0
    %5195 = vmatpush.msra.mxu0 0.0
    %5196 = vmatpush.msra.mxu0 0.0
    %5197 = vmatpush.msra.mxu0 0.0
    %5198 = vmatpush.msra.mxu0 0.0
    %5199 = vmatpush.msra.mxu0 0.0
    %5200 = vmatpush.msra.mxu0 0.0
    %5201 = vmatpush.msra.mxu0 0.0
    %5202 = vmatpush.msra.mxu0 0.0
    %5203 = vmatpush.msra.mxu0 0.0
    %5204 = vmatpush.msra.mxu0 %v1695
    %5205 = vmatpush.msra.mxu0 %v1694
    %5206 = vmatpush.msra.mxu0 %v1693
    %5207 = vmatpush.msra.mxu0 %v1692
    %5208 = vmatmul.f32.gmra.mxu0 %v5190
    %v5209 = vpop.f32.mrf.mxu0
    %v5210 = vadd.f32 0.0, %v5209
    %5211 = vdwg.mxu0
    %v5213 = vrot.slane %v5210, 1
    %v5214 = vrot.slane %v5210, 2
    %v5215 = vrot.slane %v5210, 3
    %v5216 = vrot.slane %v5210, 4
    %v5217 = vrot.slane %v5210, 5
    %v5218 = vrot.slane %v5210, 6
    %v5219 = vrot.slane %v5210, 7
    %v5228 = vadd.f32 %v1624, %v5213
    %v5229 = vadd.f32 %v1633, %v5214
    %v5230 = vadd.f32 %v1642, %v5215
    %v5231 = vadd.f32 %v1651, %v5216
    %v5232 = vadd.f32 %v1660, %v5217
    %v5233 = vadd.f32 %v1669, %v5218
    %v5234 = vadd.f32 %v1678, %v5219
    %v5235 = vadd.f32 %v1687, %v5210
    %v5236 = vmul.f32 %v5228, 0.5
    %v5237 = vmul.f32 %v5229, 0.5
    %v5238 = vmul.f32 %v5230, 0.5
    %v5239 = vmul.f32 %v5231, 0.5
    %v5240 = vmul.f32 %v5232, 0.5
    %v5241 = vmul.f32 %v5233, 0.5
    %v5242 = vmul.f32 %v5234, 0.5
    %v5243 = vmul.f32 %v5235, 0.5
    %v5244 = vtanh.pop %v5236
    %v5245 = vtanh.pop %v5237
    %v5246 = vtanh.pop %v5238
    %v5247 = vtanh.pop %v5239
    %v5248 = vtanh.pop %v5240
    %v5249 = vtanh.pop %v5241
    %v5250 = vtanh.pop %v5242
    %v5251 = vtanh.pop %v5243
    %v5252 = vadd.f32 %v5244, 1.0
    %v5253 = vadd.f32 %v5245, 1.0
    %v5254 = vadd.f32 %v5246, 1.0
    %v5255 = vadd.f32 %v5247, 1.0
    %v5256 = vadd.f32 %v5248, 1.0
    %v5257 = vadd.f32 %v5249, 1.0
    %v5258 = vadd.f32 %v5250, 1.0
    %v5259 = vadd.f32 %v5251, 1.0
    %v5260 = vmul.f32 %v5252, 0.5
    %v5261 = vmul.f32 %v5253, 0.5
    %v5262 = vmul.f32 %v5254, 0.5
    %v5263 = vmul.f32 %v5255, 0.5
    %v5264 = vmul.f32 %v5256, 0.5
    %v5265 = vmul.f32 %v5257, 0.5
    %v5266 = vmul.f32 %v5258, 0.5
    %v5267 = vmul.f32 %v5259, 0.5
    %v5268 = vtanh.pop %v5228
    %v5269 = vtanh.pop %v5229
    %v5270 = vtanh.pop %v5230
    %v5271 = vtanh.pop %v5231
    %v5272 = vtanh.pop %v5232
    %v5273 = vtanh.pop %v5233
    %v5274 = vtanh.pop %v5234
    %v5275 = vtanh.pop %v5235
    %v5284 = vrot.slane %v5110, 7
    %v5285 = vrot.slane %v5111, 7
    %v5286 = vrot.slane %v5112, 7
    %v5287 = vrot.slane %v5113, 7
    %v5288 = vrot.slane %v5114, 7
    %v5289 = vrot.slane %v5115, 7
    %v5290 = vrot.slane %v5116, 7
    %v5291 = vrot.slane %v5117, 7
    %v5300 = vmul.f32 %v5260, %v5284
    %v5301 = vmul.f32 %v5261, %v5285
    %v5302 = vmul.f32 %v5262, %v5286
    %v5303 = vmul.f32 %v5263, %v5287
    %v5304 = vmul.f32 %v5264, %v5288
    %v5305 = vmul.f32 %v5265, %v5289
    %v5306 = vmul.f32 %v5266, %v5290
    %v5307 = vmul.f32 %v5267, %v5291
    %5316 = vrot.lane.b32.xlu0 %v5268, 64
    %v5317 = vpop.permute.xlu0 %5316
    %5318 = vrot.lane.b32.xlu0 %v5269, 64
    %v5319 = vpop.permute.xlu0 %5318
    %5320 = vrot.lane.b32.xlu0 %v5270, 64
    %v5321 = vpop.permute.xlu0 %5320
    %5322 = vrot.lane.b32.xlu0 %v5271, 64
    %v5323 = vpop.permute.xlu0 %5322
    %5324 = vrot.lane.b32.xlu0 %v5272, 64
    %v5325 = vpop.permute.xlu0 %5324
    %5326 = vrot.lane.b32.xlu0 %v5273, 64
    %v5327 = vpop.permute.xlu0 %5326
    %5328 = vrot.lane.b32.xlu0 %v5274, 64
    %v5329 = vpop.permute.xlu0 %5328
    %5330 = vrot.lane.b32.xlu0 %v5275, 64
    %v5331 = vpop.permute.xlu0 %5330
    %v5340 = vmul.f32 %v5260, %v5317
    %v5341 = vmul.f32 %v5261, %v5319
    %v5342 = vmul.f32 %v5262, %v5321
    %v5343 = vmul.f32 %v5263, %v5323
    %v5344 = vmul.f32 %v5264, %v5325
    %v5345 = vmul.f32 %v5265, %v5327
    %v5346 = vmul.f32 %v5266, %v5329
    %v5347 = vmul.f32 %v5267, %v5331
    %5356 = vrot.lane.b32.xlu0 %v5340, 32
    %v5357 = vpop.permute.xlu0 %5356
    %5358 = vrot.lane.b32.xlu0 %v5341, 32
    %v5359 = vpop.permute.xlu0 %5358
    %5360 = vrot.lane.b32.xlu0 %v5342, 32
    %v5361 = vpop.permute.xlu0 %5360
    %5362 = vrot.lane.b32.xlu0 %v5343, 32
    %v5363 = vpop.permute.xlu0 %5362
    %5364 = vrot.lane.b32.xlu0 %v5344, 32
    %v5365 = vpop.permute.xlu0 %5364
    %5366 = vrot.lane.b32.xlu0 %v5345, 32
    %v5367 = vpop.permute.xlu0 %5366
    %5368 = vrot.lane.b32.xlu0 %v5346, 32
    %v5369 = vpop.permute.xlu0 %5368
    %5370 = vrot.lane.b32.xlu0 %v5347, 32
    %v5371 = vpop.permute.xlu0 %5370
    %v5380 = vadd.f32 %v5300, %v5357
    %v5381 = vadd.f32 %v5301, %v5359
    %v5382 = vadd.f32 %v5302, %v5361
    %v5383 = vadd.f32 %v5303, %v5363
    %v5384 = vadd.f32 %v5304, %v5365
    %v5385 = vadd.f32 %v5305, %v5367
    %v5386 = vadd.f32 %v5306, %v5369
    %v5387 = vadd.f32 %v5307, %v5371
    %v5388 = vtanh.pop %v5380
    %v5389 = vtanh.pop %v5381
    %v5390 = vtanh.pop %v5382
    %v5391 = vtanh.pop %v5383
    %v5392 = vtanh.pop %v5384
    %v5393 = vtanh.pop %v5385
    %v5394 = vtanh.pop %v5386
    %v5395 = vtanh.pop %v5387
    %5404 = vrot.lane.b32.xlu0 %v5388, 64
    %v5405 = vpop.permute.xlu0 %5404
    %5406 = vrot.lane.b32.xlu0 %v5389, 64
    %v5407 = vpop.permute.xlu0 %5406
    %5408 = vrot.lane.b32.xlu0 %v5390, 64
    %v5409 = vpop.permute.xlu0 %5408
    %5410 = vrot.lane.b32.xlu0 %v5391, 64
    %v5411 = vpop.permute.xlu0 %5410
    %5412 = vrot.lane.b32.xlu0 %v5392, 64
    %v5413 = vpop.permute.xlu0 %5412
    %5414 = vrot.lane.b32.xlu0 %v5393, 64
    %v5415 = vpop.permute.xlu0 %5414
    %5416 = vrot.lane.b32.xlu0 %v5394, 64
    %v5417 = vpop.permute.xlu0 %5416
    %5418 = vrot.lane.b32.xlu0 %v5395, 64
    %v5419 = vpop.permute.xlu0 %5418
    %v5428 = vmul.f32 %v5260, %v5405
    %v5429 = vmul.f32 %v5261, %v5407
    %v5430 = vmul.f32 %v5262, %v5409
    %v5431 = vmul.f32 %v5263, %v5411
    %v5432 = vmul.f32 %v5264, %v5413
    %v5433 = vmul.f32 %v5265, %v5415
    %v5434 = vmul.f32 %v5266, %v5417
    %v5435 = vmul.f32 %v5267, %v5419
    %v5444 = vrot.slane %v5428, 7
    %v5445 = vrot.slane %v5429, 6
    %v5446 = vsel %vm1929, %v5445, %v5444
    %v5447 = vrot.slane %v5430, 5
    %v5448 = vsel %vm1931, %v5447, %v5446
    %v5449 = vrot.slane %v5431, 4
    %v5450 = vsel %vm1934, %v5449, %v5448
    %v5451 = vrot.slane %v5432, 3
    %v5452 = vsel %vm1937, %v5451, %v5450
    %v5453 = vrot.slane %v5433, 2
    %v5454 = vsel %vm1940, %v5453, %v5452
    %v5455 = vrot.slane %v5434, 1
    %v5456 = vsel %vm1943, %v5455, %v5454
    %v5457 = vsel %vm1946, %v5435, %v5456
    %5458 = vrot.lane.b32.xlu0 %v5457, 32
    %v5459 = vpop.permute.xlu0 %5458
    %v5460 = vsel %vm1507, %v5459, 0
    %5462 = vmatpush.msra.mxu0 0.0
    %5463 = vmatpush.msra.mxu0 0.0
    %5464 = vmatpush.msra.mxu0 0.0
    %5465 = vmatpush.msra.mxu0 0.0
    %5466 = vmatpush.msra.mxu0 0.0
    %5467 = vmatpush.msra.mxu0 0.0
    %5468 = vmatpush.msra.mxu0 0.0
    %5469 = vmatpush.msra.mxu0 0.0
    %5470 = vmatpush.msra.mxu0 0.0
    %5471 = vmatpush.msra.mxu0 0.0
    %5472 = vmatpush.msra.mxu0 0.0
    %5473 = vmatpush.msra.mxu0 0.0
    %5474 = vmatpush.msra.mxu0 %v1695
    %5475 = vmatpush.msra.mxu0 %v1694
    %5476 = vmatpush.msra.mxu0 %v1693
    %5477 = vmatpush.msra.mxu0 %v1692
    %5478 = vmatmul.f32.gmra.mxu0 %v5460
    %v5479 = vpop.f32.mrf.mxu0
    %v5480 = vadd.f32 0.0, %v5479
    %5481 = vdwg.mxu0
    %v5483 = vrot.slane %v5480, 1
    %v5484 = vrot.slane %v5480, 2
    %v5485 = vrot.slane %v5480, 3
    %v5486 = vrot.slane %v5480, 4
    %v5487 = vrot.slane %v5480, 5
    %v5488 = vrot.slane %v5480, 6
    %v5489 = vrot.slane %v5480, 7
    %v5498 = vadd.f32 %v1627, %v5480
    %v5499 = vadd.f32 %v1636, %v5483
    %v5500 = vadd.f32 %v1645, %v5484
    %v5501 = vadd.f32 %v1654, %v5485
    %v5502 = vadd.f32 %v1663, %v5486
    %v5503 = vadd.f32 %v1672, %v5487
    %v5504 = vadd.f32 %v1681, %v5488
    %v5505 = vadd.f32 %v1690, %v5489
    %v5506 = vmul.f32 %v5498, 0.5
    %v5507 = vmul.f32 %v5499, 0.5
    %v5508 = vmul.f32 %v5500, 0.5
    %v5509 = vmul.f32 %v5501, 0.5
    %v5510 = vmul.f32 %v5502, 0.5
    %v5511 = vmul.f32 %v5503, 0.5
    %v5512 = vmul.f32 %v5504, 0.5
    %v5513 = vmul.f32 %v5505, 0.5
    %v5514 = vtanh.pop %v5506
    %v5515 = vtanh.pop %v5507
    %v5516 = vtanh.pop %v5508
    %v5517 = vtanh.pop %v5509
    %v5518 = vtanh.pop %v5510
    %v5519 = vtanh.pop %v5511
    %v5520 = vtanh.pop %v5512
    %v5521 = vtanh.pop %v5513
    %v5522 = vadd.f32 %v5514, 1.0
    %v5523 = vadd.f32 %v5515, 1.0
    %v5524 = vadd.f32 %v5516, 1.0
    %v5525 = vadd.f32 %v5517, 1.0
    %v5526 = vadd.f32 %v5518, 1.0
    %v5527 = vadd.f32 %v5519, 1.0
    %v5528 = vadd.f32 %v5520, 1.0
    %v5529 = vadd.f32 %v5521, 1.0
    %v5530 = vmul.f32 %v5522, 0.5
    %v5531 = vmul.f32 %v5523, 0.5
    %v5532 = vmul.f32 %v5524, 0.5
    %v5533 = vmul.f32 %v5525, 0.5
    %v5534 = vmul.f32 %v5526, 0.5
    %v5535 = vmul.f32 %v5527, 0.5
    %v5536 = vmul.f32 %v5528, 0.5
    %v5537 = vmul.f32 %v5529, 0.5
    %v5538 = vtanh.pop %v5498
    %v5539 = vtanh.pop %v5499
    %v5540 = vtanh.pop %v5500
    %v5541 = vtanh.pop %v5501
    %v5542 = vtanh.pop %v5502
    %v5543 = vtanh.pop %v5503
    %v5544 = vtanh.pop %v5504
    %v5545 = vtanh.pop %v5505
    %v5554 = vrot.slane %v5380, 7
    %v5555 = vrot.slane %v5381, 7
    %v5556 = vrot.slane %v5382, 7
    %v5557 = vrot.slane %v5383, 7
    %v5558 = vrot.slane %v5384, 7
    %v5559 = vrot.slane %v5385, 7
    %v5560 = vrot.slane %v5386, 7
    %v5561 = vrot.slane %v5387, 7
    %v5570 = vmul.f32 %v5530, %v5554
    %v5571 = vmul.f32 %v5531, %v5555
    %v5572 = vmul.f32 %v5532, %v5556
    %v5573 = vmul.f32 %v5533, %v5557
    %v5574 = vmul.f32 %v5534, %v5558
    %v5575 = vmul.f32 %v5535, %v5559
    %v5576 = vmul.f32 %v5536, %v5560
    %v5577 = vmul.f32 %v5537, %v5561
    %5586 = vrot.lane.b32.xlu0 %v5538, 64
    %v5587 = vpop.permute.xlu0 %5586
    %5588 = vrot.lane.b32.xlu0 %v5539, 64
    %v5589 = vpop.permute.xlu0 %5588
    %5590 = vrot.lane.b32.xlu0 %v5540, 64
    %v5591 = vpop.permute.xlu0 %5590
    %5592 = vrot.lane.b32.xlu0 %v5541, 64
    %v5593 = vpop.permute.xlu0 %5592
    %5594 = vrot.lane.b32.xlu0 %v5542, 64
    %v5595 = vpop.permute.xlu0 %5594
    %5596 = vrot.lane.b32.xlu0 %v5543, 64
    %v5597 = vpop.permute.xlu0 %5596
    %5598 = vrot.lane.b32.xlu0 %v5544, 64
    %v5599 = vpop.permute.xlu0 %5598
    %5600 = vrot.lane.b32.xlu0 %v5545, 64
    %v5601 = vpop.permute.xlu0 %5600
    %v5610 = vmul.f32 %v5530, %v5587
    %v5611 = vmul.f32 %v5531, %v5589
    %v5612 = vmul.f32 %v5532, %v5591
    %v5613 = vmul.f32 %v5533, %v5593
    %v5614 = vmul.f32 %v5534, %v5595
    %v5615 = vmul.f32 %v5535, %v5597
    %v5616 = vmul.f32 %v5536, %v5599
    %v5617 = vmul.f32 %v5537, %v5601
    %5626 = vrot.lane.b32.xlu0 %v5610, 32
    %v5627 = vpop.permute.xlu0 %5626
    %5628 = vrot.lane.b32.xlu0 %v5611, 32
    %v5629 = vpop.permute.xlu0 %5628
    %5630 = vrot.lane.b32.xlu0 %v5612, 32
    %v5631 = vpop.permute.xlu0 %5630
    %5632 = vrot.lane.b32.xlu0 %v5613, 32
    %v5633 = vpop.permute.xlu0 %5632
    %5634 = vrot.lane.b32.xlu0 %v5614, 32
    %v5635 = vpop.permute.xlu0 %5634
    %5636 = vrot.lane.b32.xlu0 %v5615, 32
    %v5637 = vpop.permute.xlu0 %5636
    %5638 = vrot.lane.b32.xlu0 %v5616, 32
    %v5639 = vpop.permute.xlu0 %5638
    %5640 = vrot.lane.b32.xlu0 %v5617, 32
    %v5641 = vpop.permute.xlu0 %5640
    %v5650 = vadd.f32 %v5570, %v5627
    %v5651 = vadd.f32 %v5571, %v5629
    %v5652 = vadd.f32 %v5572, %v5631
    %v5653 = vadd.f32 %v5573, %v5633
    %v5654 = vadd.f32 %v5574, %v5635
    %v5655 = vadd.f32 %v5575, %v5637
    %v5656 = vadd.f32 %v5576, %v5639
    %v5657 = vadd.f32 %v5577, %v5641
    %v5658 = vtanh.pop %v5650
    %v5659 = vtanh.pop %v5651
    %v5660 = vtanh.pop %v5652
    %v5661 = vtanh.pop %v5653
    %v5662 = vtanh.pop %v5654
    %v5663 = vtanh.pop %v5655
    %v5664 = vtanh.pop %v5656
    %v5665 = vtanh.pop %v5657
    %5674 = vrot.lane.b32.xlu0 %v5658, 64
    %v5675 = vpop.permute.xlu0 %5674
    %5676 = vrot.lane.b32.xlu0 %v5659, 64
    %v5677 = vpop.permute.xlu0 %5676
    %5678 = vrot.lane.b32.xlu0 %v5660, 64
    %v5679 = vpop.permute.xlu0 %5678
    %5680 = vrot.lane.b32.xlu0 %v5661, 64
    %v5681 = vpop.permute.xlu0 %5680
    %5682 = vrot.lane.b32.xlu0 %v5662, 64
    %v5683 = vpop.permute.xlu0 %5682
    %5684 = vrot.lane.b32.xlu0 %v5663, 64
    %v5685 = vpop.permute.xlu0 %5684
    %5686 = vrot.lane.b32.xlu0 %v5664, 64
    %v5687 = vpop.permute.xlu0 %5686
    %5688 = vrot.lane.b32.xlu0 %v5665, 64
    %v5689 = vpop.permute.xlu0 %5688
    %v5698 = vmul.f32 %v5530, %v5675
    %v5699 = vmul.f32 %v5531, %v5677
    %v5700 = vmul.f32 %v5532, %v5679
    %v5701 = vmul.f32 %v5533, %v5681
    %v5702 = vmul.f32 %v5534, %v5683
    %v5703 = vmul.f32 %v5535, %v5685
    %v5704 = vmul.f32 %v5536, %v5687
    %v5705 = vmul.f32 %v5537, %v5689
    %v5714 = vrot.slane %v5699, 7
    %v5715 = vsel %vm1929, %v5714, %v5698
    %v5716 = vrot.slane %v5700, 6
    %v5717 = vsel %vm1931, %v5716, %v5715
    %v5718 = vrot.slane %v5701, 5
    %v5719 = vsel %vm1934, %v5718, %v5717
    %v5720 = vrot.slane %v5702, 4
    %v5721 = vsel %vm1937, %v5720, %v5719
    %v5722 = vrot.slane %v5703, 3
    %v5723 = vsel %vm1940, %v5722, %v5721
    %v5724 = vrot.slane %v5704, 2
    %v5725 = vsel %vm1943, %v5724, %v5723
    %v5726 = vrot.slane %v5705, 1
    %v5727 = vsel %vm1946, %v5726, %v5725
    %5728 = vrot.lane.b32.xlu0 %v5727, 32
    %v5729 = vpop.permute.xlu0 %5728
    %v5730 = vsel %vm1507, %v5729, 0
    %5732 = vmatpush.msra.mxu0 0.0
    %5733 = vmatpush.msra.mxu0 0.0
    %5734 = vmatpush.msra.mxu0 0.0
    %5735 = vmatpush.msra.mxu0 0.0
    %5736 = vmatpush.msra.mxu0 0.0
    %5737 = vmatpush.msra.mxu0 0.0
    %5738 = vmatpush.msra.mxu0 0.0
    %5739 = vmatpush.msra.mxu0 0.0
    %5740 = vmatpush.msra.mxu0 0.0
    %5741 = vmatpush.msra.mxu0 0.0
    %5742 = vmatpush.msra.mxu0 0.0
    %5743 = vmatpush.msra.mxu0 0.0
    %5744 = vmatpush.msra.mxu0 %v1695
    %5745 = vmatpush.msra.mxu0 %v1694
    %5746 = vmatpush.msra.mxu0 %v1693
    %5747 = vmatpush.msra.mxu0 %v1692
    %5748 = vmatmul.f32.gmra.mxu0 %v5730
    %v5749 = vpop.f32.mrf.mxu0
    %v5750 = vadd.f32 0.0, %v5749
    %5751 = vdwg.mxu0
    %v5753 = vrot.slane %v5750, 7
    %v5754 = vrot.slane %v5750, 1
    %v5755 = vrot.slane %v5750, 2
    %v5756 = vrot.slane %v5750, 3
    %v5757 = vrot.slane %v5750, 4
    %v5758 = vrot.slane %v5750, 5
    %v5759 = vrot.slane %v5750, 6
    %v5768 = vadd.f32 %v1627, %v5753
    %v5769 = vadd.f32 %v1636, %v5750
    %v5770 = vadd.f32 %v1645, %v5754
    %v5771 = vadd.f32 %v1654, %v5755
    %v5772 = vadd.f32 %v1663, %v5756
    %v5773 = vadd.f32 %v1672, %v5757
    %v5774 = vadd.f32 %v1681, %v5758
    %v5775 = vadd.f32 %v1690, %v5759
    %v5776 = vmul.f32 %v5768, 0.5
    %v5777 = vmul.f32 %v5769, 0.5
    %v5778 = vmul.f32 %v5770, 0.5
    %v5779 = vmul.f32 %v5771, 0.5
    %v5780 = vmul.f32 %v5772, 0.5
    %v5781 = vmul.f32 %v5773, 0.5
    %v5782 = vmul.f32 %v5774, 0.5
    %v5783 = vmul.f32 %v5775, 0.5
    %v5784 = vtanh.pop %v5776
    %v5785 = vtanh.pop %v5777
    %v5786 = vtanh.pop %v5778
    %v5787 = vtanh.pop %v5779
    %v5788 = vtanh.pop %v5780
    %v5789 = vtanh.pop %v5781
    %v5790 = vtanh.pop %v5782
    %v5791 = vtanh.pop %v5783
    %v5792 = vadd.f32 %v5784, 1.0
    %v5793 = vadd.f32 %v5785, 1.0
    %v5794 = vadd.f32 %v5786, 1.0
    %v5795 = vadd.f32 %v5787, 1.0
    %v5796 = vadd.f32 %v5788, 1.0
    %v5797 = vadd.f32 %v5789, 1.0
    %v5798 = vadd.f32 %v5790, 1.0
    %v5799 = vadd.f32 %v5791, 1.0
    %v5800 = vmul.f32 %v5792, 0.5
    %v5801 = vmul.f32 %v5793, 0.5
    %v5802 = vmul.f32 %v5794, 0.5
    %v5803 = vmul.f32 %v5795, 0.5
    %v5804 = vmul.f32 %v5796, 0.5
    %v5805 = vmul.f32 %v5797, 0.5
    %v5806 = vmul.f32 %v5798, 0.5
    %v5807 = vmul.f32 %v5799, 0.5
    %v5808 = vtanh.pop %v5768
    %v5809 = vtanh.pop %v5769
    %v5810 = vtanh.pop %v5770
    %v5811 = vtanh.pop %v5771
    %v5812 = vtanh.pop %v5772
    %v5813 = vtanh.pop %v5773
    %v5814 = vtanh.pop %v5774
    %v5815 = vtanh.pop %v5775
    %v5824 = vrot.slane %v5650, 7
    %v5825 = vrot.slane %v5651, 7
    %v5826 = vrot.slane %v5652, 7
    %v5827 = vrot.slane %v5653, 7
    %v5828 = vrot.slane %v5654, 7
    %v5829 = vrot.slane %v5655, 7
    %v5830 = vrot.slane %v5656, 7
    %v5831 = vrot.slane %v5657, 7
    %v5840 = vmul.f32 %v5800, %v5824
    %v5841 = vmul.f32 %v5801, %v5825
    %v5842 = vmul.f32 %v5802, %v5826
    %v5843 = vmul.f32 %v5803, %v5827
    %v5844 = vmul.f32 %v5804, %v5828
    %v5845 = vmul.f32 %v5805, %v5829
    %v5846 = vmul.f32 %v5806, %v5830
    %v5847 = vmul.f32 %v5807, %v5831
    %5856 = vrot.lane.b32.xlu0 %v5808, 64
    %v5857 = vpop.permute.xlu0 %5856
    %5858 = vrot.lane.b32.xlu0 %v5809, 64
    %v5859 = vpop.permute.xlu0 %5858
    %5860 = vrot.lane.b32.xlu0 %v5810, 64
    %v5861 = vpop.permute.xlu0 %5860
    %5862 = vrot.lane.b32.xlu0 %v5811, 64
    %v5863 = vpop.permute.xlu0 %5862
    %5864 = vrot.lane.b32.xlu0 %v5812, 64
    %v5865 = vpop.permute.xlu0 %5864
    %5866 = vrot.lane.b32.xlu0 %v5813, 64
    %v5867 = vpop.permute.xlu0 %5866
    %5868 = vrot.lane.b32.xlu0 %v5814, 64
    %v5869 = vpop.permute.xlu0 %5868
    %5870 = vrot.lane.b32.xlu0 %v5815, 64
    %v5871 = vpop.permute.xlu0 %5870
    %v5880 = vmul.f32 %v5800, %v5857
    %v5881 = vmul.f32 %v5801, %v5859
    %v5882 = vmul.f32 %v5802, %v5861
    %v5883 = vmul.f32 %v5803, %v5863
    %v5884 = vmul.f32 %v5804, %v5865
    %v5885 = vmul.f32 %v5805, %v5867
    %v5886 = vmul.f32 %v5806, %v5869
    %v5887 = vmul.f32 %v5807, %v5871
    %5896 = vrot.lane.b32.xlu0 %v5880, 32
    %v5897 = vpop.permute.xlu0 %5896
    %5898 = vrot.lane.b32.xlu0 %v5881, 32
    %v5899 = vpop.permute.xlu0 %5898
    %5900 = vrot.lane.b32.xlu0 %v5882, 32
    %v5901 = vpop.permute.xlu0 %5900
    %5902 = vrot.lane.b32.xlu0 %v5883, 32
    %v5903 = vpop.permute.xlu0 %5902
    %5904 = vrot.lane.b32.xlu0 %v5884, 32
    %v5905 = vpop.permute.xlu0 %5904
    %5906 = vrot.lane.b32.xlu0 %v5885, 32
    %v5907 = vpop.permute.xlu0 %5906
    %5908 = vrot.lane.b32.xlu0 %v5886, 32
    %v5909 = vpop.permute.xlu0 %5908
    %5910 = vrot.lane.b32.xlu0 %v5887, 32
    %v5911 = vpop.permute.xlu0 %5910
    %v5920 = vadd.f32 %v5840, %v5897
    %v5921 = vadd.f32 %v5841, %v5899
    %v5922 = vadd.f32 %v5842, %v5901
    %v5923 = vadd.f32 %v5843, %v5903
    %v5924 = vadd.f32 %v5844, %v5905
    %v5925 = vadd.f32 %v5845, %v5907
    %v5926 = vadd.f32 %v5846, %v5909
    %v5927 = vadd.f32 %v5847, %v5911
    %v5928 = vtanh.pop %v5920
    %v5929 = vtanh.pop %v5921
    %v5930 = vtanh.pop %v5922
    %v5931 = vtanh.pop %v5923
    %v5932 = vtanh.pop %v5924
    %v5933 = vtanh.pop %v5925
    %v5934 = vtanh.pop %v5926
    %v5935 = vtanh.pop %v5927
    %5944 = vrot.lane.b32.xlu0 %v5928, 64
    %v5945 = vpop.permute.xlu0 %5944
    %5946 = vrot.lane.b32.xlu0 %v5929, 64
    %v5947 = vpop.permute.xlu0 %5946
    %5948 = vrot.lane.b32.xlu0 %v5930, 64
    %v5949 = vpop.permute.xlu0 %5948
    %5950 = vrot.lane.b32.xlu0 %v5931, 64
    %v5951 = vpop.permute.xlu0 %5950
    %5952 = vrot.lane.b32.xlu0 %v5932, 64
    %v5953 = vpop.permute.xlu0 %5952
    %5954 = vrot.lane.b32.xlu0 %v5933, 64
    %v5955 = vpop.permute.xlu0 %5954
    %5956 = vrot.lane.b32.xlu0 %v5934, 64
    %v5957 = vpop.permute.xlu0 %5956
    %5958 = vrot.lane.b32.xlu0 %v5935, 64
    %v5959 = vpop.permute.xlu0 %5958
    %v5968 = vmul.f32 %v5800, %v5945
    %v5969 = vmul.f32 %v5801, %v5947
    %v5970 = vmul.f32 %v5802, %v5949
    %v5971 = vmul.f32 %v5803, %v5951
    %v5972 = vmul.f32 %v5804, %v5953
    %v5973 = vmul.f32 %v5805, %v5955
    %v5974 = vmul.f32 %v5806, %v5957
    %v5975 = vmul.f32 %v5807, %v5959
    %s5976 = sld [smem:[#allocation3]]
    %v5977 = vstv %s5976
    %v5978 = vmul.f32 %v5977, %v1587
    %v5979 = vmul.f32 %v5977, %v1588
    %v5980 = vmul.f32 %v5977, %v1589
    %v5981 = vmul.f32 %v5977, %v1590
    %v5982 = vmul.f32 %v5977, %v1591
    %v5983 = vmul.f32 %v5977, %v1592
    %v5984 = vmul.f32 %v5977, %v1593
    %v5985 = vmul.f32 %v5977, %v1594
    %s5986 = ssub.f32 1.0, %s5976
    %v5987 = vstv %s5986
    %v5988 = vmul.f32 %v5987, %v5968
    %v5989 = vmul.f32 %v5987, %v5969
    %v5990 = vmul.f32 %v5987, %v5970
    %v5991 = vmul.f32 %v5987, %v5971
    %v5992 = vmul.f32 %v5987, %v5972
    %v5993 = vmul.f32 %v5987, %v5973
    %v5994 = vmul.f32 %v5987, %v5974
    %v5995 = vmul.f32 %v5987, %v5975
    %v6004 = vrot.slane %v5988, 1
    %v6005 = vrot.slane %v5989, 1
    %v6006 = vrot.slane %v5990, 1
    %v6007 = vrot.slane %v5991, 1
    %v6008 = vrot.slane %v5992, 1
    %v6009 = vrot.slane %v5993, 1
    %v6010 = vrot.slane %v5994, 1
    %v6011 = vrot.slane %v5995, 1
    %6012 = vrot.lane.b32.xlu0 %v6004, 32
    %v6013 = vpop.permute.xlu0 %6012
    %6014 = vrot.lane.b32.xlu0 %v6005, 32
    %v6015 = vpop.permute.xlu0 %6014
    %6016 = vrot.lane.b32.xlu0 %v6006, 32
    %v6017 = vpop.permute.xlu0 %6016
    %6018 = vrot.lane.b32.xlu0 %v6007, 32
    %v6019 = vpop.permute.xlu0 %6018
    %6020 = vrot.lane.b32.xlu0 %v6008, 32
    %v6021 = vpop.permute.xlu0 %6020
    %6022 = vrot.lane.b32.xlu0 %v6009, 32
    %v6023 = vpop.permute.xlu0 %6022
    %6024 = vrot.lane.b32.xlu0 %v6010, 32
    %v6025 = vpop.permute.xlu0 %6024
    %6026 = vrot.lane.b32.xlu0 %v6011, 32
    %v6027 = vpop.permute.xlu0 %6026
    %v6036 = vadd.f32 %v5978, %v6013
    %v6037 = vadd.f32 %v5979, %v6015
    %v6038 = vadd.f32 %v5980, %v6017
    %v6039 = vadd.f32 %v5981, %v6019
    %v6040 = vadd.f32 %v5982, %v6021
    %v6041 = vadd.f32 %v5983, %v6023
    %v6042 = vadd.f32 %v5984, %v6025
    %v6043 = vadd.f32 %v5985, %v6027
    %v6044 = vld [vmem:[%s8] sm:$0xff]
    %v6045 = vld [vmem:[%s8 + $0x8] sm:$0xff]
    %v6046 = vld [vmem:[%s9] sm:$0xff]
    %v6047 = vld [vmem:[%s9 + $0x8] sm:$0xff]
    %6049 = vset.pattern.permute.xlu0 0
    %6050 = vperm.xlu0 %6049, %v6046
    %v6051 = vpop.permute.xlu0 %6050
    %6054 = vset.pattern.permute.xlu0 0
    %6055 = vperm.xlu0 %6054, %v6047
    %v6056 = vpop.permute.xlu0 %6055
    %v6066 = vrot.slane %v6037, 7
    %v6067 = vsel %vm1929, %v6066, %v6036
    %v6068 = vrot.slane %v6038, 6
    %v6069 = vsel %vm1931, %v6068, %v6067
    %v6070 = vrot.slane %v6039, 5
    %v6071 = vsel %vm1934, %v6070, %v6069
    %v6072 = vrot.slane %v6040, 4
    %v6073 = vsel %vm1937, %v6072, %v6071
    %v6074 = vrot.slane %v6041, 3
    %v6075 = vsel %vm1940, %v6074, %v6073
    %v6076 = vrot.slane %v6042, 2
    %v6077 = vsel %vm1943, %v6076, %v6075
    %v6078 = vrot.slane %v6043, 1
    %v6079 = vsel %vm1946, %v6078, %v6077
    %v6081 = vsel %vm1507, %v6044, 0
    %v6084 = vsel %vm1507, %v6045, 0
    %v6086 = vsel %vm1507, %v6079, 0
    %6088 = vmatpush.xpose.msra.mxu0 0.0
    %6089 = vmatpush.xpose.msra.mxu0 0.0
    %6090 = vmatpush.xpose.msra.mxu0 0.0
    %6091 = vmatpush.xpose.msra.mxu0 0.0
    %6092 = vmatpush.xpose.msra.mxu0 0.0
    %6093 = vmatpush.xpose.msra.mxu0 0.0
    %6094 = vmatpush.xpose.msra.mxu0 0.0
    %6095 = vmatpush.xpose.msra.mxu0 0.0
    %6096 = vmatpush.xpose.msra.mxu0 0.0
    %6097 = vmatpush.xpose.msra.mxu0 0.0
    %6098 = vmatpush.xpose.msra.mxu0 0.0
    %6099 = vmatpush.xpose.msra.mxu0 0.0
    %6100 = vmatpush.xpose.msra.mxu0 0.0
    %6101 = vmatpush.xpose.msra.mxu0 0.0
    %6102 = vmatpush.xpose.msra.mxu0 0.0
    %6103 = vmatpush.xpose.msra.mxu0 %v6086
    %6104 = vmatmul.f32.gmra.mxu0 %v6081
    %v6105 = vpop.f32.mrf.mxu0
    %v6106 = vadd.f32 %v6051, %v6105
    %6107 = vmatmul.f32.gmra.mxu0 %v6084
    %v6108 = vpop.f32.mrf.mxu0
    %v6109 = vadd.f32 %v6056, %v6108
    %6110 = vdwg.mxu0
    %v6111 = vmax.f32 %v6106, 0.0
    %v6112 = vmax.f32 %v6109, 0.0
    %v6113 = vld [vmem:[%s10] sm:$0x1]
    %v6114 = vld [vmem:[#allocation2] sm:$0x1]
    %6116 = vset.pattern.permute.xlu0 0
    %6117 = vperm.xlu0 %6116, %v6114
    %v6118 = vpop.permute.xlu0 %6117
    %v6120 = vperm.slane %v6118, 0
    %v6122 = vsel %vm796, %v6113, 0
    %6124 = vmatpush.msra.mxu0 0.0
    %6125 = vmatpush.msra.mxu0 0.0
    %6126 = vmatpush.msra.mxu0 0.0
    %6127 = vmatpush.msra.mxu0 0.0
    %6128 = vmatpush.msra.mxu0 0.0
    %6129 = vmatpush.msra.mxu0 0.0
    %6130 = vmatpush.msra.mxu0 0.0
    %6131 = vmatpush.msra.mxu0 0.0
    %6132 = vmatpush.msra.mxu0 0.0
    %6133 = vmatpush.msra.mxu0 0.0
    %6134 = vmatpush.msra.mxu0 0.0
    %6135 = vmatpush.msra.mxu0 0.0
    %6136 = vmatpush.msra.mxu0 0.0
    %6137 = vmatpush.msra.mxu0 0.0
    %6138 = vmatpush.msra.mxu0 %v6112
    %6139 = vmatpush.msra.mxu0 %v6111
    %6140 = vmatmul.f32.gmra.mxu0 %v6122
    %v6141 = vpop.f32.mrf.mxu0
    %v6142 = vadd.f32 %v6120, %v6141
    %6143 = vdwg.mxu0
    %v6144 = vmul.f32 %v6142, 0.5
    %v6145 = vtanh.pop %v6144
    %v6146 = vadd.f32 %v6145, 1.0
    %v6147 = vmul.f32 %v6146, 0.5
    %vm6148 = vcmask 57344
    %6149 = vst.msk [vmem:[#allocation4] sm:$0x1] %vm6148, %v6147
    // Predicated region
    $region54: #{tpu_custom_call.1} parent=1 // pred_check
      _
    $region55: #{tpu_custom_call.1} parent=1 // pred_check_branch
      %6151 = sbr.rel (0) target = $region57
    $region56: #{tpu_custom_call.1} parent=1 // pred_region
      %6153 = vsyncadd [#allocation5], 0
      %s6155 = sshll.u32 [#allocation4], 4
      %s6156 = int_to_ptr.vmem [resolvable:$true] %s6155
      %s6157 = sshll.u32 %s13, 4
      %s6158 = int_to_ptr.hbm [resolvable:$true] %s6157
      %6160 = dma.vmem_to_hbm [thread:$0]  %s6156, 16, %s6158, [#allocation5]
    $region57: #{tpu_custom_call.1} parent=1 // pred_fallthru
      _
    // Predicated region
    $region58: #{tpu_custom_call.1} parent=1 // pred_check
      _
    $region59: #{tpu_custom_call.1} parent=1 // pred_check_branch
      %6162 = sbr.rel (0) target = $region61
    $region60: #{tpu_custom_call.1} parent=1 // pred_region
      %6164 = dma.done [#allocation5], 16
    $region61: #{tpu_custom_call.1} parent=1 // pred_fallthru
      _
    %6165 = vsyncpa [#allocation5], 1

</llo_original>
